<compile_context>
chip_gen: v7x
topology: tpu7x:2x2x1
jax: 0.10.0
libtpu: 0.0.40
codegen_flags: <defaults>
</compile_context>

<pallas_src>
import math

import jax
import jax.numpy as jnp
from jax.experimental import pallas as pl
from jax.experimental.pallas import tpu as pltpu


def _round_up(x: int, m: int) -> int:
    return ((x + m - 1) // m) * m


def _timestep_emb_kernel(freqs_ref, t_ref, w1_ref, b1_ref, w2_ref, b2_ref,
                         o_ref):
    # freqs_ref: (1, mid) f32      t_ref: (tile, 1) f32
    # w*_ref:    (dim, dim) bf16, stored (in, out)
    # b*_ref:    (1, dim) f32      o_ref: (tile, dim) f32
    args = t_ref[...] * freqs_ref[...]                       # (tile, mid)

    # emb = [cos | sin]  -> single lane-concat, one full-K MXU matmul
    emb = jnp.concatenate([jnp.cos(args), jnp.sin(args)], axis=-1)
    emb = emb.astype(jnp.bfloat16)                           # (tile, dim)

    h = (jnp.dot(emb, w1_ref[...], preferred_element_type=jnp.float32)
         + b1_ref[...])                                      # (tile, dim) f32
    h = h * jax.nn.sigmoid(h)                                # SiLU in f32
    h = h.astype(jnp.bfloat16)

    out = (jnp.dot(h, w2_ref[...], preferred_element_type=jnp.float32)
           + b2_ref[...])                                    # (tile, dim) f32
    o_ref[...] = out.astype(o_ref.dtype)


def _vmem_limit_bytes(tile: int, dim: int, mid: int) -> int:
    weights = 2 * (dim * dim * 2) * 2        # two bf16 weights, double-buffered
    biases = 2 * (dim * 4) * 2
    freqs = mid * 4 * 2
    t_in = tile * 4 * 2
    out = tile * dim * 4 * 2
    temps = tile * dim * 4 * 6               # cos/sin/emb/h headroom
    est = weights + biases + freqs + t_in + out + temps
    return int(min(max(int(est * 1.5), 32 * 1024 * 1024), 100 * 1024 * 1024))


def timestep_embedding(timesteps, w1_t, b1, w2_t, b2, *,
                       max_period: int = 10000, tile_n: int = 256):
    """timesteps: (N,) int/float; w*_t: (dim, dim) stored transposed (in, out);
    b*: (dim,). Returns (N, dim) float32."""
    n = timesteps.shape[0]
    dim = w1_t.shape[0]
    if dim % 2 != 0:
        raise ValueError(f"embedding dim must be even, got {dim}")
    mid = dim // 2

    # Sublane-aligned batch tiling (pad N up to a multiple of the tile).
    tile = min(tile_n, _round_up(n, 8))
    n_pad = _round_up(n, tile)
    grid_n = n_pad // tile

    t2d = timesteps.astype(jnp.float32).reshape(n, 1)
    if n_pad != n:
        t2d = jnp.pad(t2d, ((0, n_pad - n), (0, 0)))

    freqs = jnp.exp((-math.log(max_period) / mid)
                    * jnp.arange(mid, dtype=jnp.float32)).reshape(1, mid)

    # bf16 weight storage (halves HBM + VMEM); f32 biases (tiny).
    w1 = jnp.asarray(w1_t, dtype=jnp.bfloat16)
    w2 = jnp.asarray(w2_t, dtype=jnp.bfloat16)
    b1_2d = jnp.asarray(b1, dtype=jnp.float32).reshape(1, dim)
    b2_2d = jnp.asarray(b2, dtype=jnp.float32).reshape(1, dim)

    cost = pl.CostEstimate(
        flops=4 * n_pad * dim * dim,                    # two (N,dim)x(dim,dim)
        transcendentals=n_pad * (2 * mid + dim),        # cos, sin, sigmoid
        bytes_accessed=2 * dim * dim * 2 + n_pad * 4 + n_pad * dim * 4,
    )

    out = pl.pallas_call(
        _timestep_emb_kernel,
        out_shape=jax.ShapeDtypeStruct((n_pad, dim), jnp.float32),
        grid_spec=pltpu.PrefetchScalarGridSpec(
            num_scalar_prefetch=0,
            grid=(grid_n,),
            in_specs=[
                pl.BlockSpec((1, mid), lambda i: (0, 0)),      # freqs (const)
                pl.BlockSpec((tile, 1), lambda i: (i, 0)),     # timesteps
                pl.BlockSpec((dim, dim), lambda i: (0, 0)),    # W1 (const)
                pl.BlockSpec((1, dim), lambda i: (0, 0)),      # b1 (const)
                pl.BlockSpec((dim, dim), lambda i: (0, 0)),    # W2 (const)
                pl.BlockSpec((1, dim), lambda i: (0, 0)),      # b2 (const)
            ],
            out_specs=pl.BlockSpec((tile, dim), lambda i: (i, 0)),
        ),
        compiler_params=pltpu.CompilerParams(
            dimension_semantics=("parallel",),
            vmem_limit_bytes=_vmem_limit_bytes(tile, dim, mid),
        ),
        cost_estimate=cost,
    )(freqs, t2d, w1, b1_2d, w2, b2_2d)

    return out[:n] if n_pad != n else out


def _reference_f32(timesteps, w1_t, b1, w2_t, b2, *, max_period=10000):
    """Pure-f32 reference, mirrors the PyTorch module exactly."""
    dim = w1_t.shape[0]
    mid = dim // 2
    fs = jnp.exp(-math.log(max_period) / mid
                 * jnp.arange(mid, dtype=jnp.float32))
    args = timesteps.astype(jnp.float32)[:, None] * fs[None]
    emb = jnp.concatenate([jnp.cos(args), jnp.sin(args)], axis=-1)
    h = emb @ w1_t + b1[None]
    h = h * jax.nn.sigmoid(h)
    return h @ w2_t + b2[None]


def _reference_mixed(timesteps, w1_t, b1, w2_t, b2, *, max_period=10000):
    """Mirrors the kernel's precision policy: bf16 matmul inputs, f32 accum."""
    dim = w1_t.shape[0]
    mid = dim // 2
    fs = jnp.exp(-math.log(max_period) / mid
                 * jnp.arange(mid, dtype=jnp.float32))
    args = timesteps.astype(jnp.float32)[:, None] * fs[None]
    emb = jnp.concatenate([jnp.cos(args), jnp.sin(args)],
                          axis=-1).astype(jnp.bfloat16)
    w1 = w1_t.astype(jnp.bfloat16)
    w2 = w2_t.astype(jnp.bfloat16)
    h = jnp.dot(emb, w1, preferred_element_type=jnp.float32) + b1[None]
    h = h * jax.nn.sigmoid(h)
    h = h.astype(jnp.bfloat16)
    return jnp.dot(h, w2, preferred_element_type=jnp.float32) + b2[None]


if __name__ == "__main__":
    dim = 128          # embedding dim (even; multiple of 128 -> lane-dense out)
    n = 200            # batch of timestep indices (exercises padding + 2 tiles)
    max_period = 10000

    key = jax.random.PRNGKey(0)
    k_t, k_w1, k_b1, k_w2, k_b2 = jax.random.split(key, 5)

    # PyTorch nn.Linear default init: U(-1/sqrt(fan_in), 1/sqrt(fan_in)),
    # reproduced deterministically here (synthetic weights, no checkpoint).
    bound = 1.0 / math.sqrt(dim)
    w1_t = jax.random.uniform(k_w1, (dim, dim), jnp.float32, -bound, bound)
    b1 = jax.random.uniform(k_b1, (dim,), jnp.float32, -bound, bound)
    w2_t = jax.random.uniform(k_w2, (dim, dim), jnp.float32, -bound, bound)
    b2 = jax.random.uniform(k_b2, (dim,), jnp.float32, -bound, bound)

    timesteps = jax.random.randint(k_t, (n,), 0, 1000, dtype=jnp.int32)

    out = timestep_embedding(timesteps, w1_t, b1, w2_t, b2,
                             max_period=max_period, tile_n=128)
    out = jax.block_until_ready(out)
    assert out.shape == (n, dim)

    # Tight check vs a reference that mirrors the kernel's bf16-input policy.
    ref_mix = _reference_mixed(timesteps, w1_t, b1, w2_t, b2,
                               max_period=max_period)
    assert jnp.allclose(out, ref_mix, atol=2e-2, rtol=2e-2), (
        f"mismatch vs mixed-precision reference: "
        f"max|err|={float(jnp.max(jnp.abs(out - ref_mix)))}")

    # Semantic check vs the pure-f32 PyTorch-equivalent math (bf16 tolerance).
    ref_f32 = _reference_f32(timesteps, w1_t, b1, w2_t, b2,
                             max_period=max_period)
    assert jnp.allclose(out, ref_f32, atol=5e-2, rtol=5e-2), (
        f"mismatch vs f32 reference: "
        f"max|err|={float(jnp.max(jnp.abs(out - ref_f32)))}")

    print("KERNEL_OK")
</pallas_src>

<mosaic_0001>
module attributes {stable_mosaic.version = 11 : i64} {
  func.func @_timestep_emb_kernel(%arg0: i32, %arg1: memref<1x64xf32, #tpu.memory_space<vmem>>, %arg2: memref<128x1xf32, #tpu.memory_space<vmem>>, %arg3: memref<128x128xbf16, #tpu.memory_space<vmem>>, %arg4: memref<1x128xf32, #tpu.memory_space<vmem>>, %arg5: memref<128x128xbf16, #tpu.memory_space<vmem>>, %arg6: memref<1x128xf32, #tpu.memory_space<vmem>>, %arg7: memref<128x128xf32, #tpu.memory_space<vmem>>) attributes {dimension_semantics = [#tpu.dimension_semantics<parallel>], iteration_bounds = array<i64: 2>, scalar_prefetch = 0 : i64, scratch_operands = 0 : i64, tpu.core_type = #tpu.core_type<tc>, window_params = [{pipeline_mode = #tpu.pipeline_mode<synchronous>, transform_indices = @transform_0, window_bounds = array<i64: 1, 64>}, {transform_indices = @transform_1, window_bounds = array<i64: 128, 1>}, {pipeline_mode = #tpu.pipeline_mode<synchronous>, transform_indices = @transform_2, window_bounds = array<i64: 128, 128>}, {pipeline_mode = #tpu.pipeline_mode<synchronous>, transform_indices = @transform_3, window_bounds = array<i64: 1, 128>}, {pipeline_mode = #tpu.pipeline_mode<synchronous>, transform_indices = @transform_4, window_bounds = array<i64: 128, 128>}, {pipeline_mode = #tpu.pipeline_mode<synchronous>, transform_indices = @transform_5, window_bounds = array<i64: 1, 128>}, {transform_indices = @transform_6, window_bounds = array<i64: 128, 128>}]} {
    %c0 = arith.constant 0 : index
    %c0_0 = arith.constant 0 : index
    %0 = vector.load %arg2[%c0, %c0_0] : memref<128x1xf32, #tpu.memory_space<vmem>>, vector<128x1xf32>
    %c0_1 = arith.constant 0 : index
    %c0_2 = arith.constant 0 : index
    %1 = vector.load %arg1[%c0_1, %c0_2] : memref<1x64xf32, #tpu.memory_space<vmem>>, vector<1x64xf32>
    %2 = vector.broadcast %0 : vector<128x1xf32> to vector<128x64xf32>
    %3 = vector.broadcast %1 : vector<1x64xf32> to vector<128x64xf32>
    %4 = arith.mulf %2, %3 : vector<128x64xf32>
    %5 = math.cos %4 : vector<128x64xf32>
    %6 = math.sin %4 : vector<128x64xf32>
    %7 = tpu.concatenate %5, %6 in 1 : vector<128x64xf32>, vector<128x64xf32> -> vector<128x128xf32>
    %8 = arith.truncf %7 : vector<128x128xf32> to vector<128x128xbf16>
    %c0_3 = arith.constant 0 : index
    %c0_4 = arith.constant 0 : index
    %9 = vector.load %arg3[%c0_3, %c0_4] : memref<128x128xbf16, #tpu.memory_space<vmem>>, vector<128x128xbf16>
    %cst = arith.constant dense<0.000000e+00> : vector<128x128xf32>
    %10 = tpu.matmul %8, %9, %cst {dimension_numbers = #tpu.dot_dimension_numbers<[1], [0], [0], [1], [0, 0, 1, 1], [], []>} : vector<128x128xbf16>, vector<128x128xbf16>, vector<128x128xf32> -> vector<128x128xf32>
    %c0_5 = arith.constant 0 : index
    %c0_6 = arith.constant 0 : index
    %11 = vector.load %arg4[%c0_5, %c0_6] : memref<1x128xf32, #tpu.memory_space<vmem>>, vector<1x128xf32>
    %12 = vector.broadcast %11 : vector<1x128xf32> to vector<128x128xf32>
    %13 = arith.addf %10, %12 : vector<128x128xf32>
    %14 = arith.negf %13 : vector<128x128xf32>
    %15 = math.exp %14 : vector<128x128xf32>
    %cst_7 = arith.constant 1.000000e+00 : f32
    %16 = vector.broadcast %cst_7 : f32 to vector<128x128xf32>
    %17 = arith.addf %16, %15 : vector<128x128xf32>
    %18 = arith.divf %16, %17 : vector<128x128xf32>
    %19 = arith.mulf %13, %18 : vector<128x128xf32>
    %20 = arith.truncf %19 : vector<128x128xf32> to vector<128x128xbf16>
    %c0_8 = arith.constant 0 : index
    %c0_9 = arith.constant 0 : index
    %21 = vector.load %arg5[%c0_8, %c0_9] : memref<128x128xbf16, #tpu.memory_space<vmem>>, vector<128x128xbf16>
    %cst_10 = arith.constant dense<0.000000e+00> : vector<128x128xf32>
    %22 = tpu.matmul %20, %21, %cst_10 {dimension_numbers = #tpu.dot_dimension_numbers<[1], [0], [0], [1], [0, 0, 1, 1], [], []>} : vector<128x128xbf16>, vector<128x128xbf16>, vector<128x128xf32> -> vector<128x128xf32>
    %c0_11 = arith.constant 0 : index
    %c0_12 = arith.constant 0 : index
    %23 = vector.load %arg6[%c0_11, %c0_12] : memref<1x128xf32, #tpu.memory_space<vmem>>, vector<1x128xf32>
    %24 = vector.broadcast %23 : vector<1x128xf32> to vector<128x128xf32>
    %25 = arith.addf %22, %24 : vector<128x128xf32>
    %c0_13 = arith.constant 0 : index
    %c0_14 = arith.constant 0 : index
    %26 = vector.load %arg7[%c0_13, %c0_14] : memref<128x128xf32, #tpu.memory_space<vmem>>, vector<128x128xf32>
    tpu.vector_store %arg7[%c0_13, %c0_14], %25 {strides = array<i32>} : memref<128x128xf32, #tpu.memory_space<vmem>>, vector<128x128xf32>,
    return
  }
  func.func @transform_0(%arg0: i32) -> (i32, i32) {
    %c0_i32 = arith.constant 0 : i32
    %c0_i32_0 = arith.constant 0 : i32
    %c0_i32_1 = arith.constant 0 : i32
    return %c0_i32, %c0_i32_0 : i32, i32
  }
  func.func @transform_1(%arg0: i32) -> (i32, i32) {
    %c0_i32 = arith.constant 0 : i32
    %c0_i32_0 = arith.constant 0 : i32
    return %arg0, %c0_i32 : i32, i32
  }
  func.func @transform_2(%arg0: i32) -> (i32, i32) {
    %c0_i32 = arith.constant 0 : i32
    %c0_i32_0 = arith.constant 0 : i32
    %c0_i32_1 = arith.constant 0 : i32
    return %c0_i32, %c0_i32_0 : i32, i32
  }
  func.func @transform_3(%arg0: i32) -> (i32, i32) {
    %c0_i32 = arith.constant 0 : i32
    %c0_i32_0 = arith.constant 0 : i32
    %c0_i32_1 = arith.constant 0 : i32
    return %c0_i32, %c0_i32_0 : i32, i32
  }
  func.func @transform_4(%arg0: i32) -> (i32, i32) {
    %c0_i32 = arith.constant 0 : i32
    %c0_i32_0 = arith.constant 0 : i32
    %c0_i32_1 = arith.constant 0 : i32
    return %c0_i32, %c0_i32_0 : i32, i32
  }
  func.func @transform_5(%arg0: i32) -> (i32, i32) {
    %c0_i32 = arith.constant 0 : i32
    %c0_i32_0 = arith.constant 0 : i32
    %c0_i32_1 = arith.constant 0 : i32
    return %c0_i32, %c0_i32_0 : i32, i32
  }
  func.func @transform_6(%arg0: i32) -> (i32, i32) {
    %c0_i32 = arith.constant 0 : i32
    %c0_i32_0 = arith.constant 0 : i32
    return %arg0, %c0_i32 : i32, i32
  }
}

</mosaic_0001>

<llo_original>
// kernel: tpu_custom_call.1
$region0: #{tpu_custom_call.1}
  #allocation0 [shape = 'u32[]', space=smem, size = 0x4, offset = 0x4, fixed_abs, tag = 'smem constant byte address 0x4 - core index']
  #allocation1 [shape = 'u32[144,128]{1,0:T(1,128)}', space=vmem, size = 0x12000, scoped, tag = 'internal scratch']
  %s0 = inlined_call_operand.vmem [shape: f32[1,64], index: 0, kind: input, shape index: {}]
  %s1 = inlined_call_operand.vmem [shape: f32[256,1], index: 1, kind: input, shape index: {}]
  %s2 = inlined_call_operand.vmem [shape: bf16[128,128], index: 2, kind: input, shape index: {}]
  %s3 = inlined_call_operand.vmem [shape: f32[1,128], index: 3, kind: input, shape index: {}]
  %s4 = inlined_call_operand.vmem [shape: bf16[128,128], index: 4, kind: input, shape index: {}]
  %s5 = inlined_call_operand.vmem [shape: f32[1,128], index: 5, kind: input, shape index: {}]
  %s6 = inlined_call_operand.hbm [shape: f32[256,128], index: 6, kind: output, shape index: {}]
  %s7 = sld [smem:[#allocation0]]
  $region57: #{tpu_custom_call.1} parent=0
    _
  %s9 = ssub.s32 1, %s7
  %s10 = scalar_select 0, %s9, %s7
  $region1: #{tpu_custom_call.1} parent=0
    #allocation2 [shape = 'u8[131072]{0}', space=vmem, size = 0x20000, scoped, tag = 'output window, operand 0']
    #allocation3 [shape = 's32[2]{0}', space=sflag, size = 0x8, scoped, tag = 'scoped memory for tpu_custom_call.1']
    %11 = vsyncpa [#allocation3], 0
    %s12 = scalar_lea.sflag [#allocation3], 1
    %13 = vsyncpa %s12, 0
    loop: start=0, step=1, limit=4
    $region2: #{tpu_custom_call.1} parent=1 // loop_pre_header
      _
    $region3: #{tpu_custom_call.1} parent=1 // loop_header
      %s15 = sphi 0, %s19
      %p16 = scmp.ge.s32.totalorder %s15, 4
      %s23 = sphi 0, %s23
      %s25 = sphi 0, %s23
      %s26 = sphi 0, %s25
      %s40 = sphi 0, %s26
      %s46 = sphi 0, %s48
      %s49 = sphi 0, %s46
      %s50 = sphi 0, %s49
      %s66 = sphi 0, %s50
      %s70 = sphi 0, %s70
      %s72 = sphi 0, %s70
      %s73 = sphi 0, %s72
      %s87 = sphi 0, %s73
      %s91 = sphi 0, %s91
      %s93 = sphi 0, %s91
      %s94 = sphi 0, %s93
      %s108 = sphi 0, %s94
      %s112 = sphi 0, %s112
      %s114 = sphi 0, %s112
      %s115 = sphi 0, %s114
      %s129 = sphi 0, %s115
      %s133 = sphi 0, %s133
      %s135 = sphi 0, %s133
      %s136 = sphi 0, %s135
      %s150 = sphi 0, %s136
      %s156 = sphi 0, %s158
      %s159 = sphi 0, %s156
      %s160 = sphi 0, %s159
      %s176 = sphi 0, %s160
    $region4: #{tpu_custom_call.1} parent=1 // loop_header_branch
      %18 = sbr.rel (%p16) target = $region8
    $region5: #{tpu_custom_call.1} parent=1 // loop_body
      %s20 = ssub.s32 %s15, 1
      %s21 = ssub.s32 %s15, 2
      %s22 = sadd.s32 %s15, 1
      %s24 = sadd.s32 %s23, 1
      %p27 = scmp.eq.s32.totalorder %s15, 1
      %p28 = scmp.ne.s32.totalorder %s23, %s25
      %p29 = scmp.eq.s32.totalorder %s15, 0
      %p30 = por %p28, %p29
      %p31 = scmp.ne.s32.totalorder %s23, %s25
      %p32 = scmp.eq.s32.totalorder %s20, 1
      %p33 = por %p31, %p32
      %p34 = scmp.ne.s32.totalorder %s25, %s26
      %p35 = scmp.eq.s32.totalorder %s20, 0
      %p36 = por %p34, %p35
      %p37 = scmp.ne.s32.totalorder %s25, %s26
      %p38 = scmp.eq.s32.totalorder %s21, 1
      %p39 = por %p37, %p38
      %p41 = scmp.ne.s32.totalorder %s26, %s40
      %p42 = scmp.eq.s32.totalorder %s21, 0
      %p43 = por %p41, %p42
      %s44 = ssub.s32 %s15, %s22
      %p45 = scmp.eq.s32.totalorder %s44, 0
      %s47 = sadd.s32 %s46, 1
      %s48 = scalar_select %p45, %s46, %s47
      %p51 = pneg %p45
      %p52 = scmp.eq.s32.totalorder %s15, 1
      %p53 = por %p51, %p52
      %p54 = scmp.ne.s32.totalorder %s46, %s49
      %p55 = scmp.eq.s32.totalorder %s15, 0
      %p56 = por %p54, %p55
      %p57 = scmp.ne.s32.totalorder %s46, %s49
      %p58 = scmp.eq.s32.totalorder %s20, 1
      %p59 = por %p57, %p58
      %p60 = scmp.ne.s32.totalorder %s49, %s50
      %p61 = scmp.eq.s32.totalorder %s20, 0
      %p62 = por %p60, %p61
      %p63 = scmp.ne.s32.totalorder %s49, %s50
      %p64 = scmp.eq.s32.totalorder %s21, 1
      %p65 = por %p63, %p64
      %p67 = scmp.ne.s32.totalorder %s50, %s66
      %p68 = scmp.eq.s32.totalorder %s21, 0
      %p69 = por %p67, %p68
      %s71 = sadd.s32 %s70, 1
      %p74 = scmp.eq.s32.totalorder %s15, 1
      %p75 = scmp.ne.s32.totalorder %s70, %s72
      %p76 = scmp.eq.s32.totalorder %s15, 0
      %p77 = por %p75, %p76
      %p78 = scmp.ne.s32.totalorder %s70, %s72
      %p79 = scmp.eq.s32.totalorder %s20, 1
      %p80 = por %p78, %p79
      %p81 = scmp.ne.s32.totalorder %s72, %s73
      %p82 = scmp.eq.s32.totalorder %s20, 0
      %p83 = por %p81, %p82
      %p84 = scmp.ne.s32.totalorder %s72, %s73
      %p85 = scmp.eq.s32.totalorder %s21, 1
      %p86 = por %p84, %p85
      %p88 = scmp.ne.s32.totalorder %s73, %s87
      %p89 = scmp.eq.s32.totalorder %s21, 0
      %p90 = por %p88, %p89
      %s92 = sadd.s32 %s91, 1
      %p95 = scmp.eq.s32.totalorder %s15, 1
      %p96 = scmp.ne.s32.totalorder %s91, %s93
      %p97 = scmp.eq.s32.totalorder %s15, 0
      %p98 = por %p96, %p97
      %p99 = scmp.ne.s32.totalorder %s91, %s93
      %p100 = scmp.eq.s32.totalorder %s20, 1
      %p101 = por %p99, %p100
      %p102 = scmp.ne.s32.totalorder %s93, %s94
      %p103 = scmp.eq.s32.totalorder %s20, 0
      %p104 = por %p102, %p103
      %p105 = scmp.ne.s32.totalorder %s93, %s94
      %p106 = scmp.eq.s32.totalorder %s21, 1
      %p107 = por %p105, %p106
      %p109 = scmp.ne.s32.totalorder %s94, %s108
      %p110 = scmp.eq.s32.totalorder %s21, 0
      %p111 = por %p109, %p110
      %s113 = sadd.s32 %s112, 1
      %p116 = scmp.eq.s32.totalorder %s15, 1
      %p117 = scmp.ne.s32.totalorder %s112, %s114
      %p118 = scmp.eq.s32.totalorder %s15, 0
      %p119 = por %p117, %p118
      %p120 = scmp.ne.s32.totalorder %s112, %s114
      %p121 = scmp.eq.s32.totalorder %s20, 1
      %p122 = por %p120, %p121
      %p123 = scmp.ne.s32.totalorder %s114, %s115
      %p124 = scmp.eq.s32.totalorder %s20, 0
      %p125 = por %p123, %p124
      %p126 = scmp.ne.s32.totalorder %s114, %s115
      %p127 = scmp.eq.s32.totalorder %s21, 1
      %p128 = por %p126, %p127
      %p130 = scmp.ne.s32.totalorder %s115, %s129
      %p131 = scmp.eq.s32.totalorder %s21, 0
      %p132 = por %p130, %p131
      %s134 = sadd.s32 %s133, 1
      %p137 = scmp.eq.s32.totalorder %s15, 1
      %p138 = scmp.ne.s32.totalorder %s133, %s135
      %p139 = scmp.eq.s32.totalorder %s15, 0
      %p140 = por %p138, %p139
      %p141 = scmp.ne.s32.totalorder %s133, %s135
      %p142 = scmp.eq.s32.totalorder %s20, 1
      %p143 = por %p141, %p142
      %p144 = scmp.ne.s32.totalorder %s135, %s136
      %p145 = scmp.eq.s32.totalorder %s20, 0
      %p146 = por %p144, %p145
      %p147 = scmp.ne.s32.totalorder %s135, %s136
      %p148 = scmp.eq.s32.totalorder %s21, 1
      %p149 = por %p147, %p148
      %p151 = scmp.ne.s32.totalorder %s136, %s150
      %p152 = scmp.eq.s32.totalorder %s21, 0
      %p153 = por %p151, %p152
      %s154 = ssub.s32 %s15, %s22
      %p155 = scmp.eq.s32.totalorder %s154, 0
      %s157 = sadd.s32 %s156, 1
      %s158 = scalar_select %p155, %s156, %s157
      %p161 = pneg %p155
      %p162 = scmp.eq.s32.totalorder %s15, 1
      %p163 = por %p161, %p162
      %p164 = scmp.ne.s32.totalorder %s156, %s159
      %p165 = scmp.eq.s32.totalorder %s15, 0
      %p166 = por %p164, %p165
      %p167 = scmp.ne.s32.totalorder %s156, %s159
      %p168 = scmp.eq.s32.totalorder %s20, 1
      %p169 = por %p167, %p168
      %p170 = scmp.ne.s32.totalorder %s159, %s160
      %p171 = scmp.eq.s32.totalorder %s20, 0
      %p172 = por %p170, %p171
      %p173 = scmp.ne.s32.totalorder %s159, %s160
      %p174 = scmp.eq.s32.totalorder %s21, 1
      %p175 = por %p173, %p174
      %p177 = scmp.ne.s32.totalorder %s160, %s176
      %p178 = scmp.eq.s32.totalorder %s21, 0
      %p179 = por %p177, %p178
      %p180 = scmp.le.s32.totalorder 1, %s15
      %p181 = scmp.lt.s32.totalorder %s15, 3
      %p182 = pnand %p180, %p181
      %p183 = pneg %p182
      // Predicated region
      $region9: #{tpu_custom_call.1} parent=5 // pred_check
        _
      $region10: #{tpu_custom_call.1} parent=5 // pred_check_branch
        %185 = sbr.rel (%p182) target = $region12
      $region11: #{tpu_custom_call.1} parent=5 // pred_region
        %s186 = ssub.s32 %s15, 1
        // Predicated region
        $region13: #{tpu_custom_call.1} parent=11 // pred_check
          %p187 = pneg %p36
        $region14: #{tpu_custom_call.1} parent=11 // pred_check_branch
          %189 = sbr.rel (%p187) target = $region16
        $region15: #{tpu_custom_call.1} parent=11 // pred_region
          _
        $region16: #{tpu_custom_call.1} parent=11 // pred_fallthru
          _
        // Predicated region
        $region17: #{tpu_custom_call.1} parent=11 // pred_check
          %p190 = pneg %p83
        $region18: #{tpu_custom_call.1} parent=11 // pred_check_branch
          %192 = sbr.rel (%p190) target = $region20
        $region19: #{tpu_custom_call.1} parent=11 // pred_region
          _
        $region20: #{tpu_custom_call.1} parent=11 // pred_fallthru
          _
        // Predicated region
        $region21: #{tpu_custom_call.1} parent=11 // pred_check
          %p193 = pneg %p104
        $region22: #{tpu_custom_call.1} parent=11 // pred_check_branch
          %195 = sbr.rel (%p193) target = $region24
        $region23: #{tpu_custom_call.1} parent=11 // pred_region
          _
        $region24: #{tpu_custom_call.1} parent=11 // pred_fallthru
          _
        // Predicated region
        $region25: #{tpu_custom_call.1} parent=11 // pred_check
          %p196 = pneg %p125
        $region26: #{tpu_custom_call.1} parent=11 // pred_check_branch
          %198 = sbr.rel (%p196) target = $region28
        $region27: #{tpu_custom_call.1} parent=11 // pred_region
          _
        $region28: #{tpu_custom_call.1} parent=11 // pred_fallthru
          _
        // Predicated region
        $region29: #{tpu_custom_call.1} parent=11 // pred_check
          %p199 = pneg %p146
        $region30: #{tpu_custom_call.1} parent=11 // pred_check_branch
          %201 = sbr.rel (%p199) target = $region32
        $region31: #{tpu_custom_call.1} parent=11 // pred_region
          _
        $region32: #{tpu_custom_call.1} parent=11 // pred_fallthru
          _
      $region12: #{tpu_custom_call.1} parent=5 // pred_fallthru
        _
      %p202 = scmp.lt.s32.totalorder %s15, 2
      // Predicated region
      $region33: #{tpu_custom_call.1} parent=5 // pred_check
        %p203 = pneg %p202
      $region34: #{tpu_custom_call.1} parent=5 // pred_check_branch
        %205 = sbr.rel (%p203) target = $region36
      $region35: #{tpu_custom_call.1} parent=5 // pred_region
        // Predicated region
        $region37: #{tpu_custom_call.1} parent=35 // pred_check
          %p206 = pneg %p56
        $region38: #{tpu_custom_call.1} parent=35 // pred_check_branch
          %208 = sbr.rel (%p206) target = $region40
        $region39: #{tpu_custom_call.1} parent=35 // pred_region
          %s209 = smul.u32 16, %s15
          %p210 = scmp.lt.s32.totalorder %s209, 31
          %s211 = scalar_select %p210, %s209, 31
          %s212 = smul.addr %s211, 8
          %s213 = scalar_lea.vmem %s1, %s212
          %s214 = smul.u32 16, %s15
        $region40: #{tpu_custom_call.1} parent=35 // pred_fallthru
          _
      $region36: #{tpu_custom_call.1} parent=5 // pred_fallthru
        _
      %p215 = scmp.le.s32.totalorder 1, %s15
      %p216 = scmp.lt.s32.totalorder %s15, 3
      %p217 = pnand %p215, %p216
      %p218 = pneg %p217
      // Predicated region
      $region41: #{tpu_custom_call.1} parent=5 // pred_check
        _
      $region42: #{tpu_custom_call.1} parent=5 // pred_check_branch
        %220 = sbr.rel (%p217) target = $region44
      $region43: #{tpu_custom_call.1} parent=5 // pred_region
        %s221 = ssub.s32 %s15, 1
        %p222 = pneg %p36
        %p223 = pneg %p33
        %s224 = smul.u32 16, %s20
        %p225 = scmp.lt.s32.totalorder %s224, 31
        %s226 = scalar_select %p225, %s224, 31
        %s227 = smul.addr %s226, 8
        %s228 = scalar_lea.vmem %s1, %s227
        %p229 = pneg %p62
        %p230 = pneg %p59
        %p231 = pneg %p83
        %p232 = pneg %p80
        %p233 = pneg %p104
        %p234 = pneg %p101
        %p235 = pneg %p125
        %p236 = pneg %p122
        %p237 = pneg %p146
        %p238 = pneg %p143
        %p239 = pneg %p172
        %p240 = pneg %p169
        %s241 = sand.u32 %s159, 1
        %s242 = scalar_lea.sflag [#allocation3], %s241
        %s243 = sand.u32 %s159, 1
        %s244 = smul.addr %s243, 128
        %s245 = scalar_lea.vmem [#allocation2], %s244
        %s246 = smul.u32 16, %s20
        %p247 = scmp.lt.s32.totalorder %s246, 31
        %s248 = scalar_select %p247, %s246, 31
        %s249 = smul.addr %s248, 8
        %s250 = scalar_lea.vmem %s1, %s249
        %s251 = smul.u32 16, %s20
        %s252 = smul.u32 16, %s20
        %v254 = vld [vmem:[%s250] sm:$0xff]
        %v255 = vld [vmem:[%s250 + $0x8] sm:$0xff]
        %v256 = vld [vmem:[%s250 + $0x10] sm:$0xff]
        %v257 = vld [vmem:[%s250 + $0x18] sm:$0xff]
        %v258 = vld [vmem:[%s250 + $0x20] sm:$0xff]
        %v259 = vld [vmem:[%s250 + $0x28] sm:$0xff]
        %v260 = vld [vmem:[%s250 + $0x30] sm:$0xff]
        %v261 = vld [vmem:[%s250 + $0x38] sm:$0xff]
        %v262 = vld [vmem:[%s250 + $0x40] sm:$0xff]
        %v263 = vld [vmem:[%s250 + $0x48] sm:$0xff]
        %v264 = vld [vmem:[%s250 + $0x50] sm:$0xff]
        %v265 = vld [vmem:[%s250 + $0x58] sm:$0xff]
        %v266 = vld [vmem:[%s250 + $0x60] sm:$0xff]
        %v267 = vld [vmem:[%s250 + $0x68] sm:$0xff]
        %v268 = vld [vmem:[%s250 + $0x70] sm:$0xff]
        %v269 = vld [vmem:[%s250 + $0x78] sm:$0xff]
        %v270 = vld [vmem:[%s0] sm:$0x1]
        %272 = vset.pattern.permute.xlu0 0
        %273 = vperm.xlu0 %272, %v254
        %v274 = vpop.permute.xlu0 %273
        %277 = vset.pattern.permute.xlu0 0
        %278 = vperm.xlu0 %277, %v255
        %v279 = vpop.permute.xlu0 %278
        %282 = vset.pattern.permute.xlu0 0
        %283 = vperm.xlu0 %282, %v256
        %v284 = vpop.permute.xlu0 %283
        %287 = vset.pattern.permute.xlu0 0
        %288 = vperm.xlu0 %287, %v257
        %v289 = vpop.permute.xlu0 %288
        %292 = vset.pattern.permute.xlu0 0
        %293 = vperm.xlu0 %292, %v258
        %v294 = vpop.permute.xlu0 %293
        %297 = vset.pattern.permute.xlu0 0
        %298 = vperm.xlu0 %297, %v259
        %v299 = vpop.permute.xlu0 %298
        %302 = vset.pattern.permute.xlu0 0
        %303 = vperm.xlu0 %302, %v260
        %v304 = vpop.permute.xlu0 %303
        %307 = vset.pattern.permute.xlu0 0
        %308 = vperm.xlu0 %307, %v261
        %v309 = vpop.permute.xlu0 %308
        %312 = vset.pattern.permute.xlu0 0
        %313 = vperm.xlu0 %312, %v262
        %v314 = vpop.permute.xlu0 %313
        %317 = vset.pattern.permute.xlu0 0
        %318 = vperm.xlu0 %317, %v263
        %v319 = vpop.permute.xlu0 %318
        %322 = vset.pattern.permute.xlu0 0
        %323 = vperm.xlu0 %322, %v264
        %v324 = vpop.permute.xlu0 %323
        %327 = vset.pattern.permute.xlu0 0
        %328 = vperm.xlu0 %327, %v265
        %v329 = vpop.permute.xlu0 %328
        %332 = vset.pattern.permute.xlu0 0
        %333 = vperm.xlu0 %332, %v266
        %v334 = vpop.permute.xlu0 %333
        %337 = vset.pattern.permute.xlu0 0
        %338 = vperm.xlu0 %337, %v267
        %v339 = vpop.permute.xlu0 %338
        %342 = vset.pattern.permute.xlu0 0
        %343 = vperm.xlu0 %342, %v268
        %v344 = vpop.permute.xlu0 %343
        %347 = vset.pattern.permute.xlu0 0
        %348 = vperm.xlu0 %347, %v269
        %v349 = vpop.permute.xlu0 %348
        %v352 = vlaneseq
        %v353 = vshrl.u32 %v352, 7
        %v354 = vsub.s32 0, %v353
        %v355 = vrot.slane %v270, %v354
        %v357 = vmul.f32 %v274, %v355
        %v358 = vmul.f32 %v279, %v355
        %v359 = vmul.f32 %v284, %v355
        %v360 = vmul.f32 %v289, %v355
        %v361 = vmul.f32 %v294, %v355
        %v362 = vmul.f32 %v299, %v355
        %v363 = vmul.f32 %v304, %v355
        %v364 = vmul.f32 %v309, %v355
        %v365 = vmul.f32 %v314, %v355
        %v366 = vmul.f32 %v319, %v355
        %v367 = vmul.f32 %v324, %v355
        %v368 = vmul.f32 %v329, %v355
        %v369 = vmul.f32 %v334, %v355
        %v370 = vmul.f32 %v339, %v355
        %v371 = vmul.f32 %v344, %v355
        %v372 = vmul.f32 %v349, %v355
        %v373 = vand.u32 2147483647, %v357
        %vm374 = vcmp.le.f32.partialorder %v373, 0.7853982
        %vm375 = vcmp.lt.s32.totalorder %v357, 0
        %v376 = vand.u32 %v357, 2139095040
        %v377 = vshrl.u32 %v376, 23
        %v378 = vsub.s32 %v377, 127
        %v379 = vand.u32 2147483647, %v357
        %v380 = vand.u32 %v379, 8388607
        %v381 = vor.u32 %v380, 8388608
        %v382 = vsub.s32 0, %v381
        %v383 = vadd.s32 %v378, 1
        %vm384 = vcmp.gt.s32.totalorder %v383, 0
        %v385 = vsel %vm384, %v383, 0
        %v386 = vshrl.u32 %v385, 5
        %v387 = vand.u32 %v385, 31
        %v388 = vsub.s32 32, %v387
        %v389 = vshrl.u32 683565275, %v388
        %v390 = vshll.u32 683565275, %v387
        %v391 = vshrl.u32 2475754826, %v388
        %v392 = vor.u32 %v390, %v391
        %v393 = vshll.u32 2475754826, %v387
        %v394 = vshrl.u32 2131351028, %v388
        %v395 = vor.u32 %v393, %v394
        %v396 = vshll.u32 2131351028, %v387
        %v397 = vshrl.u32 2102212464, %v388
        %v398 = vor.u32 %v396, %v397
        %v399 = vshll.u32 2102212464, %v387
        %v400 = vshrl.u32 920167782, %v388
        %v401 = vor.u32 %v399, %v400
        %v402 = vshll.u32 920167782, %v387
        %v403 = vshrl.u32 1326507024, %v388
        %v404 = vor.u32 %v402, %v403
        %vm405 = vcmp.lt.s32.totalorder %v386, 1
        %vm406 = vcmp.lt.s32.totalorder %v386, 2
        %vm407 = vcmp.lt.s32.totalorder %v386, 3
        %vm408 = vcmp.lt.s32.totalorder %v386, 4
        %v409 = vsel %vm405, %v389, %v392
        %v410 = vsel %vm408, %v398, 2102212464
        %v411 = vsel %vm407, %v395, %v410
        %v412 = vsel %vm406, %v409, %v411
        %v413 = vsel %vm405, %v392, %v395
        %v414 = vsel %vm408, %v401, 920167782
        %v415 = vsel %vm407, %v398, %v414
        %v416 = vsel %vm406, %v413, %v415
        %v417 = vsel %vm405, %v395, %v398
        %v418 = vsel %vm408, %v404, 1326507024
        %v419 = vsel %vm407, %v401, %v418
        %v420 = vsel %vm406, %v417, %v419
        %v421 = vshll.u32 %v381, 8
        %v422 = vmul.u32.u64.compose %v421, %v420
        %v423 = vextract.low.u32 %v422
        %v424 = vextract.high.u32 %v422
        %v425 = vmul.u32.u64.compose %v421, %v416
        %v426 = vextract.low.u32 %v425
        %v427 = vextract.high.u32 %v425
        %v428 = vmul.u32 %v421, %v412
        %v429 = vadd.s32 %v424, %v426
        %vm430 = vc.u32 %v424, %v426
        %v431 = vadd.s32 %v427, 1
        %v432 = vsel %vm430, %v431, %v427
        %v433 = vadd.s32 %v428, %v432
        %v434 = vadd.s32 %v433, 536870912
        %v435 = vshrl.u32 %v434, 30
        %v436 = vshll.u32 %v435, 30
        %v437 = vsub.s32 %v433, %v436
        %vm438 = vcmp.lt.s32.totalorder %v437, 0
        %v439 = vsub.s32 0, %v437
        %v440 = vsel %vm438, %v439, %v437
        %v441 = vclz %v440
        %v442 = vsub.s32 %v441, 2
        %vm443 = vcmp.gt.s32.totalorder 0, %v442
        %v444 = vsel %vm443, 0, %v442
        %v445 = vsub.s32 32, %v444
        %v446 = vshll.u32 %v437, %v444
        %v447 = vshrl.u32 %v429, %v445
        %v448 = vor.u32 %v446, %v447
        %v449 = vsub.s32 4294967266, %v444
        %v450 = vadd.s32 %v449, 127
        %v451 = vshll.u32 %v450, 23
        %v452 = vor.u32 4788187, %v451
        %v453 = vand.u32 2147483647, %v452
        %v455 = vcvt.s32.f32 %v448
        %v456 = vmul.f32 %v455, %v453
        %v457 = vxor.u32 %v456, 2147483648
        %v458 = vsel %vm375, %v457, %v456
        %v459 = vsub.s32 4, %v435
        %v460 = vsel %vm375, %v459, %v435
        %v461 = vsel %vm374, %v357, %v458
        %v462 = vsel %vm374, 0, %v460
        %v463 = vcosq.f32.pop %v461
        %v464 = vsinq.f32.pop %v461
        %vm465 = vweird.f32 %v357
        %v466 = vand.u32 %v462, 3
        %vm467 = vcmp.lt.s32.totalorder %v466, 2
        %vm468 = vcmp.eq.s32.totalorder %v466, 0
        %v469 = vxor.u32 %v464, 2147483648
        %v470 = vsel %vm468, %v463, %v469
        %vm471 = vcmp.eq.s32.totalorder %v466, 2
        %v472 = vxor.u32 %v463, 2147483648
        %v473 = vsel %vm471, %v472, %v464
        %v474 = vsel %vm467, %v470, %v473
        %v475 = vsel %vm465, nan, %v474
        %v476 = vand.u32 2147483647, %v358
        %vm477 = vcmp.le.f32.partialorder %v476, 0.7853982
        %vm478 = vcmp.lt.s32.totalorder %v358, 0
        %v479 = vand.u32 %v358, 2139095040
        %v480 = vshrl.u32 %v479, 23
        %v481 = vsub.s32 %v480, 127
        %v482 = vand.u32 2147483647, %v358
        %v483 = vand.u32 %v482, 8388607
        %v484 = vor.u32 %v483, 8388608
        %v485 = vsub.s32 0, %v484
        %v486 = vadd.s32 %v481, 1
        %vm487 = vcmp.gt.s32.totalorder %v486, 0
        %v488 = vsel %vm487, %v486, 0
        %v489 = vshrl.u32 %v488, 5
        %v490 = vand.u32 %v488, 31
        %v491 = vsub.s32 32, %v490
        %v492 = vshrl.u32 683565275, %v491
        %v493 = vshll.u32 683565275, %v490
        %v494 = vshrl.u32 2475754826, %v491
        %v495 = vor.u32 %v493, %v494
        %v496 = vshll.u32 2475754826, %v490
        %v497 = vshrl.u32 2131351028, %v491
        %v498 = vor.u32 %v496, %v497
        %v499 = vshll.u32 2131351028, %v490
        %v500 = vshrl.u32 2102212464, %v491
        %v501 = vor.u32 %v499, %v500
        %v502 = vshll.u32 2102212464, %v490
        %v503 = vshrl.u32 920167782, %v491
        %v504 = vor.u32 %v502, %v503
        %v505 = vshll.u32 920167782, %v490
        %v506 = vshrl.u32 1326507024, %v491
        %v507 = vor.u32 %v505, %v506
        %vm508 = vcmp.lt.s32.totalorder %v489, 1
        %vm509 = vcmp.lt.s32.totalorder %v489, 2
        %vm510 = vcmp.lt.s32.totalorder %v489, 3
        %vm511 = vcmp.lt.s32.totalorder %v489, 4
        %v512 = vsel %vm508, %v492, %v495
        %v513 = vsel %vm511, %v501, 2102212464
        %v514 = vsel %vm510, %v498, %v513
        %v515 = vsel %vm509, %v512, %v514
        %v516 = vsel %vm508, %v495, %v498
        %v517 = vsel %vm511, %v504, 920167782
        %v518 = vsel %vm510, %v501, %v517
        %v519 = vsel %vm509, %v516, %v518
        %v520 = vsel %vm508, %v498, %v501
        %v521 = vsel %vm511, %v507, 1326507024
        %v522 = vsel %vm510, %v504, %v521
        %v523 = vsel %vm509, %v520, %v522
        %v524 = vshll.u32 %v484, 8
        %v525 = vmul.u32.u64.compose %v524, %v523
        %v526 = vextract.low.u32 %v525
        %v527 = vextract.high.u32 %v525
        %v528 = vmul.u32.u64.compose %v524, %v519
        %v529 = vextract.low.u32 %v528
        %v530 = vextract.high.u32 %v528
        %v531 = vmul.u32 %v524, %v515
        %v532 = vadd.s32 %v527, %v529
        %vm533 = vc.u32 %v527, %v529
        %v534 = vadd.s32 %v530, 1
        %v535 = vsel %vm533, %v534, %v530
        %v536 = vadd.s32 %v531, %v535
        %v537 = vadd.s32 %v536, 536870912
        %v538 = vshrl.u32 %v537, 30
        %v539 = vshll.u32 %v538, 30
        %v540 = vsub.s32 %v536, %v539
        %vm541 = vcmp.lt.s32.totalorder %v540, 0
        %v542 = vsub.s32 0, %v540
        %v543 = vsel %vm541, %v542, %v540
        %v544 = vclz %v543
        %v545 = vsub.s32 %v544, 2
        %vm546 = vcmp.gt.s32.totalorder 0, %v545
        %v547 = vsel %vm546, 0, %v545
        %v548 = vsub.s32 32, %v547
        %v549 = vshll.u32 %v540, %v547
        %v550 = vshrl.u32 %v532, %v548
        %v551 = vor.u32 %v549, %v550
        %v552 = vsub.s32 4294967266, %v547
        %v553 = vadd.s32 %v552, 127
        %v554 = vshll.u32 %v553, 23
        %v555 = vor.u32 4788187, %v554
        %v556 = vand.u32 2147483647, %v555
        %v558 = vcvt.s32.f32 %v551
        %v559 = vmul.f32 %v558, %v556
        %v560 = vxor.u32 %v559, 2147483648
        %v561 = vsel %vm478, %v560, %v559
        %v562 = vsub.s32 4, %v538
        %v563 = vsel %vm478, %v562, %v538
        %v564 = vsel %vm477, %v358, %v561
        %v565 = vsel %vm477, 0, %v563
        %v566 = vcosq.f32.pop %v564
        %v567 = vsinq.f32.pop %v564
        %vm568 = vweird.f32 %v358
        %v569 = vand.u32 %v565, 3
        %vm570 = vcmp.lt.s32.totalorder %v569, 2
        %vm571 = vcmp.eq.s32.totalorder %v569, 0
        %v572 = vxor.u32 %v567, 2147483648
        %v573 = vsel %vm571, %v566, %v572
        %vm574 = vcmp.eq.s32.totalorder %v569, 2
        %v575 = vxor.u32 %v566, 2147483648
        %v576 = vsel %vm574, %v575, %v567
        %v577 = vsel %vm570, %v573, %v576
        %v578 = vsel %vm568, nan, %v577
        %v579 = vand.u32 2147483647, %v359
        %vm580 = vcmp.le.f32.partialorder %v579, 0.7853982
        %vm581 = vcmp.lt.s32.totalorder %v359, 0
        %v582 = vand.u32 %v359, 2139095040
        %v583 = vshrl.u32 %v582, 23
        %v584 = vsub.s32 %v583, 127
        %v585 = vand.u32 2147483647, %v359
        %v586 = vand.u32 %v585, 8388607
        %v587 = vor.u32 %v586, 8388608
        %v588 = vsub.s32 0, %v587
        %v589 = vadd.s32 %v584, 1
        %vm590 = vcmp.gt.s32.totalorder %v589, 0
        %v591 = vsel %vm590, %v589, 0
        %v592 = vshrl.u32 %v591, 5
        %v593 = vand.u32 %v591, 31
        %v594 = vsub.s32 32, %v593
        %v595 = vshrl.u32 683565275, %v594
        %v596 = vshll.u32 683565275, %v593
        %v597 = vshrl.u32 2475754826, %v594
        %v598 = vor.u32 %v596, %v597
        %v599 = vshll.u32 2475754826, %v593
        %v600 = vshrl.u32 2131351028, %v594
        %v601 = vor.u32 %v599, %v600
        %v602 = vshll.u32 2131351028, %v593
        %v603 = vshrl.u32 2102212464, %v594
        %v604 = vor.u32 %v602, %v603
        %v605 = vshll.u32 2102212464, %v593
        %v606 = vshrl.u32 920167782, %v594
        %v607 = vor.u32 %v605, %v606
        %v608 = vshll.u32 920167782, %v593
        %v609 = vshrl.u32 1326507024, %v594
        %v610 = vor.u32 %v608, %v609
        %vm611 = vcmp.lt.s32.totalorder %v592, 1
        %vm612 = vcmp.lt.s32.totalorder %v592, 2
        %vm613 = vcmp.lt.s32.totalorder %v592, 3
        %vm614 = vcmp.lt.s32.totalorder %v592, 4
        %v615 = vsel %vm611, %v595, %v598
        %v616 = vsel %vm614, %v604, 2102212464
        %v617 = vsel %vm613, %v601, %v616
        %v618 = vsel %vm612, %v615, %v617
        %v619 = vsel %vm611, %v598, %v601
        %v620 = vsel %vm614, %v607, 920167782
        %v621 = vsel %vm613, %v604, %v620
        %v622 = vsel %vm612, %v619, %v621
        %v623 = vsel %vm611, %v601, %v604
        %v624 = vsel %vm614, %v610, 1326507024
        %v625 = vsel %vm613, %v607, %v624
        %v626 = vsel %vm612, %v623, %v625
        %v627 = vshll.u32 %v587, 8
        %v628 = vmul.u32.u64.compose %v627, %v626
        %v629 = vextract.low.u32 %v628
        %v630 = vextract.high.u32 %v628
        %v631 = vmul.u32.u64.compose %v627, %v622
        %v632 = vextract.low.u32 %v631
        %v633 = vextract.high.u32 %v631
        %v634 = vmul.u32 %v627, %v618
        %v635 = vadd.s32 %v630, %v632
        %vm636 = vc.u32 %v630, %v632
        %v637 = vadd.s32 %v633, 1
        %v638 = vsel %vm636, %v637, %v633
        %v639 = vadd.s32 %v634, %v638
        %v640 = vadd.s32 %v639, 536870912
        %v641 = vshrl.u32 %v640, 30
        %v642 = vshll.u32 %v641, 30
        %v643 = vsub.s32 %v639, %v642
        %vm644 = vcmp.lt.s32.totalorder %v643, 0
        %v645 = vsub.s32 0, %v643
        %v646 = vsel %vm644, %v645, %v643
        %v647 = vclz %v646
        %v648 = vsub.s32 %v647, 2
        %vm649 = vcmp.gt.s32.totalorder 0, %v648
        %v650 = vsel %vm649, 0, %v648
        %v651 = vsub.s32 32, %v650
        %v652 = vshll.u32 %v643, %v650
        %v653 = vshrl.u32 %v635, %v651
        %v654 = vor.u32 %v652, %v653
        %v655 = vsub.s32 4294967266, %v650
        %v656 = vadd.s32 %v655, 127
        %v657 = vshll.u32 %v656, 23
        %v658 = vor.u32 4788187, %v657
        %v659 = vand.u32 2147483647, %v658
        %v661 = vcvt.s32.f32 %v654
        %v662 = vmul.f32 %v661, %v659
        %v663 = vxor.u32 %v662, 2147483648
        %v664 = vsel %vm581, %v663, %v662
        %v665 = vsub.s32 4, %v641
        %v666 = vsel %vm581, %v665, %v641
        %v667 = vsel %vm580, %v359, %v664
        %v668 = vsel %vm580, 0, %v666
        %v669 = vcosq.f32.pop %v667
        %v670 = vsinq.f32.pop %v667
        %vm671 = vweird.f32 %v359
        %v672 = vand.u32 %v668, 3
        %vm673 = vcmp.lt.s32.totalorder %v672, 2
        %vm674 = vcmp.eq.s32.totalorder %v672, 0
        %v675 = vxor.u32 %v670, 2147483648
        %v676 = vsel %vm674, %v669, %v675
        %vm677 = vcmp.eq.s32.totalorder %v672, 2
        %v678 = vxor.u32 %v669, 2147483648
        %v679 = vsel %vm677, %v678, %v670
        %v680 = vsel %vm673, %v676, %v679
        %v681 = vsel %vm671, nan, %v680
        %v682 = vand.u32 2147483647, %v360
        %vm683 = vcmp.le.f32.partialorder %v682, 0.7853982
        %vm684 = vcmp.lt.s32.totalorder %v360, 0
        %v685 = vand.u32 %v360, 2139095040
        %v686 = vshrl.u32 %v685, 23
        %v687 = vsub.s32 %v686, 127
        %v688 = vand.u32 2147483647, %v360
        %v689 = vand.u32 %v688, 8388607
        %v690 = vor.u32 %v689, 8388608
        %v691 = vsub.s32 0, %v690
        %v692 = vadd.s32 %v687, 1
        %vm693 = vcmp.gt.s32.totalorder %v692, 0
        %v694 = vsel %vm693, %v692, 0
        %v695 = vshrl.u32 %v694, 5
        %v696 = vand.u32 %v694, 31
        %v697 = vsub.s32 32, %v696
        %v698 = vshrl.u32 683565275, %v697
        %v699 = vshll.u32 683565275, %v696
        %v700 = vshrl.u32 2475754826, %v697
        %v701 = vor.u32 %v699, %v700
        %v702 = vshll.u32 2475754826, %v696
        %v703 = vshrl.u32 2131351028, %v697
        %v704 = vor.u32 %v702, %v703
        %v705 = vshll.u32 2131351028, %v696
        %v706 = vshrl.u32 2102212464, %v697
        %v707 = vor.u32 %v705, %v706
        %v708 = vshll.u32 2102212464, %v696
        %v709 = vshrl.u32 920167782, %v697
        %v710 = vor.u32 %v708, %v709
        %v711 = vshll.u32 920167782, %v696
        %v712 = vshrl.u32 1326507024, %v697
        %v713 = vor.u32 %v711, %v712
        %vm714 = vcmp.lt.s32.totalorder %v695, 1
        %vm715 = vcmp.lt.s32.totalorder %v695, 2
        %vm716 = vcmp.lt.s32.totalorder %v695, 3
        %vm717 = vcmp.lt.s32.totalorder %v695, 4
        %v718 = vsel %vm714, %v698, %v701
        %v719 = vsel %vm717, %v707, 2102212464
        %v720 = vsel %vm716, %v704, %v719
        %v721 = vsel %vm715, %v718, %v720
        %v722 = vsel %vm714, %v701, %v704
        %v723 = vsel %vm717, %v710, 920167782
        %v724 = vsel %vm716, %v707, %v723
        %v725 = vsel %vm715, %v722, %v724
        %v726 = vsel %vm714, %v704, %v707
        %v727 = vsel %vm717, %v713, 1326507024
        %v728 = vsel %vm716, %v710, %v727
        %v729 = vsel %vm715, %v726, %v728
        %v730 = vshll.u32 %v690, 8
        %v731 = vmul.u32.u64.compose %v730, %v729
        %v732 = vextract.low.u32 %v731
        %v733 = vextract.high.u32 %v731
        %v734 = vmul.u32.u64.compose %v730, %v725
        %v735 = vextract.low.u32 %v734
        %v736 = vextract.high.u32 %v734
        %v737 = vmul.u32 %v730, %v721
        %v738 = vadd.s32 %v733, %v735
        %vm739 = vc.u32 %v733, %v735
        %v740 = vadd.s32 %v736, 1
        %v741 = vsel %vm739, %v740, %v736
        %v742 = vadd.s32 %v737, %v741
        %v743 = vadd.s32 %v742, 536870912
        %v744 = vshrl.u32 %v743, 30
        %v745 = vshll.u32 %v744, 30
        %v746 = vsub.s32 %v742, %v745
        %vm747 = vcmp.lt.s32.totalorder %v746, 0
        %v748 = vsub.s32 0, %v746
        %v749 = vsel %vm747, %v748, %v746
        %v750 = vclz %v749
        %v751 = vsub.s32 %v750, 2
        %vm752 = vcmp.gt.s32.totalorder 0, %v751
        %v753 = vsel %vm752, 0, %v751
        %v754 = vsub.s32 32, %v753
        %v755 = vshll.u32 %v746, %v753
        %v756 = vshrl.u32 %v738, %v754
        %v757 = vor.u32 %v755, %v756
        %v758 = vsub.s32 4294967266, %v753
        %v759 = vadd.s32 %v758, 127
        %v760 = vshll.u32 %v759, 23
        %v761 = vor.u32 4788187, %v760
        %v762 = vand.u32 2147483647, %v761
        %v764 = vcvt.s32.f32 %v757
        %v765 = vmul.f32 %v764, %v762
        %v766 = vxor.u32 %v765, 2147483648
        %v767 = vsel %vm684, %v766, %v765
        %v768 = vsub.s32 4, %v744
        %v769 = vsel %vm684, %v768, %v744
        %v770 = vsel %vm683, %v360, %v767
        %v771 = vsel %vm683, 0, %v769
        %v772 = vcosq.f32.pop %v770
        %v773 = vsinq.f32.pop %v770
        %vm774 = vweird.f32 %v360
        %v775 = vand.u32 %v771, 3
        %vm776 = vcmp.lt.s32.totalorder %v775, 2
        %vm777 = vcmp.eq.s32.totalorder %v775, 0
        %v778 = vxor.u32 %v773, 2147483648
        %v779 = vsel %vm777, %v772, %v778
        %vm780 = vcmp.eq.s32.totalorder %v775, 2
        %v781 = vxor.u32 %v772, 2147483648
        %v782 = vsel %vm780, %v781, %v773
        %v783 = vsel %vm776, %v779, %v782
        %v784 = vsel %vm774, nan, %v783
        %v785 = vand.u32 2147483647, %v361
        %vm786 = vcmp.le.f32.partialorder %v785, 0.7853982
        %vm787 = vcmp.lt.s32.totalorder %v361, 0
        %v788 = vand.u32 %v361, 2139095040
        %v789 = vshrl.u32 %v788, 23
        %v790 = vsub.s32 %v789, 127
        %v791 = vand.u32 2147483647, %v361
        %v792 = vand.u32 %v791, 8388607
        %v793 = vor.u32 %v792, 8388608
        %v794 = vsub.s32 0, %v793
        %v795 = vadd.s32 %v790, 1
        %vm796 = vcmp.gt.s32.totalorder %v795, 0
        %v797 = vsel %vm796, %v795, 0
        %v798 = vshrl.u32 %v797, 5
        %v799 = vand.u32 %v797, 31
        %v800 = vsub.s32 32, %v799
        %v801 = vshrl.u32 683565275, %v800
        %v802 = vshll.u32 683565275, %v799
        %v803 = vshrl.u32 2475754826, %v800
        %v804 = vor.u32 %v802, %v803
        %v805 = vshll.u32 2475754826, %v799
        %v806 = vshrl.u32 2131351028, %v800
        %v807 = vor.u32 %v805, %v806
        %v808 = vshll.u32 2131351028, %v799
        %v809 = vshrl.u32 2102212464, %v800
        %v810 = vor.u32 %v808, %v809
        %v811 = vshll.u32 2102212464, %v799
        %v812 = vshrl.u32 920167782, %v800
        %v813 = vor.u32 %v811, %v812
        %v814 = vshll.u32 920167782, %v799
        %v815 = vshrl.u32 1326507024, %v800
        %v816 = vor.u32 %v814, %v815
        %vm817 = vcmp.lt.s32.totalorder %v798, 1
        %vm818 = vcmp.lt.s32.totalorder %v798, 2
        %vm819 = vcmp.lt.s32.totalorder %v798, 3
        %vm820 = vcmp.lt.s32.totalorder %v798, 4
        %v821 = vsel %vm817, %v801, %v804
        %v822 = vsel %vm820, %v810, 2102212464
        %v823 = vsel %vm819, %v807, %v822
        %v824 = vsel %vm818, %v821, %v823
        %v825 = vsel %vm817, %v804, %v807
        %v826 = vsel %vm820, %v813, 920167782
        %v827 = vsel %vm819, %v810, %v826
        %v828 = vsel %vm818, %v825, %v827
        %v829 = vsel %vm817, %v807, %v810
        %v830 = vsel %vm820, %v816, 1326507024
        %v831 = vsel %vm819, %v813, %v830
        %v832 = vsel %vm818, %v829, %v831
        %v833 = vshll.u32 %v793, 8
        %v834 = vmul.u32.u64.compose %v833, %v832
        %v835 = vextract.low.u32 %v834
        %v836 = vextract.high.u32 %v834
        %v837 = vmul.u32.u64.compose %v833, %v828
        %v838 = vextract.low.u32 %v837
        %v839 = vextract.high.u32 %v837
        %v840 = vmul.u32 %v833, %v824
        %v841 = vadd.s32 %v836, %v838
        %vm842 = vc.u32 %v836, %v838
        %v843 = vadd.s32 %v839, 1
        %v844 = vsel %vm842, %v843, %v839
        %v845 = vadd.s32 %v840, %v844
        %v846 = vadd.s32 %v845, 536870912
        %v847 = vshrl.u32 %v846, 30
        %v848 = vshll.u32 %v847, 30
        %v849 = vsub.s32 %v845, %v848
        %vm850 = vcmp.lt.s32.totalorder %v849, 0
        %v851 = vsub.s32 0, %v849
        %v852 = vsel %vm850, %v851, %v849
        %v853 = vclz %v852
        %v854 = vsub.s32 %v853, 2
        %vm855 = vcmp.gt.s32.totalorder 0, %v854
        %v856 = vsel %vm855, 0, %v854
        %v857 = vsub.s32 32, %v856
        %v858 = vshll.u32 %v849, %v856
        %v859 = vshrl.u32 %v841, %v857
        %v860 = vor.u32 %v858, %v859
        %v861 = vsub.s32 4294967266, %v856
        %v862 = vadd.s32 %v861, 127
        %v863 = vshll.u32 %v862, 23
        %v864 = vor.u32 4788187, %v863
        %v865 = vand.u32 2147483647, %v864
        %v867 = vcvt.s32.f32 %v860
        %v868 = vmul.f32 %v867, %v865
        %v869 = vxor.u32 %v868, 2147483648
        %v870 = vsel %vm787, %v869, %v868
        %v871 = vsub.s32 4, %v847
        %v872 = vsel %vm787, %v871, %v847
        %v873 = vsel %vm786, %v361, %v870
        %v874 = vsel %vm786, 0, %v872
        %v875 = vcosq.f32.pop %v873
        %v876 = vsinq.f32.pop %v873
        %vm877 = vweird.f32 %v361
        %v878 = vand.u32 %v874, 3
        %vm879 = vcmp.lt.s32.totalorder %v878, 2
        %vm880 = vcmp.eq.s32.totalorder %v878, 0
        %v881 = vxor.u32 %v876, 2147483648
        %v882 = vsel %vm880, %v875, %v881
        %vm883 = vcmp.eq.s32.totalorder %v878, 2
        %v884 = vxor.u32 %v875, 2147483648
        %v885 = vsel %vm883, %v884, %v876
        %v886 = vsel %vm879, %v882, %v885
        %v887 = vsel %vm877, nan, %v886
        %v888 = vand.u32 2147483647, %v362
        %vm889 = vcmp.le.f32.partialorder %v888, 0.7853982
        %vm890 = vcmp.lt.s32.totalorder %v362, 0
        %v891 = vand.u32 %v362, 2139095040
        %v892 = vshrl.u32 %v891, 23
        %v893 = vsub.s32 %v892, 127
        %v894 = vand.u32 2147483647, %v362
        %v895 = vand.u32 %v894, 8388607
        %v896 = vor.u32 %v895, 8388608
        %v897 = vsub.s32 0, %v896
        %v898 = vadd.s32 %v893, 1
        %vm899 = vcmp.gt.s32.totalorder %v898, 0
        %v900 = vsel %vm899, %v898, 0
        %v901 = vshrl.u32 %v900, 5
        %v902 = vand.u32 %v900, 31
        %v903 = vsub.s32 32, %v902
        %v904 = vshrl.u32 683565275, %v903
        %v905 = vshll.u32 683565275, %v902
        %v906 = vshrl.u32 2475754826, %v903
        %v907 = vor.u32 %v905, %v906
        %v908 = vshll.u32 2475754826, %v902
        %v909 = vshrl.u32 2131351028, %v903
        %v910 = vor.u32 %v908, %v909
        %v911 = vshll.u32 2131351028, %v902
        %v912 = vshrl.u32 2102212464, %v903
        %v913 = vor.u32 %v911, %v912
        %v914 = vshll.u32 2102212464, %v902
        %v915 = vshrl.u32 920167782, %v903
        %v916 = vor.u32 %v914, %v915
        %v917 = vshll.u32 920167782, %v902
        %v918 = vshrl.u32 1326507024, %v903
        %v919 = vor.u32 %v917, %v918
        %vm920 = vcmp.lt.s32.totalorder %v901, 1
        %vm921 = vcmp.lt.s32.totalorder %v901, 2
        %vm922 = vcmp.lt.s32.totalorder %v901, 3
        %vm923 = vcmp.lt.s32.totalorder %v901, 4
        %v924 = vsel %vm920, %v904, %v907
        %v925 = vsel %vm923, %v913, 2102212464
        %v926 = vsel %vm922, %v910, %v925
        %v927 = vsel %vm921, %v924, %v926
        %v928 = vsel %vm920, %v907, %v910
        %v929 = vsel %vm923, %v916, 920167782
        %v930 = vsel %vm922, %v913, %v929
        %v931 = vsel %vm921, %v928, %v930
        %v932 = vsel %vm920, %v910, %v913
        %v933 = vsel %vm923, %v919, 1326507024
        %v934 = vsel %vm922, %v916, %v933
        %v935 = vsel %vm921, %v932, %v934
        %v936 = vshll.u32 %v896, 8
        %v937 = vmul.u32.u64.compose %v936, %v935
        %v938 = vextract.low.u32 %v937
        %v939 = vextract.high.u32 %v937
        %v940 = vmul.u32.u64.compose %v936, %v931
        %v941 = vextract.low.u32 %v940
        %v942 = vextract.high.u32 %v940
        %v943 = vmul.u32 %v936, %v927
        %v944 = vadd.s32 %v939, %v941
        %vm945 = vc.u32 %v939, %v941
        %v946 = vadd.s32 %v942, 1
        %v947 = vsel %vm945, %v946, %v942
        %v948 = vadd.s32 %v943, %v947
        %v949 = vadd.s32 %v948, 536870912
        %v950 = vshrl.u32 %v949, 30
        %v951 = vshll.u32 %v950, 30
        %v952 = vsub.s32 %v948, %v951
        %vm953 = vcmp.lt.s32.totalorder %v952, 0
        %v954 = vsub.s32 0, %v952
        %v955 = vsel %vm953, %v954, %v952
        %v956 = vclz %v955
        %v957 = vsub.s32 %v956, 2
        %vm958 = vcmp.gt.s32.totalorder 0, %v957
        %v959 = vsel %vm958, 0, %v957
        %v960 = vsub.s32 32, %v959
        %v961 = vshll.u32 %v952, %v959
        %v962 = vshrl.u32 %v944, %v960
        %v963 = vor.u32 %v961, %v962
        %v964 = vsub.s32 4294967266, %v959
        %v965 = vadd.s32 %v964, 127
        %v966 = vshll.u32 %v965, 23
        %v967 = vor.u32 4788187, %v966
        %v968 = vand.u32 2147483647, %v967
        %v970 = vcvt.s32.f32 %v963
        %v971 = vmul.f32 %v970, %v968
        %v972 = vxor.u32 %v971, 2147483648
        %v973 = vsel %vm890, %v972, %v971
        %v974 = vsub.s32 4, %v950
        %v975 = vsel %vm890, %v974, %v950
        %v976 = vsel %vm889, %v362, %v973
        %v977 = vsel %vm889, 0, %v975
        %v978 = vcosq.f32.pop %v976
        %v979 = vsinq.f32.pop %v976
        %vm980 = vweird.f32 %v362
        %v981 = vand.u32 %v977, 3
        %vm982 = vcmp.lt.s32.totalorder %v981, 2
        %vm983 = vcmp.eq.s32.totalorder %v981, 0
        %v984 = vxor.u32 %v979, 2147483648
        %v985 = vsel %vm983, %v978, %v984
        %vm986 = vcmp.eq.s32.totalorder %v981, 2
        %v987 = vxor.u32 %v978, 2147483648
        %v988 = vsel %vm986, %v987, %v979
        %v989 = vsel %vm982, %v985, %v988
        %v990 = vsel %vm980, nan, %v989
        %v991 = vand.u32 2147483647, %v363
        %vm992 = vcmp.le.f32.partialorder %v991, 0.7853982
        %vm993 = vcmp.lt.s32.totalorder %v363, 0
        %v994 = vand.u32 %v363, 2139095040
        %v995 = vshrl.u32 %v994, 23
        %v996 = vsub.s32 %v995, 127
        %v997 = vand.u32 2147483647, %v363
        %v998 = vand.u32 %v997, 8388607
        %v999 = vor.u32 %v998, 8388608
        %v1000 = vsub.s32 0, %v999
        %v1001 = vadd.s32 %v996, 1
        %vm1002 = vcmp.gt.s32.totalorder %v1001, 0
        %v1003 = vsel %vm1002, %v1001, 0
        %v1004 = vshrl.u32 %v1003, 5
        %v1005 = vand.u32 %v1003, 31
        %v1006 = vsub.s32 32, %v1005
        %v1007 = vshrl.u32 683565275, %v1006
        %v1008 = vshll.u32 683565275, %v1005
        %v1009 = vshrl.u32 2475754826, %v1006
        %v1010 = vor.u32 %v1008, %v1009
        %v1011 = vshll.u32 2475754826, %v1005
        %v1012 = vshrl.u32 2131351028, %v1006
        %v1013 = vor.u32 %v1011, %v1012
        %v1014 = vshll.u32 2131351028, %v1005
        %v1015 = vshrl.u32 2102212464, %v1006
        %v1016 = vor.u32 %v1014, %v1015
        %v1017 = vshll.u32 2102212464, %v1005
        %v1018 = vshrl.u32 920167782, %v1006
        %v1019 = vor.u32 %v1017, %v1018
        %v1020 = vshll.u32 920167782, %v1005
        %v1021 = vshrl.u32 1326507024, %v1006
        %v1022 = vor.u32 %v1020, %v1021
        %vm1023 = vcmp.lt.s32.totalorder %v1004, 1
        %vm1024 = vcmp.lt.s32.totalorder %v1004, 2
        %vm1025 = vcmp.lt.s32.totalorder %v1004, 3
        %vm1026 = vcmp.lt.s32.totalorder %v1004, 4
        %v1027 = vsel %vm1023, %v1007, %v1010
        %v1028 = vsel %vm1026, %v1016, 2102212464
        %v1029 = vsel %vm1025, %v1013, %v1028
        %v1030 = vsel %vm1024, %v1027, %v1029
        %v1031 = vsel %vm1023, %v1010, %v1013
        %v1032 = vsel %vm1026, %v1019, 920167782
        %v1033 = vsel %vm1025, %v1016, %v1032
        %v1034 = vsel %vm1024, %v1031, %v1033
        %v1035 = vsel %vm1023, %v1013, %v1016
        %v1036 = vsel %vm1026, %v1022, 1326507024
        %v1037 = vsel %vm1025, %v1019, %v1036
        %v1038 = vsel %vm1024, %v1035, %v1037
        %v1039 = vshll.u32 %v999, 8
        %v1040 = vmul.u32.u64.compose %v1039, %v1038
        %v1041 = vextract.low.u32 %v1040
        %v1042 = vextract.high.u32 %v1040
        %v1043 = vmul.u32.u64.compose %v1039, %v1034
        %v1044 = vextract.low.u32 %v1043
        %v1045 = vextract.high.u32 %v1043
        %v1046 = vmul.u32 %v1039, %v1030
        %v1047 = vadd.s32 %v1042, %v1044
        %vm1048 = vc.u32 %v1042, %v1044
        %v1049 = vadd.s32 %v1045, 1
        %v1050 = vsel %vm1048, %v1049, %v1045
        %v1051 = vadd.s32 %v1046, %v1050
        %v1052 = vadd.s32 %v1051, 536870912
        %v1053 = vshrl.u32 %v1052, 30
        %v1054 = vshll.u32 %v1053, 30
        %v1055 = vsub.s32 %v1051, %v1054
        %vm1056 = vcmp.lt.s32.totalorder %v1055, 0
        %v1057 = vsub.s32 0, %v1055
        %v1058 = vsel %vm1056, %v1057, %v1055
        %v1059 = vclz %v1058
        %v1060 = vsub.s32 %v1059, 2
        %vm1061 = vcmp.gt.s32.totalorder 0, %v1060
        %v1062 = vsel %vm1061, 0, %v1060
        %v1063 = vsub.s32 32, %v1062
        %v1064 = vshll.u32 %v1055, %v1062
        %v1065 = vshrl.u32 %v1047, %v1063
        %v1066 = vor.u32 %v1064, %v1065
        %v1067 = vsub.s32 4294967266, %v1062
        %v1068 = vadd.s32 %v1067, 127
        %v1069 = vshll.u32 %v1068, 23
        %v1070 = vor.u32 4788187, %v1069
        %v1071 = vand.u32 2147483647, %v1070
        %v1073 = vcvt.s32.f32 %v1066
        %v1074 = vmul.f32 %v1073, %v1071
        %v1075 = vxor.u32 %v1074, 2147483648
        %v1076 = vsel %vm993, %v1075, %v1074
        %v1077 = vsub.s32 4, %v1053
        %v1078 = vsel %vm993, %v1077, %v1053
        %v1079 = vsel %vm992, %v363, %v1076
        %v1080 = vsel %vm992, 0, %v1078
        %v1081 = vcosq.f32.pop %v1079
        %v1082 = vsinq.f32.pop %v1079
        %vm1083 = vweird.f32 %v363
        %v1084 = vand.u32 %v1080, 3
        %vm1085 = vcmp.lt.s32.totalorder %v1084, 2
        %vm1086 = vcmp.eq.s32.totalorder %v1084, 0
        %v1087 = vxor.u32 %v1082, 2147483648
        %v1088 = vsel %vm1086, %v1081, %v1087
        %vm1089 = vcmp.eq.s32.totalorder %v1084, 2
        %v1090 = vxor.u32 %v1081, 2147483648
        %v1091 = vsel %vm1089, %v1090, %v1082
        %v1092 = vsel %vm1085, %v1088, %v1091
        %v1093 = vsel %vm1083, nan, %v1092
        %v1094 = vand.u32 2147483647, %v364
        %vm1095 = vcmp.le.f32.partialorder %v1094, 0.7853982
        %vm1096 = vcmp.lt.s32.totalorder %v364, 0
        %v1097 = vand.u32 %v364, 2139095040
        %v1098 = vshrl.u32 %v1097, 23
        %v1099 = vsub.s32 %v1098, 127
        %v1100 = vand.u32 2147483647, %v364
        %v1101 = vand.u32 %v1100, 8388607
        %v1102 = vor.u32 %v1101, 8388608
        %v1103 = vsub.s32 0, %v1102
        %v1104 = vadd.s32 %v1099, 1
        %vm1105 = vcmp.gt.s32.totalorder %v1104, 0
        %v1106 = vsel %vm1105, %v1104, 0
        %v1107 = vshrl.u32 %v1106, 5
        %v1108 = vand.u32 %v1106, 31
        %v1109 = vsub.s32 32, %v1108
        %v1110 = vshrl.u32 683565275, %v1109
        %v1111 = vshll.u32 683565275, %v1108
        %v1112 = vshrl.u32 2475754826, %v1109
        %v1113 = vor.u32 %v1111, %v1112
        %v1114 = vshll.u32 2475754826, %v1108
        %v1115 = vshrl.u32 2131351028, %v1109
        %v1116 = vor.u32 %v1114, %v1115
        %v1117 = vshll.u32 2131351028, %v1108
        %v1118 = vshrl.u32 2102212464, %v1109
        %v1119 = vor.u32 %v1117, %v1118
        %v1120 = vshll.u32 2102212464, %v1108
        %v1121 = vshrl.u32 920167782, %v1109
        %v1122 = vor.u32 %v1120, %v1121
        %v1123 = vshll.u32 920167782, %v1108
        %v1124 = vshrl.u32 1326507024, %v1109
        %v1125 = vor.u32 %v1123, %v1124
        %vm1126 = vcmp.lt.s32.totalorder %v1107, 1
        %vm1127 = vcmp.lt.s32.totalorder %v1107, 2
        %vm1128 = vcmp.lt.s32.totalorder %v1107, 3
        %vm1129 = vcmp.lt.s32.totalorder %v1107, 4
        %v1130 = vsel %vm1126, %v1110, %v1113
        %v1131 = vsel %vm1129, %v1119, 2102212464
        %v1132 = vsel %vm1128, %v1116, %v1131
        %v1133 = vsel %vm1127, %v1130, %v1132
        %v1134 = vsel %vm1126, %v1113, %v1116
        %v1135 = vsel %vm1129, %v1122, 920167782
        %v1136 = vsel %vm1128, %v1119, %v1135
        %v1137 = vsel %vm1127, %v1134, %v1136
        %v1138 = vsel %vm1126, %v1116, %v1119
        %v1139 = vsel %vm1129, %v1125, 1326507024
        %v1140 = vsel %vm1128, %v1122, %v1139
        %v1141 = vsel %vm1127, %v1138, %v1140
        %v1142 = vshll.u32 %v1102, 8
        %v1143 = vmul.u32.u64.compose %v1142, %v1141
        %v1144 = vextract.low.u32 %v1143
        %v1145 = vextract.high.u32 %v1143
        %v1146 = vmul.u32.u64.compose %v1142, %v1137
        %v1147 = vextract.low.u32 %v1146
        %v1148 = vextract.high.u32 %v1146
        %v1149 = vmul.u32 %v1142, %v1133
        %v1150 = vadd.s32 %v1145, %v1147
        %vm1151 = vc.u32 %v1145, %v1147
        %v1152 = vadd.s32 %v1148, 1
        %v1153 = vsel %vm1151, %v1152, %v1148
        %v1154 = vadd.s32 %v1149, %v1153
        %v1155 = vadd.s32 %v1154, 536870912
        %v1156 = vshrl.u32 %v1155, 30
        %v1157 = vshll.u32 %v1156, 30
        %v1158 = vsub.s32 %v1154, %v1157
        %vm1159 = vcmp.lt.s32.totalorder %v1158, 0
        %v1160 = vsub.s32 0, %v1158
        %v1161 = vsel %vm1159, %v1160, %v1158
        %v1162 = vclz %v1161
        %v1163 = vsub.s32 %v1162, 2
        %vm1164 = vcmp.gt.s32.totalorder 0, %v1163
        %v1165 = vsel %vm1164, 0, %v1163
        %v1166 = vsub.s32 32, %v1165
        %v1167 = vshll.u32 %v1158, %v1165
        %v1168 = vshrl.u32 %v1150, %v1166
        %v1169 = vor.u32 %v1167, %v1168
        %v1170 = vsub.s32 4294967266, %v1165
        %v1171 = vadd.s32 %v1170, 127
        %v1172 = vshll.u32 %v1171, 23
        %v1173 = vor.u32 4788187, %v1172
        %v1174 = vand.u32 2147483647, %v1173
        %v1176 = vcvt.s32.f32 %v1169
        %v1177 = vmul.f32 %v1176, %v1174
        %v1178 = vxor.u32 %v1177, 2147483648
        %v1179 = vsel %vm1096, %v1178, %v1177
        %v1180 = vsub.s32 4, %v1156
        %v1181 = vsel %vm1096, %v1180, %v1156
        %v1182 = vsel %vm1095, %v364, %v1179
        %v1183 = vsel %vm1095, 0, %v1181
        %v1184 = vcosq.f32.pop %v1182
        %v1185 = vsinq.f32.pop %v1182
        %vm1186 = vweird.f32 %v364
        %v1187 = vand.u32 %v1183, 3
        %vm1188 = vcmp.lt.s32.totalorder %v1187, 2
        %vm1189 = vcmp.eq.s32.totalorder %v1187, 0
        %v1190 = vxor.u32 %v1185, 2147483648
        %v1191 = vsel %vm1189, %v1184, %v1190
        %vm1192 = vcmp.eq.s32.totalorder %v1187, 2
        %v1193 = vxor.u32 %v1184, 2147483648
        %v1194 = vsel %vm1192, %v1193, %v1185
        %v1195 = vsel %vm1188, %v1191, %v1194
        %v1196 = vsel %vm1186, nan, %v1195
        %v1197 = vand.u32 2147483647, %v365
        %vm1198 = vcmp.le.f32.partialorder %v1197, 0.7853982
        %vm1199 = vcmp.lt.s32.totalorder %v365, 0
        %v1200 = vand.u32 %v365, 2139095040
        %v1201 = vshrl.u32 %v1200, 23
        %v1202 = vsub.s32 %v1201, 127
        %v1203 = vand.u32 2147483647, %v365
        %v1204 = vand.u32 %v1203, 8388607
        %v1205 = vor.u32 %v1204, 8388608
        %v1206 = vsub.s32 0, %v1205
        %v1207 = vadd.s32 %v1202, 1
        %vm1208 = vcmp.gt.s32.totalorder %v1207, 0
        %v1209 = vsel %vm1208, %v1207, 0
        %v1210 = vshrl.u32 %v1209, 5
        %v1211 = vand.u32 %v1209, 31
        %v1212 = vsub.s32 32, %v1211
        %v1213 = vshrl.u32 683565275, %v1212
        %v1214 = vshll.u32 683565275, %v1211
        %v1215 = vshrl.u32 2475754826, %v1212
        %v1216 = vor.u32 %v1214, %v1215
        %v1217 = vshll.u32 2475754826, %v1211
        %v1218 = vshrl.u32 2131351028, %v1212
        %v1219 = vor.u32 %v1217, %v1218
        %v1220 = vshll.u32 2131351028, %v1211
        %v1221 = vshrl.u32 2102212464, %v1212
        %v1222 = vor.u32 %v1220, %v1221
        %v1223 = vshll.u32 2102212464, %v1211
        %v1224 = vshrl.u32 920167782, %v1212
        %v1225 = vor.u32 %v1223, %v1224
        %v1226 = vshll.u32 920167782, %v1211
        %v1227 = vshrl.u32 1326507024, %v1212
        %v1228 = vor.u32 %v1226, %v1227
        %vm1229 = vcmp.lt.s32.totalorder %v1210, 1
        %vm1230 = vcmp.lt.s32.totalorder %v1210, 2
        %vm1231 = vcmp.lt.s32.totalorder %v1210, 3
        %vm1232 = vcmp.lt.s32.totalorder %v1210, 4
        %v1233 = vsel %vm1229, %v1213, %v1216
        %v1234 = vsel %vm1232, %v1222, 2102212464
        %v1235 = vsel %vm1231, %v1219, %v1234
        %v1236 = vsel %vm1230, %v1233, %v1235
        %v1237 = vsel %vm1229, %v1216, %v1219
        %v1238 = vsel %vm1232, %v1225, 920167782
        %v1239 = vsel %vm1231, %v1222, %v1238
        %v1240 = vsel %vm1230, %v1237, %v1239
        %v1241 = vsel %vm1229, %v1219, %v1222
        %v1242 = vsel %vm1232, %v1228, 1326507024
        %v1243 = vsel %vm1231, %v1225, %v1242
        %v1244 = vsel %vm1230, %v1241, %v1243
        %v1245 = vshll.u32 %v1205, 8
        %v1246 = vmul.u32.u64.compose %v1245, %v1244
        %v1247 = vextract.low.u32 %v1246
        %v1248 = vextract.high.u32 %v1246
        %v1249 = vmul.u32.u64.compose %v1245, %v1240
        %v1250 = vextract.low.u32 %v1249
        %v1251 = vextract.high.u32 %v1249
        %v1252 = vmul.u32 %v1245, %v1236
        %v1253 = vadd.s32 %v1248, %v1250
        %vm1254 = vc.u32 %v1248, %v1250
        %v1255 = vadd.s32 %v1251, 1
        %v1256 = vsel %vm1254, %v1255, %v1251
        %v1257 = vadd.s32 %v1252, %v1256
        %v1258 = vadd.s32 %v1257, 536870912
        %v1259 = vshrl.u32 %v1258, 30
        %v1260 = vshll.u32 %v1259, 30
        %v1261 = vsub.s32 %v1257, %v1260
        %vm1262 = vcmp.lt.s32.totalorder %v1261, 0
        %v1263 = vsub.s32 0, %v1261
        %v1264 = vsel %vm1262, %v1263, %v1261
        %v1265 = vclz %v1264
        %v1266 = vsub.s32 %v1265, 2
        %vm1267 = vcmp.gt.s32.totalorder 0, %v1266
        %v1268 = vsel %vm1267, 0, %v1266
        %v1269 = vsub.s32 32, %v1268
        %v1270 = vshll.u32 %v1261, %v1268
        %v1271 = vshrl.u32 %v1253, %v1269
        %v1272 = vor.u32 %v1270, %v1271
        %v1273 = vsub.s32 4294967266, %v1268
        %v1274 = vadd.s32 %v1273, 127
        %v1275 = vshll.u32 %v1274, 23
        %v1276 = vor.u32 4788187, %v1275
        %v1277 = vand.u32 2147483647, %v1276
        %v1279 = vcvt.s32.f32 %v1272
        %v1280 = vmul.f32 %v1279, %v1277
        %v1281 = vxor.u32 %v1280, 2147483648
        %v1282 = vsel %vm1199, %v1281, %v1280
        %v1283 = vsub.s32 4, %v1259
        %v1284 = vsel %vm1199, %v1283, %v1259
        %v1285 = vsel %vm1198, %v365, %v1282
        %v1286 = vsel %vm1198, 0, %v1284
        %v1287 = vcosq.f32.pop %v1285
        %v1288 = vsinq.f32.pop %v1285
        %vm1289 = vweird.f32 %v365
        %v1290 = vand.u32 %v1286, 3
        %vm1291 = vcmp.lt.s32.totalorder %v1290, 2
        %vm1292 = vcmp.eq.s32.totalorder %v1290, 0
        %v1293 = vxor.u32 %v1288, 2147483648
        %v1294 = vsel %vm1292, %v1287, %v1293
        %vm1295 = vcmp.eq.s32.totalorder %v1290, 2
        %v1296 = vxor.u32 %v1287, 2147483648
        %v1297 = vsel %vm1295, %v1296, %v1288
        %v1298 = vsel %vm1291, %v1294, %v1297
        %v1299 = vsel %vm1289, nan, %v1298
        %v1300 = vand.u32 2147483647, %v366
        %vm1301 = vcmp.le.f32.partialorder %v1300, 0.7853982
        %vm1302 = vcmp.lt.s32.totalorder %v366, 0
        %v1303 = vand.u32 %v366, 2139095040
        %v1304 = vshrl.u32 %v1303, 23
        %v1305 = vsub.s32 %v1304, 127
        %v1306 = vand.u32 2147483647, %v366
        %v1307 = vand.u32 %v1306, 8388607
        %v1308 = vor.u32 %v1307, 8388608
        %v1309 = vsub.s32 0, %v1308
        %v1310 = vadd.s32 %v1305, 1
        %vm1311 = vcmp.gt.s32.totalorder %v1310, 0
        %v1312 = vsel %vm1311, %v1310, 0
        %v1313 = vshrl.u32 %v1312, 5
        %v1314 = vand.u32 %v1312, 31
        %v1315 = vsub.s32 32, %v1314
        %v1316 = vshrl.u32 683565275, %v1315
        %v1317 = vshll.u32 683565275, %v1314
        %v1318 = vshrl.u32 2475754826, %v1315
        %v1319 = vor.u32 %v1317, %v1318
        %v1320 = vshll.u32 2475754826, %v1314
        %v1321 = vshrl.u32 2131351028, %v1315
        %v1322 = vor.u32 %v1320, %v1321
        %v1323 = vshll.u32 2131351028, %v1314
        %v1324 = vshrl.u32 2102212464, %v1315
        %v1325 = vor.u32 %v1323, %v1324
        %v1326 = vshll.u32 2102212464, %v1314
        %v1327 = vshrl.u32 920167782, %v1315
        %v1328 = vor.u32 %v1326, %v1327
        %v1329 = vshll.u32 920167782, %v1314
        %v1330 = vshrl.u32 1326507024, %v1315
        %v1331 = vor.u32 %v1329, %v1330
        %vm1332 = vcmp.lt.s32.totalorder %v1313, 1
        %vm1333 = vcmp.lt.s32.totalorder %v1313, 2
        %vm1334 = vcmp.lt.s32.totalorder %v1313, 3
        %vm1335 = vcmp.lt.s32.totalorder %v1313, 4
        %v1336 = vsel %vm1332, %v1316, %v1319
        %v1337 = vsel %vm1335, %v1325, 2102212464
        %v1338 = vsel %vm1334, %v1322, %v1337
        %v1339 = vsel %vm1333, %v1336, %v1338
        %v1340 = vsel %vm1332, %v1319, %v1322
        %v1341 = vsel %vm1335, %v1328, 920167782
        %v1342 = vsel %vm1334, %v1325, %v1341
        %v1343 = vsel %vm1333, %v1340, %v1342
        %v1344 = vsel %vm1332, %v1322, %v1325
        %v1345 = vsel %vm1335, %v1331, 1326507024
        %v1346 = vsel %vm1334, %v1328, %v1345
        %v1347 = vsel %vm1333, %v1344, %v1346
        %v1348 = vshll.u32 %v1308, 8
        %v1349 = vmul.u32.u64.compose %v1348, %v1347
        %v1350 = vextract.low.u32 %v1349
        %v1351 = vextract.high.u32 %v1349
        %v1352 = vmul.u32.u64.compose %v1348, %v1343
        %v1353 = vextract.low.u32 %v1352
        %v1354 = vextract.high.u32 %v1352
        %v1355 = vmul.u32 %v1348, %v1339
        %v1356 = vadd.s32 %v1351, %v1353
        %vm1357 = vc.u32 %v1351, %v1353
        %v1358 = vadd.s32 %v1354, 1
        %v1359 = vsel %vm1357, %v1358, %v1354
        %v1360 = vadd.s32 %v1355, %v1359
        %v1361 = vadd.s32 %v1360, 536870912
        %v1362 = vshrl.u32 %v1361, 30
        %v1363 = vshll.u32 %v1362, 30
        %v1364 = vsub.s32 %v1360, %v1363
        %vm1365 = vcmp.lt.s32.totalorder %v1364, 0
        %v1366 = vsub.s32 0, %v1364
        %v1367 = vsel %vm1365, %v1366, %v1364
        %v1368 = vclz %v1367
        %v1369 = vsub.s32 %v1368, 2
        %vm1370 = vcmp.gt.s32.totalorder 0, %v1369
        %v1371 = vsel %vm1370, 0, %v1369
        %v1372 = vsub.s32 32, %v1371
        %v1373 = vshll.u32 %v1364, %v1371
        %v1374 = vshrl.u32 %v1356, %v1372
        %v1375 = vor.u32 %v1373, %v1374
        %v1376 = vsub.s32 4294967266, %v1371
        %v1377 = vadd.s32 %v1376, 127
        %v1378 = vshll.u32 %v1377, 23
        %v1379 = vor.u32 4788187, %v1378
        %v1380 = vand.u32 2147483647, %v1379
        %v1382 = vcvt.s32.f32 %v1375
        %v1383 = vmul.f32 %v1382, %v1380
        %v1384 = vxor.u32 %v1383, 2147483648
        %v1385 = vsel %vm1302, %v1384, %v1383
        %v1386 = vsub.s32 4, %v1362
        %v1387 = vsel %vm1302, %v1386, %v1362
        %v1388 = vsel %vm1301, %v366, %v1385
        %v1389 = vsel %vm1301, 0, %v1387
        %v1390 = vcosq.f32.pop %v1388
        %v1391 = vsinq.f32.pop %v1388
        %vm1392 = vweird.f32 %v366
        %v1393 = vand.u32 %v1389, 3
        %vm1394 = vcmp.lt.s32.totalorder %v1393, 2
        %vm1395 = vcmp.eq.s32.totalorder %v1393, 0
        %v1396 = vxor.u32 %v1391, 2147483648
        %v1397 = vsel %vm1395, %v1390, %v1396
        %vm1398 = vcmp.eq.s32.totalorder %v1393, 2
        %v1399 = vxor.u32 %v1390, 2147483648
        %v1400 = vsel %vm1398, %v1399, %v1391
        %v1401 = vsel %vm1394, %v1397, %v1400
        %v1402 = vsel %vm1392, nan, %v1401
        %v1403 = vand.u32 2147483647, %v367
        %vm1404 = vcmp.le.f32.partialorder %v1403, 0.7853982
        %vm1405 = vcmp.lt.s32.totalorder %v367, 0
        %v1406 = vand.u32 %v367, 2139095040
        %v1407 = vshrl.u32 %v1406, 23
        %v1408 = vsub.s32 %v1407, 127
        %v1409 = vand.u32 2147483647, %v367
        %v1410 = vand.u32 %v1409, 8388607
        %v1411 = vor.u32 %v1410, 8388608
        %v1412 = vsub.s32 0, %v1411
        %v1413 = vadd.s32 %v1408, 1
        %vm1414 = vcmp.gt.s32.totalorder %v1413, 0
        %v1415 = vsel %vm1414, %v1413, 0
        %v1416 = vshrl.u32 %v1415, 5
        %v1417 = vand.u32 %v1415, 31
        %v1418 = vsub.s32 32, %v1417
        %v1419 = vshrl.u32 683565275, %v1418
        %v1420 = vshll.u32 683565275, %v1417
        %v1421 = vshrl.u32 2475754826, %v1418
        %v1422 = vor.u32 %v1420, %v1421
        %v1423 = vshll.u32 2475754826, %v1417
        %v1424 = vshrl.u32 2131351028, %v1418
        %v1425 = vor.u32 %v1423, %v1424
        %v1426 = vshll.u32 2131351028, %v1417
        %v1427 = vshrl.u32 2102212464, %v1418
        %v1428 = vor.u32 %v1426, %v1427
        %v1429 = vshll.u32 2102212464, %v1417
        %v1430 = vshrl.u32 920167782, %v1418
        %v1431 = vor.u32 %v1429, %v1430
        %v1432 = vshll.u32 920167782, %v1417
        %v1433 = vshrl.u32 1326507024, %v1418
        %v1434 = vor.u32 %v1432, %v1433
        %vm1435 = vcmp.lt.s32.totalorder %v1416, 1
        %vm1436 = vcmp.lt.s32.totalorder %v1416, 2
        %vm1437 = vcmp.lt.s32.totalorder %v1416, 3
        %vm1438 = vcmp.lt.s32.totalorder %v1416, 4
        %v1439 = vsel %vm1435, %v1419, %v1422
        %v1440 = vsel %vm1438, %v1428, 2102212464
        %v1441 = vsel %vm1437, %v1425, %v1440
        %v1442 = vsel %vm1436, %v1439, %v1441
        %v1443 = vsel %vm1435, %v1422, %v1425
        %v1444 = vsel %vm1438, %v1431, 920167782
        %v1445 = vsel %vm1437, %v1428, %v1444
        %v1446 = vsel %vm1436, %v1443, %v1445
        %v1447 = vsel %vm1435, %v1425, %v1428
        %v1448 = vsel %vm1438, %v1434, 1326507024
        %v1449 = vsel %vm1437, %v1431, %v1448
        %v1450 = vsel %vm1436, %v1447, %v1449
        %v1451 = vshll.u32 %v1411, 8
        %v1452 = vmul.u32.u64.compose %v1451, %v1450
        %v1453 = vextract.low.u32 %v1452
        %v1454 = vextract.high.u32 %v1452
        %v1455 = vmul.u32.u64.compose %v1451, %v1446
        %v1456 = vextract.low.u32 %v1455
        %v1457 = vextract.high.u32 %v1455
        %v1458 = vmul.u32 %v1451, %v1442
        %v1459 = vadd.s32 %v1454, %v1456
        %vm1460 = vc.u32 %v1454, %v1456
        %v1461 = vadd.s32 %v1457, 1
        %v1462 = vsel %vm1460, %v1461, %v1457
        %v1463 = vadd.s32 %v1458, %v1462
        %v1464 = vadd.s32 %v1463, 536870912
        %v1465 = vshrl.u32 %v1464, 30
        %v1466 = vshll.u32 %v1465, 30
        %v1467 = vsub.s32 %v1463, %v1466
        %vm1468 = vcmp.lt.s32.totalorder %v1467, 0
        %v1469 = vsub.s32 0, %v1467
        %v1470 = vsel %vm1468, %v1469, %v1467
        %v1471 = vclz %v1470
        %v1472 = vsub.s32 %v1471, 2
        %vm1473 = vcmp.gt.s32.totalorder 0, %v1472
        %v1474 = vsel %vm1473, 0, %v1472
        %v1475 = vsub.s32 32, %v1474
        %v1476 = vshll.u32 %v1467, %v1474
        %v1477 = vshrl.u32 %v1459, %v1475
        %v1478 = vor.u32 %v1476, %v1477
        %v1479 = vsub.s32 4294967266, %v1474
        %v1480 = vadd.s32 %v1479, 127
        %v1481 = vshll.u32 %v1480, 23
        %v1482 = vor.u32 4788187, %v1481
        %v1483 = vand.u32 2147483647, %v1482
        %v1485 = vcvt.s32.f32 %v1478
        %v1486 = vmul.f32 %v1485, %v1483
        %v1487 = vxor.u32 %v1486, 2147483648
        %v1488 = vsel %vm1405, %v1487, %v1486
        %v1489 = vsub.s32 4, %v1465
        %v1490 = vsel %vm1405, %v1489, %v1465
        %v1491 = vsel %vm1404, %v367, %v1488
        %v1492 = vsel %vm1404, 0, %v1490
        %v1493 = vcosq.f32.pop %v1491
        %v1494 = vsinq.f32.pop %v1491
        %vm1495 = vweird.f32 %v367
        %v1496 = vand.u32 %v1492, 3
        %vm1497 = vcmp.lt.s32.totalorder %v1496, 2
        %vm1498 = vcmp.eq.s32.totalorder %v1496, 0
        %v1499 = vxor.u32 %v1494, 2147483648
        %v1500 = vsel %vm1498, %v1493, %v1499
        %vm1501 = vcmp.eq.s32.totalorder %v1496, 2
        %v1502 = vxor.u32 %v1493, 2147483648
        %v1503 = vsel %vm1501, %v1502, %v1494
        %v1504 = vsel %vm1497, %v1500, %v1503
        %v1505 = vsel %vm1495, nan, %v1504
        %v1506 = vand.u32 2147483647, %v368
        %vm1507 = vcmp.le.f32.partialorder %v1506, 0.7853982
        %vm1508 = vcmp.lt.s32.totalorder %v368, 0
        %v1509 = vand.u32 %v368, 2139095040
        %v1510 = vshrl.u32 %v1509, 23
        %v1511 = vsub.s32 %v1510, 127
        %v1512 = vand.u32 2147483647, %v368
        %v1513 = vand.u32 %v1512, 8388607
        %v1514 = vor.u32 %v1513, 8388608
        %v1515 = vsub.s32 0, %v1514
        %v1516 = vadd.s32 %v1511, 1
        %vm1517 = vcmp.gt.s32.totalorder %v1516, 0
        %v1518 = vsel %vm1517, %v1516, 0
        %v1519 = vshrl.u32 %v1518, 5
        %v1520 = vand.u32 %v1518, 31
        %v1521 = vsub.s32 32, %v1520
        %v1522 = vshrl.u32 683565275, %v1521
        %v1523 = vshll.u32 683565275, %v1520
        %v1524 = vshrl.u32 2475754826, %v1521
        %v1525 = vor.u32 %v1523, %v1524
        %v1526 = vshll.u32 2475754826, %v1520
        %v1527 = vshrl.u32 2131351028, %v1521
        %v1528 = vor.u32 %v1526, %v1527
        %v1529 = vshll.u32 2131351028, %v1520
        %v1530 = vshrl.u32 2102212464, %v1521
        %v1531 = vor.u32 %v1529, %v1530
        %v1532 = vshll.u32 2102212464, %v1520
        %v1533 = vshrl.u32 920167782, %v1521
        %v1534 = vor.u32 %v1532, %v1533
        %v1535 = vshll.u32 920167782, %v1520
        %v1536 = vshrl.u32 1326507024, %v1521
        %v1537 = vor.u32 %v1535, %v1536
        %vm1538 = vcmp.lt.s32.totalorder %v1519, 1
        %vm1539 = vcmp.lt.s32.totalorder %v1519, 2
        %vm1540 = vcmp.lt.s32.totalorder %v1519, 3
        %vm1541 = vcmp.lt.s32.totalorder %v1519, 4
        %v1542 = vsel %vm1538, %v1522, %v1525
        %v1543 = vsel %vm1541, %v1531, 2102212464
        %v1544 = vsel %vm1540, %v1528, %v1543
        %v1545 = vsel %vm1539, %v1542, %v1544
        %v1546 = vsel %vm1538, %v1525, %v1528
        %v1547 = vsel %vm1541, %v1534, 920167782
        %v1548 = vsel %vm1540, %v1531, %v1547
        %v1549 = vsel %vm1539, %v1546, %v1548
        %v1550 = vsel %vm1538, %v1528, %v1531
        %v1551 = vsel %vm1541, %v1537, 1326507024
        %v1552 = vsel %vm1540, %v1534, %v1551
        %v1553 = vsel %vm1539, %v1550, %v1552
        %v1554 = vshll.u32 %v1514, 8
        %v1555 = vmul.u32.u64.compose %v1554, %v1553
        %v1556 = vextract.low.u32 %v1555
        %v1557 = vextract.high.u32 %v1555
        %v1558 = vmul.u32.u64.compose %v1554, %v1549
        %v1559 = vextract.low.u32 %v1558
        %v1560 = vextract.high.u32 %v1558
        %v1561 = vmul.u32 %v1554, %v1545
        %v1562 = vadd.s32 %v1557, %v1559
        %vm1563 = vc.u32 %v1557, %v1559
        %v1564 = vadd.s32 %v1560, 1
        %v1565 = vsel %vm1563, %v1564, %v1560
        %v1566 = vadd.s32 %v1561, %v1565
        %v1567 = vadd.s32 %v1566, 536870912
        %v1568 = vshrl.u32 %v1567, 30
        %v1569 = vshll.u32 %v1568, 30
        %v1570 = vsub.s32 %v1566, %v1569
        %vm1571 = vcmp.lt.s32.totalorder %v1570, 0
        %v1572 = vsub.s32 0, %v1570
        %v1573 = vsel %vm1571, %v1572, %v1570
        %v1574 = vclz %v1573
        %v1575 = vsub.s32 %v1574, 2
        %vm1576 = vcmp.gt.s32.totalorder 0, %v1575
        %v1577 = vsel %vm1576, 0, %v1575
        %v1578 = vsub.s32 32, %v1577
        %v1579 = vshll.u32 %v1570, %v1577
        %v1580 = vshrl.u32 %v1562, %v1578
        %v1581 = vor.u32 %v1579, %v1580
        %v1582 = vsub.s32 4294967266, %v1577
        %v1583 = vadd.s32 %v1582, 127
        %v1584 = vshll.u32 %v1583, 23
        %v1585 = vor.u32 4788187, %v1584
        %v1586 = vand.u32 2147483647, %v1585
        %v1588 = vcvt.s32.f32 %v1581
        %v1589 = vmul.f32 %v1588, %v1586
        %v1590 = vxor.u32 %v1589, 2147483648
        %v1591 = vsel %vm1508, %v1590, %v1589
        %v1592 = vsub.s32 4, %v1568
        %v1593 = vsel %vm1508, %v1592, %v1568
        %v1594 = vsel %vm1507, %v368, %v1591
        %v1595 = vsel %vm1507, 0, %v1593
        %v1596 = vcosq.f32.pop %v1594
        %v1597 = vsinq.f32.pop %v1594
        %vm1598 = vweird.f32 %v368
        %v1599 = vand.u32 %v1595, 3
        %vm1600 = vcmp.lt.s32.totalorder %v1599, 2
        %vm1601 = vcmp.eq.s32.totalorder %v1599, 0
        %v1602 = vxor.u32 %v1597, 2147483648
        %v1603 = vsel %vm1601, %v1596, %v1602
        %vm1604 = vcmp.eq.s32.totalorder %v1599, 2
        %v1605 = vxor.u32 %v1596, 2147483648
        %v1606 = vsel %vm1604, %v1605, %v1597
        %v1607 = vsel %vm1600, %v1603, %v1606
        %v1608 = vsel %vm1598, nan, %v1607
        %v1609 = vand.u32 2147483647, %v369
        %vm1610 = vcmp.le.f32.partialorder %v1609, 0.7853982
        %vm1611 = vcmp.lt.s32.totalorder %v369, 0
        %v1612 = vand.u32 %v369, 2139095040
        %v1613 = vshrl.u32 %v1612, 23
        %v1614 = vsub.s32 %v1613, 127
        %v1615 = vand.u32 2147483647, %v369
        %v1616 = vand.u32 %v1615, 8388607
        %v1617 = vor.u32 %v1616, 8388608
        %v1618 = vsub.s32 0, %v1617
        %v1619 = vadd.s32 %v1614, 1
        %vm1620 = vcmp.gt.s32.totalorder %v1619, 0
        %v1621 = vsel %vm1620, %v1619, 0
        %v1622 = vshrl.u32 %v1621, 5
        %v1623 = vand.u32 %v1621, 31
        %v1624 = vsub.s32 32, %v1623
        %v1625 = vshrl.u32 683565275, %v1624
        %v1626 = vshll.u32 683565275, %v1623
        %v1627 = vshrl.u32 2475754826, %v1624
        %v1628 = vor.u32 %v1626, %v1627
        %v1629 = vshll.u32 2475754826, %v1623
        %v1630 = vshrl.u32 2131351028, %v1624
        %v1631 = vor.u32 %v1629, %v1630
        %v1632 = vshll.u32 2131351028, %v1623
        %v1633 = vshrl.u32 2102212464, %v1624
        %v1634 = vor.u32 %v1632, %v1633
        %v1635 = vshll.u32 2102212464, %v1623
        %v1636 = vshrl.u32 920167782, %v1624
        %v1637 = vor.u32 %v1635, %v1636
        %v1638 = vshll.u32 920167782, %v1623
        %v1639 = vshrl.u32 1326507024, %v1624
        %v1640 = vor.u32 %v1638, %v1639
        %vm1641 = vcmp.lt.s32.totalorder %v1622, 1
        %vm1642 = vcmp.lt.s32.totalorder %v1622, 2
        %vm1643 = vcmp.lt.s32.totalorder %v1622, 3
        %vm1644 = vcmp.lt.s32.totalorder %v1622, 4
        %v1645 = vsel %vm1641, %v1625, %v1628
        %v1646 = vsel %vm1644, %v1634, 2102212464
        %v1647 = vsel %vm1643, %v1631, %v1646
        %v1648 = vsel %vm1642, %v1645, %v1647
        %v1649 = vsel %vm1641, %v1628, %v1631
        %v1650 = vsel %vm1644, %v1637, 920167782
        %v1651 = vsel %vm1643, %v1634, %v1650
        %v1652 = vsel %vm1642, %v1649, %v1651
        %v1653 = vsel %vm1641, %v1631, %v1634
        %v1654 = vsel %vm1644, %v1640, 1326507024
        %v1655 = vsel %vm1643, %v1637, %v1654
        %v1656 = vsel %vm1642, %v1653, %v1655
        %v1657 = vshll.u32 %v1617, 8
        %v1658 = vmul.u32.u64.compose %v1657, %v1656
        %v1659 = vextract.low.u32 %v1658
        %v1660 = vextract.high.u32 %v1658
        %v1661 = vmul.u32.u64.compose %v1657, %v1652
        %v1662 = vextract.low.u32 %v1661
        %v1663 = vextract.high.u32 %v1661
        %v1664 = vmul.u32 %v1657, %v1648
        %v1665 = vadd.s32 %v1660, %v1662
        %vm1666 = vc.u32 %v1660, %v1662
        %v1667 = vadd.s32 %v1663, 1
        %v1668 = vsel %vm1666, %v1667, %v1663
        %v1669 = vadd.s32 %v1664, %v1668
        %v1670 = vadd.s32 %v1669, 536870912
        %v1671 = vshrl.u32 %v1670, 30
        %v1672 = vshll.u32 %v1671, 30
        %v1673 = vsub.s32 %v1669, %v1672
        %vm1674 = vcmp.lt.s32.totalorder %v1673, 0
        %v1675 = vsub.s32 0, %v1673
        %v1676 = vsel %vm1674, %v1675, %v1673
        %v1677 = vclz %v1676
        %v1678 = vsub.s32 %v1677, 2
        %vm1679 = vcmp.gt.s32.totalorder 0, %v1678
        %v1680 = vsel %vm1679, 0, %v1678
        %v1681 = vsub.s32 32, %v1680
        %v1682 = vshll.u32 %v1673, %v1680
        %v1683 = vshrl.u32 %v1665, %v1681
        %v1684 = vor.u32 %v1682, %v1683
        %v1685 = vsub.s32 4294967266, %v1680
        %v1686 = vadd.s32 %v1685, 127
        %v1687 = vshll.u32 %v1686, 23
        %v1688 = vor.u32 4788187, %v1687
        %v1689 = vand.u32 2147483647, %v1688
        %v1691 = vcvt.s32.f32 %v1684
        %v1692 = vmul.f32 %v1691, %v1689
        %v1693 = vxor.u32 %v1692, 2147483648
        %v1694 = vsel %vm1611, %v1693, %v1692
        %v1695 = vsub.s32 4, %v1671
        %v1696 = vsel %vm1611, %v1695, %v1671
        %v1697 = vsel %vm1610, %v369, %v1694
        %v1698 = vsel %vm1610, 0, %v1696
        %v1699 = vcosq.f32.pop %v1697
        %v1700 = vsinq.f32.pop %v1697
        %vm1701 = vweird.f32 %v369
        %v1702 = vand.u32 %v1698, 3
        %vm1703 = vcmp.lt.s32.totalorder %v1702, 2
        %vm1704 = vcmp.eq.s32.totalorder %v1702, 0
        %v1705 = vxor.u32 %v1700, 2147483648
        %v1706 = vsel %vm1704, %v1699, %v1705
        %vm1707 = vcmp.eq.s32.totalorder %v1702, 2
        %v1708 = vxor.u32 %v1699, 2147483648
        %v1709 = vsel %vm1707, %v1708, %v1700
        %v1710 = vsel %vm1703, %v1706, %v1709
        %v1711 = vsel %vm1701, nan, %v1710
        %v1712 = vand.u32 2147483647, %v370
        %vm1713 = vcmp.le.f32.partialorder %v1712, 0.7853982
        %vm1714 = vcmp.lt.s32.totalorder %v370, 0
        %v1715 = vand.u32 %v370, 2139095040
        %v1716 = vshrl.u32 %v1715, 23
        %v1717 = vsub.s32 %v1716, 127
        %v1718 = vand.u32 2147483647, %v370
        %v1719 = vand.u32 %v1718, 8388607
        %v1720 = vor.u32 %v1719, 8388608
        %v1721 = vsub.s32 0, %v1720
        %v1722 = vadd.s32 %v1717, 1
        %vm1723 = vcmp.gt.s32.totalorder %v1722, 0
        %v1724 = vsel %vm1723, %v1722, 0
        %v1725 = vshrl.u32 %v1724, 5
        %v1726 = vand.u32 %v1724, 31
        %v1727 = vsub.s32 32, %v1726
        %v1728 = vshrl.u32 683565275, %v1727
        %v1729 = vshll.u32 683565275, %v1726
        %v1730 = vshrl.u32 2475754826, %v1727
        %v1731 = vor.u32 %v1729, %v1730
        %v1732 = vshll.u32 2475754826, %v1726
        %v1733 = vshrl.u32 2131351028, %v1727
        %v1734 = vor.u32 %v1732, %v1733
        %v1735 = vshll.u32 2131351028, %v1726
        %v1736 = vshrl.u32 2102212464, %v1727
        %v1737 = vor.u32 %v1735, %v1736
        %v1738 = vshll.u32 2102212464, %v1726
        %v1739 = vshrl.u32 920167782, %v1727
        %v1740 = vor.u32 %v1738, %v1739
        %v1741 = vshll.u32 920167782, %v1726
        %v1742 = vshrl.u32 1326507024, %v1727
        %v1743 = vor.u32 %v1741, %v1742
        %vm1744 = vcmp.lt.s32.totalorder %v1725, 1
        %vm1745 = vcmp.lt.s32.totalorder %v1725, 2
        %vm1746 = vcmp.lt.s32.totalorder %v1725, 3
        %vm1747 = vcmp.lt.s32.totalorder %v1725, 4
        %v1748 = vsel %vm1744, %v1728, %v1731
        %v1749 = vsel %vm1747, %v1737, 2102212464
        %v1750 = vsel %vm1746, %v1734, %v1749
        %v1751 = vsel %vm1745, %v1748, %v1750
        %v1752 = vsel %vm1744, %v1731, %v1734
        %v1753 = vsel %vm1747, %v1740, 920167782
        %v1754 = vsel %vm1746, %v1737, %v1753
        %v1755 = vsel %vm1745, %v1752, %v1754
        %v1756 = vsel %vm1744, %v1734, %v1737
        %v1757 = vsel %vm1747, %v1743, 1326507024
        %v1758 = vsel %vm1746, %v1740, %v1757
        %v1759 = vsel %vm1745, %v1756, %v1758
        %v1760 = vshll.u32 %v1720, 8
        %v1761 = vmul.u32.u64.compose %v1760, %v1759
        %v1762 = vextract.low.u32 %v1761
        %v1763 = vextract.high.u32 %v1761
        %v1764 = vmul.u32.u64.compose %v1760, %v1755
        %v1765 = vextract.low.u32 %v1764
        %v1766 = vextract.high.u32 %v1764
        %v1767 = vmul.u32 %v1760, %v1751
        %v1768 = vadd.s32 %v1763, %v1765
        %vm1769 = vc.u32 %v1763, %v1765
        %v1770 = vadd.s32 %v1766, 1
        %v1771 = vsel %vm1769, %v1770, %v1766
        %v1772 = vadd.s32 %v1767, %v1771
        %v1773 = vadd.s32 %v1772, 536870912
        %v1774 = vshrl.u32 %v1773, 30
        %v1775 = vshll.u32 %v1774, 30
        %v1776 = vsub.s32 %v1772, %v1775
        %vm1777 = vcmp.lt.s32.totalorder %v1776, 0
        %v1778 = vsub.s32 0, %v1776
        %v1779 = vsel %vm1777, %v1778, %v1776
        %v1780 = vclz %v1779
        %v1781 = vsub.s32 %v1780, 2
        %vm1782 = vcmp.gt.s32.totalorder 0, %v1781
        %v1783 = vsel %vm1782, 0, %v1781
        %v1784 = vsub.s32 32, %v1783
        %v1785 = vshll.u32 %v1776, %v1783
        %v1786 = vshrl.u32 %v1768, %v1784
        %v1787 = vor.u32 %v1785, %v1786
        %v1788 = vsub.s32 4294967266, %v1783
        %v1789 = vadd.s32 %v1788, 127
        %v1790 = vshll.u32 %v1789, 23
        %v1791 = vor.u32 4788187, %v1790
        %v1792 = vand.u32 2147483647, %v1791
        %v1794 = vcvt.s32.f32 %v1787
        %v1795 = vmul.f32 %v1794, %v1792
        %v1796 = vxor.u32 %v1795, 2147483648
        %v1797 = vsel %vm1714, %v1796, %v1795
        %v1798 = vsub.s32 4, %v1774
        %v1799 = vsel %vm1714, %v1798, %v1774
        %v1800 = vsel %vm1713, %v370, %v1797
        %v1801 = vsel %vm1713, 0, %v1799
        %v1802 = vcosq.f32.pop %v1800
        %v1803 = vsinq.f32.pop %v1800
        %vm1804 = vweird.f32 %v370
        %v1805 = vand.u32 %v1801, 3
        %vm1806 = vcmp.lt.s32.totalorder %v1805, 2
        %vm1807 = vcmp.eq.s32.totalorder %v1805, 0
        %v1808 = vxor.u32 %v1803, 2147483648
        %v1809 = vsel %vm1807, %v1802, %v1808
        %vm1810 = vcmp.eq.s32.totalorder %v1805, 2
        %v1811 = vxor.u32 %v1802, 2147483648
        %v1812 = vsel %vm1810, %v1811, %v1803
        %v1813 = vsel %vm1806, %v1809, %v1812
        %v1814 = vsel %vm1804, nan, %v1813
        %v1815 = vand.u32 2147483647, %v371
        %vm1816 = vcmp.le.f32.partialorder %v1815, 0.7853982
        %vm1817 = vcmp.lt.s32.totalorder %v371, 0
        %v1818 = vand.u32 %v371, 2139095040
        %v1819 = vshrl.u32 %v1818, 23
        %v1820 = vsub.s32 %v1819, 127
        %v1821 = vand.u32 2147483647, %v371
        %v1822 = vand.u32 %v1821, 8388607
        %v1823 = vor.u32 %v1822, 8388608
        %v1824 = vsub.s32 0, %v1823
        %v1825 = vadd.s32 %v1820, 1
        %vm1826 = vcmp.gt.s32.totalorder %v1825, 0
        %v1827 = vsel %vm1826, %v1825, 0
        %v1828 = vshrl.u32 %v1827, 5
        %v1829 = vand.u32 %v1827, 31
        %v1830 = vsub.s32 32, %v1829
        %v1831 = vshrl.u32 683565275, %v1830
        %v1832 = vshll.u32 683565275, %v1829
        %v1833 = vshrl.u32 2475754826, %v1830
        %v1834 = vor.u32 %v1832, %v1833
        %v1835 = vshll.u32 2475754826, %v1829
        %v1836 = vshrl.u32 2131351028, %v1830
        %v1837 = vor.u32 %v1835, %v1836
        %v1838 = vshll.u32 2131351028, %v1829
        %v1839 = vshrl.u32 2102212464, %v1830
        %v1840 = vor.u32 %v1838, %v1839
        %v1841 = vshll.u32 2102212464, %v1829
        %v1842 = vshrl.u32 920167782, %v1830
        %v1843 = vor.u32 %v1841, %v1842
        %v1844 = vshll.u32 920167782, %v1829
        %v1845 = vshrl.u32 1326507024, %v1830
        %v1846 = vor.u32 %v1844, %v1845
        %vm1847 = vcmp.lt.s32.totalorder %v1828, 1
        %vm1848 = vcmp.lt.s32.totalorder %v1828, 2
        %vm1849 = vcmp.lt.s32.totalorder %v1828, 3
        %vm1850 = vcmp.lt.s32.totalorder %v1828, 4
        %v1851 = vsel %vm1847, %v1831, %v1834
        %v1852 = vsel %vm1850, %v1840, 2102212464
        %v1853 = vsel %vm1849, %v1837, %v1852
        %v1854 = vsel %vm1848, %v1851, %v1853
        %v1855 = vsel %vm1847, %v1834, %v1837
        %v1856 = vsel %vm1850, %v1843, 920167782
        %v1857 = vsel %vm1849, %v1840, %v1856
        %v1858 = vsel %vm1848, %v1855, %v1857
        %v1859 = vsel %vm1847, %v1837, %v1840
        %v1860 = vsel %vm1850, %v1846, 1326507024
        %v1861 = vsel %vm1849, %v1843, %v1860
        %v1862 = vsel %vm1848, %v1859, %v1861
        %v1863 = vshll.u32 %v1823, 8
        %v1864 = vmul.u32.u64.compose %v1863, %v1862
        %v1865 = vextract.low.u32 %v1864
        %v1866 = vextract.high.u32 %v1864
        %v1867 = vmul.u32.u64.compose %v1863, %v1858
        %v1868 = vextract.low.u32 %v1867
        %v1869 = vextract.high.u32 %v1867
        %v1870 = vmul.u32 %v1863, %v1854
        %v1871 = vadd.s32 %v1866, %v1868
        %vm1872 = vc.u32 %v1866, %v1868
        %v1873 = vadd.s32 %v1869, 1
        %v1874 = vsel %vm1872, %v1873, %v1869
        %v1875 = vadd.s32 %v1870, %v1874
        %v1876 = vadd.s32 %v1875, 536870912
        %v1877 = vshrl.u32 %v1876, 30
        %v1878 = vshll.u32 %v1877, 30
        %v1879 = vsub.s32 %v1875, %v1878
        %vm1880 = vcmp.lt.s32.totalorder %v1879, 0
        %v1881 = vsub.s32 0, %v1879
        %v1882 = vsel %vm1880, %v1881, %v1879
        %v1883 = vclz %v1882
        %v1884 = vsub.s32 %v1883, 2
        %vm1885 = vcmp.gt.s32.totalorder 0, %v1884
        %v1886 = vsel %vm1885, 0, %v1884
        %v1887 = vsub.s32 32, %v1886
        %v1888 = vshll.u32 %v1879, %v1886
        %v1889 = vshrl.u32 %v1871, %v1887
        %v1890 = vor.u32 %v1888, %v1889
        %v1891 = vsub.s32 4294967266, %v1886
        %v1892 = vadd.s32 %v1891, 127
        %v1893 = vshll.u32 %v1892, 23
        %v1894 = vor.u32 4788187, %v1893
        %v1895 = vand.u32 2147483647, %v1894
        %v1897 = vcvt.s32.f32 %v1890
        %v1898 = vmul.f32 %v1897, %v1895
        %v1899 = vxor.u32 %v1898, 2147483648
        %v1900 = vsel %vm1817, %v1899, %v1898
        %v1901 = vsub.s32 4, %v1877
        %v1902 = vsel %vm1817, %v1901, %v1877
        %v1903 = vsel %vm1816, %v371, %v1900
        %v1904 = vsel %vm1816, 0, %v1902
        %v1905 = vcosq.f32.pop %v1903
        %v1906 = vsinq.f32.pop %v1903
        %vm1907 = vweird.f32 %v371
        %v1908 = vand.u32 %v1904, 3
        %vm1909 = vcmp.lt.s32.totalorder %v1908, 2
        %vm1910 = vcmp.eq.s32.totalorder %v1908, 0
        %v1911 = vxor.u32 %v1906, 2147483648
        %v1912 = vsel %vm1910, %v1905, %v1911
        %vm1913 = vcmp.eq.s32.totalorder %v1908, 2
        %v1914 = vxor.u32 %v1905, 2147483648
        %v1915 = vsel %vm1913, %v1914, %v1906
        %v1916 = vsel %vm1909, %v1912, %v1915
        %v1917 = vsel %vm1907, nan, %v1916
        %v1918 = vand.u32 2147483647, %v372
        %vm1919 = vcmp.le.f32.partialorder %v1918, 0.7853982
        %vm1920 = vcmp.lt.s32.totalorder %v372, 0
        %v1921 = vand.u32 %v372, 2139095040
        %v1922 = vshrl.u32 %v1921, 23
        %v1923 = vsub.s32 %v1922, 127
        %v1924 = vand.u32 2147483647, %v372
        %v1925 = vand.u32 %v1924, 8388607
        %v1926 = vor.u32 %v1925, 8388608
        %v1927 = vsub.s32 0, %v1926
        %v1928 = vadd.s32 %v1923, 1
        %vm1929 = vcmp.gt.s32.totalorder %v1928, 0
        %v1930 = vsel %vm1929, %v1928, 0
        %v1931 = vshrl.u32 %v1930, 5
        %v1932 = vand.u32 %v1930, 31
        %v1933 = vsub.s32 32, %v1932
        %v1934 = vshrl.u32 683565275, %v1933
        %v1935 = vshll.u32 683565275, %v1932
        %v1936 = vshrl.u32 2475754826, %v1933
        %v1937 = vor.u32 %v1935, %v1936
        %v1938 = vshll.u32 2475754826, %v1932
        %v1939 = vshrl.u32 2131351028, %v1933
        %v1940 = vor.u32 %v1938, %v1939
        %v1941 = vshll.u32 2131351028, %v1932
        %v1942 = vshrl.u32 2102212464, %v1933
        %v1943 = vor.u32 %v1941, %v1942
        %v1944 = vshll.u32 2102212464, %v1932
        %v1945 = vshrl.u32 920167782, %v1933
        %v1946 = vor.u32 %v1944, %v1945
        %v1947 = vshll.u32 920167782, %v1932
        %v1948 = vshrl.u32 1326507024, %v1933
        %v1949 = vor.u32 %v1947, %v1948
        %vm1950 = vcmp.lt.s32.totalorder %v1931, 1
        %vm1951 = vcmp.lt.s32.totalorder %v1931, 2
        %vm1952 = vcmp.lt.s32.totalorder %v1931, 3
        %vm1953 = vcmp.lt.s32.totalorder %v1931, 4
        %v1954 = vsel %vm1950, %v1934, %v1937
        %v1955 = vsel %vm1953, %v1943, 2102212464
        %v1956 = vsel %vm1952, %v1940, %v1955
        %v1957 = vsel %vm1951, %v1954, %v1956
        %v1958 = vsel %vm1950, %v1937, %v1940
        %v1959 = vsel %vm1953, %v1946, 920167782
        %v1960 = vsel %vm1952, %v1943, %v1959
        %v1961 = vsel %vm1951, %v1958, %v1960
        %v1962 = vsel %vm1950, %v1940, %v1943
        %v1963 = vsel %vm1953, %v1949, 1326507024
        %v1964 = vsel %vm1952, %v1946, %v1963
        %v1965 = vsel %vm1951, %v1962, %v1964
        %v1966 = vshll.u32 %v1926, 8
        %v1967 = vmul.u32.u64.compose %v1966, %v1965
        %v1968 = vextract.low.u32 %v1967
        %v1969 = vextract.high.u32 %v1967
        %v1970 = vmul.u32.u64.compose %v1966, %v1961
        %v1971 = vextract.low.u32 %v1970
        %v1972 = vextract.high.u32 %v1970
        %v1973 = vmul.u32 %v1966, %v1957
        %v1974 = vadd.s32 %v1969, %v1971
        %vm1975 = vc.u32 %v1969, %v1971
        %v1976 = vadd.s32 %v1972, 1
        %v1977 = vsel %vm1975, %v1976, %v1972
        %v1978 = vadd.s32 %v1973, %v1977
        %v1979 = vadd.s32 %v1978, 536870912
        %v1980 = vshrl.u32 %v1979, 30
        %v1981 = vshll.u32 %v1980, 30
        %v1982 = vsub.s32 %v1978, %v1981
        %vm1983 = vcmp.lt.s32.totalorder %v1982, 0
        %v1984 = vsub.s32 0, %v1982
        %v1985 = vsel %vm1983, %v1984, %v1982
        %v1986 = vclz %v1985
        %v1987 = vsub.s32 %v1986, 2
        %vm1988 = vcmp.gt.s32.totalorder 0, %v1987
        %v1989 = vsel %vm1988, 0, %v1987
        %v1990 = vsub.s32 32, %v1989
        %v1991 = vshll.u32 %v1982, %v1989
        %v1992 = vshrl.u32 %v1974, %v1990
        %v1993 = vor.u32 %v1991, %v1992
        %v1994 = vsub.s32 4294967266, %v1989
        %v1995 = vadd.s32 %v1994, 127
        %v1996 = vshll.u32 %v1995, 23
        %v1997 = vor.u32 4788187, %v1996
        %v1998 = vand.u32 2147483647, %v1997
        %v2000 = vcvt.s32.f32 %v1993
        %v2001 = vmul.f32 %v2000, %v1998
        %v2002 = vxor.u32 %v2001, 2147483648
        %v2003 = vsel %vm1920, %v2002, %v2001
        %v2004 = vsub.s32 4, %v1980
        %v2005 = vsel %vm1920, %v2004, %v1980
        %v2006 = vsel %vm1919, %v372, %v2003
        %v2007 = vsel %vm1919, 0, %v2005
        %v2008 = vcosq.f32.pop %v2006
        %v2009 = vsinq.f32.pop %v2006
        %vm2010 = vweird.f32 %v372
        %v2011 = vand.u32 %v2007, 3
        %vm2012 = vcmp.lt.s32.totalorder %v2011, 2
        %vm2013 = vcmp.eq.s32.totalorder %v2011, 0
        %v2014 = vxor.u32 %v2009, 2147483648
        %v2015 = vsel %vm2013, %v2008, %v2014
        %vm2016 = vcmp.eq.s32.totalorder %v2011, 2
        %v2017 = vxor.u32 %v2008, 2147483648
        %v2018 = vsel %vm2016, %v2017, %v2009
        %v2019 = vsel %vm2012, %v2015, %v2018
        %v2020 = vsel %vm2010, nan, %v2019
        %v2021 = vand.u32 2147483647, %v357
        %vm2022 = vcmp.le.f32.partialorder %v2021, 0.7853982
        %vm2023 = vcmp.lt.s32.totalorder %v357, 0
        %v2024 = vand.u32 %v357, 2139095040
        %v2025 = vshrl.u32 %v2024, 23
        %v2026 = vsub.s32 %v2025, 127
        %v2027 = vand.u32 2147483647, %v357
        %v2028 = vand.u32 %v2027, 8388607
        %v2029 = vor.u32 %v2028, 8388608
        %v2030 = vsub.s32 0, %v2029
        %v2031 = vadd.s32 %v2026, 1
        %vm2032 = vcmp.gt.s32.totalorder %v2031, 0
        %v2033 = vsel %vm2032, %v2031, 0
        %v2034 = vshrl.u32 %v2033, 5
        %v2035 = vand.u32 %v2033, 31
        %v2036 = vsub.s32 32, %v2035
        %v2037 = vshrl.u32 683565275, %v2036
        %v2038 = vshll.u32 683565275, %v2035
        %v2039 = vshrl.u32 2475754826, %v2036
        %v2040 = vor.u32 %v2038, %v2039
        %v2041 = vshll.u32 2475754826, %v2035
        %v2042 = vshrl.u32 2131351028, %v2036
        %v2043 = vor.u32 %v2041, %v2042
        %v2044 = vshll.u32 2131351028, %v2035
        %v2045 = vshrl.u32 2102212464, %v2036
        %v2046 = vor.u32 %v2044, %v2045
        %v2047 = vshll.u32 2102212464, %v2035
        %v2048 = vshrl.u32 920167782, %v2036
        %v2049 = vor.u32 %v2047, %v2048
        %v2050 = vshll.u32 920167782, %v2035
        %v2051 = vshrl.u32 1326507024, %v2036
        %v2052 = vor.u32 %v2050, %v2051
        %vm2053 = vcmp.lt.s32.totalorder %v2034, 1
        %vm2054 = vcmp.lt.s32.totalorder %v2034, 2
        %vm2055 = vcmp.lt.s32.totalorder %v2034, 3
        %vm2056 = vcmp.lt.s32.totalorder %v2034, 4
        %v2057 = vsel %vm2053, %v2037, %v2040
        %v2058 = vsel %vm2056, %v2046, 2102212464
        %v2059 = vsel %vm2055, %v2043, %v2058
        %v2060 = vsel %vm2054, %v2057, %v2059
        %v2061 = vsel %vm2053, %v2040, %v2043
        %v2062 = vsel %vm2056, %v2049, 920167782
        %v2063 = vsel %vm2055, %v2046, %v2062
        %v2064 = vsel %vm2054, %v2061, %v2063
        %v2065 = vsel %vm2053, %v2043, %v2046
        %v2066 = vsel %vm2056, %v2052, 1326507024
        %v2067 = vsel %vm2055, %v2049, %v2066
        %v2068 = vsel %vm2054, %v2065, %v2067
        %v2069 = vshll.u32 %v2029, 8
        %v2070 = vmul.u32.u64.compose %v2069, %v2068
        %v2071 = vextract.low.u32 %v2070
        %v2072 = vextract.high.u32 %v2070
        %v2073 = vmul.u32.u64.compose %v2069, %v2064
        %v2074 = vextract.low.u32 %v2073
        %v2075 = vextract.high.u32 %v2073
        %v2076 = vmul.u32 %v2069, %v2060
        %v2077 = vadd.s32 %v2072, %v2074
        %vm2078 = vc.u32 %v2072, %v2074
        %v2079 = vadd.s32 %v2075, 1
        %v2080 = vsel %vm2078, %v2079, %v2075
        %v2081 = vadd.s32 %v2076, %v2080
        %v2082 = vadd.s32 %v2081, 536870912
        %v2083 = vshrl.u32 %v2082, 30
        %v2084 = vshll.u32 %v2083, 30
        %v2085 = vsub.s32 %v2081, %v2084
        %vm2086 = vcmp.lt.s32.totalorder %v2085, 0
        %v2087 = vsub.s32 0, %v2085
        %v2088 = vsel %vm2086, %v2087, %v2085
        %v2089 = vclz %v2088
        %v2090 = vsub.s32 %v2089, 2
        %vm2091 = vcmp.gt.s32.totalorder 0, %v2090
        %v2092 = vsel %vm2091, 0, %v2090
        %v2093 = vsub.s32 32, %v2092
        %v2094 = vshll.u32 %v2085, %v2092
        %v2095 = vshrl.u32 %v2077, %v2093
        %v2096 = vor.u32 %v2094, %v2095
        %v2097 = vsub.s32 4294967266, %v2092
        %v2098 = vadd.s32 %v2097, 127
        %v2099 = vshll.u32 %v2098, 23
        %v2100 = vor.u32 4788187, %v2099
        %v2101 = vand.u32 2147483647, %v2100
        %v2103 = vcvt.s32.f32 %v2096
        %v2104 = vmul.f32 %v2103, %v2101
        %v2105 = vxor.u32 %v2104, 2147483648
        %v2106 = vsel %vm2023, %v2105, %v2104
        %v2107 = vsub.s32 4, %v2083
        %v2108 = vsel %vm2023, %v2107, %v2083
        %v2109 = vsel %vm2022, %v357, %v2106
        %v2110 = vsel %vm2022, 0, %v2108
        %v2111 = vcosq.f32.pop %v2109
        %v2112 = vsinq.f32.pop %v2109
        %vm2113 = vweird.f32 %v357
        %v2114 = vadd.s32 %v2110, 3
        %v2115 = vand.u32 %v2114, 3
        %vm2116 = vcmp.lt.s32.totalorder %v2115, 2
        %vm2117 = vcmp.eq.s32.totalorder %v2115, 0
        %v2118 = vxor.u32 %v2112, 2147483648
        %v2119 = vsel %vm2117, %v2111, %v2118
        %vm2120 = vcmp.eq.s32.totalorder %v2115, 2
        %v2121 = vxor.u32 %v2111, 2147483648
        %v2122 = vsel %vm2120, %v2121, %v2112
        %v2123 = vsel %vm2116, %v2119, %v2122
        %v2124 = vsel %vm2113, nan, %v2123
        %v2125 = vand.u32 2147483647, %v358
        %vm2126 = vcmp.le.f32.partialorder %v2125, 0.7853982
        %vm2127 = vcmp.lt.s32.totalorder %v358, 0
        %v2128 = vand.u32 %v358, 2139095040
        %v2129 = vshrl.u32 %v2128, 23
        %v2130 = vsub.s32 %v2129, 127
        %v2131 = vand.u32 2147483647, %v358
        %v2132 = vand.u32 %v2131, 8388607
        %v2133 = vor.u32 %v2132, 8388608
        %v2134 = vsub.s32 0, %v2133
        %v2135 = vadd.s32 %v2130, 1
        %vm2136 = vcmp.gt.s32.totalorder %v2135, 0
        %v2137 = vsel %vm2136, %v2135, 0
        %v2138 = vshrl.u32 %v2137, 5
        %v2139 = vand.u32 %v2137, 31
        %v2140 = vsub.s32 32, %v2139
        %v2141 = vshrl.u32 683565275, %v2140
        %v2142 = vshll.u32 683565275, %v2139
        %v2143 = vshrl.u32 2475754826, %v2140
        %v2144 = vor.u32 %v2142, %v2143
        %v2145 = vshll.u32 2475754826, %v2139
        %v2146 = vshrl.u32 2131351028, %v2140
        %v2147 = vor.u32 %v2145, %v2146
        %v2148 = vshll.u32 2131351028, %v2139
        %v2149 = vshrl.u32 2102212464, %v2140
        %v2150 = vor.u32 %v2148, %v2149
        %v2151 = vshll.u32 2102212464, %v2139
        %v2152 = vshrl.u32 920167782, %v2140
        %v2153 = vor.u32 %v2151, %v2152
        %v2154 = vshll.u32 920167782, %v2139
        %v2155 = vshrl.u32 1326507024, %v2140
        %v2156 = vor.u32 %v2154, %v2155
        %vm2157 = vcmp.lt.s32.totalorder %v2138, 1
        %vm2158 = vcmp.lt.s32.totalorder %v2138, 2
        %vm2159 = vcmp.lt.s32.totalorder %v2138, 3
        %vm2160 = vcmp.lt.s32.totalorder %v2138, 4
        %v2161 = vsel %vm2157, %v2141, %v2144
        %v2162 = vsel %vm2160, %v2150, 2102212464
        %v2163 = vsel %vm2159, %v2147, %v2162
        %v2164 = vsel %vm2158, %v2161, %v2163
        %v2165 = vsel %vm2157, %v2144, %v2147
        %v2166 = vsel %vm2160, %v2153, 920167782
        %v2167 = vsel %vm2159, %v2150, %v2166
        %v2168 = vsel %vm2158, %v2165, %v2167
        %v2169 = vsel %vm2157, %v2147, %v2150
        %v2170 = vsel %vm2160, %v2156, 1326507024
        %v2171 = vsel %vm2159, %v2153, %v2170
        %v2172 = vsel %vm2158, %v2169, %v2171
        %v2173 = vshll.u32 %v2133, 8
        %v2174 = vmul.u32.u64.compose %v2173, %v2172
        %v2175 = vextract.low.u32 %v2174
        %v2176 = vextract.high.u32 %v2174
        %v2177 = vmul.u32.u64.compose %v2173, %v2168
        %v2178 = vextract.low.u32 %v2177
        %v2179 = vextract.high.u32 %v2177
        %v2180 = vmul.u32 %v2173, %v2164
        %v2181 = vadd.s32 %v2176, %v2178
        %vm2182 = vc.u32 %v2176, %v2178
        %v2183 = vadd.s32 %v2179, 1
        %v2184 = vsel %vm2182, %v2183, %v2179
        %v2185 = vadd.s32 %v2180, %v2184
        %v2186 = vadd.s32 %v2185, 536870912
        %v2187 = vshrl.u32 %v2186, 30
        %v2188 = vshll.u32 %v2187, 30
        %v2189 = vsub.s32 %v2185, %v2188
        %vm2190 = vcmp.lt.s32.totalorder %v2189, 0
        %v2191 = vsub.s32 0, %v2189
        %v2192 = vsel %vm2190, %v2191, %v2189
        %v2193 = vclz %v2192
        %v2194 = vsub.s32 %v2193, 2
        %vm2195 = vcmp.gt.s32.totalorder 0, %v2194
        %v2196 = vsel %vm2195, 0, %v2194
        %v2197 = vsub.s32 32, %v2196
        %v2198 = vshll.u32 %v2189, %v2196
        %v2199 = vshrl.u32 %v2181, %v2197
        %v2200 = vor.u32 %v2198, %v2199
        %v2201 = vsub.s32 4294967266, %v2196
        %v2202 = vadd.s32 %v2201, 127
        %v2203 = vshll.u32 %v2202, 23
        %v2204 = vor.u32 4788187, %v2203
        %v2205 = vand.u32 2147483647, %v2204
        %v2207 = vcvt.s32.f32 %v2200
        %v2208 = vmul.f32 %v2207, %v2205
        %v2209 = vxor.u32 %v2208, 2147483648
        %v2210 = vsel %vm2127, %v2209, %v2208
        %v2211 = vsub.s32 4, %v2187
        %v2212 = vsel %vm2127, %v2211, %v2187
        %v2213 = vsel %vm2126, %v358, %v2210
        %v2214 = vsel %vm2126, 0, %v2212
        %v2215 = vcosq.f32.pop %v2213
        %v2216 = vsinq.f32.pop %v2213
        %vm2217 = vweird.f32 %v358
        %v2218 = vadd.s32 %v2214, 3
        %v2219 = vand.u32 %v2218, 3
        %vm2220 = vcmp.lt.s32.totalorder %v2219, 2
        %vm2221 = vcmp.eq.s32.totalorder %v2219, 0
        %v2222 = vxor.u32 %v2216, 2147483648
        %v2223 = vsel %vm2221, %v2215, %v2222
        %vm2224 = vcmp.eq.s32.totalorder %v2219, 2
        %v2225 = vxor.u32 %v2215, 2147483648
        %v2226 = vsel %vm2224, %v2225, %v2216
        %v2227 = vsel %vm2220, %v2223, %v2226
        %v2228 = vsel %vm2217, nan, %v2227
        %v2229 = vand.u32 2147483647, %v359
        %vm2230 = vcmp.le.f32.partialorder %v2229, 0.7853982
        %vm2231 = vcmp.lt.s32.totalorder %v359, 0
        %v2232 = vand.u32 %v359, 2139095040
        %v2233 = vshrl.u32 %v2232, 23
        %v2234 = vsub.s32 %v2233, 127
        %v2235 = vand.u32 2147483647, %v359
        %v2236 = vand.u32 %v2235, 8388607
        %v2237 = vor.u32 %v2236, 8388608
        %v2238 = vsub.s32 0, %v2237
        %v2239 = vadd.s32 %v2234, 1
        %vm2240 = vcmp.gt.s32.totalorder %v2239, 0
        %v2241 = vsel %vm2240, %v2239, 0
        %v2242 = vshrl.u32 %v2241, 5
        %v2243 = vand.u32 %v2241, 31
        %v2244 = vsub.s32 32, %v2243
        %v2245 = vshrl.u32 683565275, %v2244
        %v2246 = vshll.u32 683565275, %v2243
        %v2247 = vshrl.u32 2475754826, %v2244
        %v2248 = vor.u32 %v2246, %v2247
        %v2249 = vshll.u32 2475754826, %v2243
        %v2250 = vshrl.u32 2131351028, %v2244
        %v2251 = vor.u32 %v2249, %v2250
        %v2252 = vshll.u32 2131351028, %v2243
        %v2253 = vshrl.u32 2102212464, %v2244
        %v2254 = vor.u32 %v2252, %v2253
        %v2255 = vshll.u32 2102212464, %v2243
        %v2256 = vshrl.u32 920167782, %v2244
        %v2257 = vor.u32 %v2255, %v2256
        %v2258 = vshll.u32 920167782, %v2243
        %v2259 = vshrl.u32 1326507024, %v2244
        %v2260 = vor.u32 %v2258, %v2259
        %vm2261 = vcmp.lt.s32.totalorder %v2242, 1
        %vm2262 = vcmp.lt.s32.totalorder %v2242, 2
        %vm2263 = vcmp.lt.s32.totalorder %v2242, 3
        %vm2264 = vcmp.lt.s32.totalorder %v2242, 4
        %v2265 = vsel %vm2261, %v2245, %v2248
        %v2266 = vsel %vm2264, %v2254, 2102212464
        %v2267 = vsel %vm2263, %v2251, %v2266
        %v2268 = vsel %vm2262, %v2265, %v2267
        %v2269 = vsel %vm2261, %v2248, %v2251
        %v2270 = vsel %vm2264, %v2257, 920167782
        %v2271 = vsel %vm2263, %v2254, %v2270
        %v2272 = vsel %vm2262, %v2269, %v2271
        %v2273 = vsel %vm2261, %v2251, %v2254
        %v2274 = vsel %vm2264, %v2260, 1326507024
        %v2275 = vsel %vm2263, %v2257, %v2274
        %v2276 = vsel %vm2262, %v2273, %v2275
        %v2277 = vshll.u32 %v2237, 8
        %v2278 = vmul.u32.u64.compose %v2277, %v2276
        %v2279 = vextract.low.u32 %v2278
        %v2280 = vextract.high.u32 %v2278
        %v2281 = vmul.u32.u64.compose %v2277, %v2272
        %v2282 = vextract.low.u32 %v2281
        %v2283 = vextract.high.u32 %v2281
        %v2284 = vmul.u32 %v2277, %v2268
        %v2285 = vadd.s32 %v2280, %v2282
        %vm2286 = vc.u32 %v2280, %v2282
        %v2287 = vadd.s32 %v2283, 1
        %v2288 = vsel %vm2286, %v2287, %v2283
        %v2289 = vadd.s32 %v2284, %v2288
        %v2290 = vadd.s32 %v2289, 536870912
        %v2291 = vshrl.u32 %v2290, 30
        %v2292 = vshll.u32 %v2291, 30
        %v2293 = vsub.s32 %v2289, %v2292
        %vm2294 = vcmp.lt.s32.totalorder %v2293, 0
        %v2295 = vsub.s32 0, %v2293
        %v2296 = vsel %vm2294, %v2295, %v2293
        %v2297 = vclz %v2296
        %v2298 = vsub.s32 %v2297, 2
        %vm2299 = vcmp.gt.s32.totalorder 0, %v2298
        %v2300 = vsel %vm2299, 0, %v2298
        %v2301 = vsub.s32 32, %v2300
        %v2302 = vshll.u32 %v2293, %v2300
        %v2303 = vshrl.u32 %v2285, %v2301
        %v2304 = vor.u32 %v2302, %v2303
        %v2305 = vsub.s32 4294967266, %v2300
        %v2306 = vadd.s32 %v2305, 127
        %v2307 = vshll.u32 %v2306, 23
        %v2308 = vor.u32 4788187, %v2307
        %v2309 = vand.u32 2147483647, %v2308
        %v2311 = vcvt.s32.f32 %v2304
        %v2312 = vmul.f32 %v2311, %v2309
        %v2313 = vxor.u32 %v2312, 2147483648
        %v2314 = vsel %vm2231, %v2313, %v2312
        %v2315 = vsub.s32 4, %v2291
        %v2316 = vsel %vm2231, %v2315, %v2291
        %v2317 = vsel %vm2230, %v359, %v2314
        %v2318 = vsel %vm2230, 0, %v2316
        %v2319 = vcosq.f32.pop %v2317
        %v2320 = vsinq.f32.pop %v2317
        %vm2321 = vweird.f32 %v359
        %v2322 = vadd.s32 %v2318, 3
        %v2323 = vand.u32 %v2322, 3
        %vm2324 = vcmp.lt.s32.totalorder %v2323, 2
        %vm2325 = vcmp.eq.s32.totalorder %v2323, 0
        %v2326 = vxor.u32 %v2320, 2147483648
        %v2327 = vsel %vm2325, %v2319, %v2326
        %vm2328 = vcmp.eq.s32.totalorder %v2323, 2
        %v2329 = vxor.u32 %v2319, 2147483648
        %v2330 = vsel %vm2328, %v2329, %v2320
        %v2331 = vsel %vm2324, %v2327, %v2330
        %v2332 = vsel %vm2321, nan, %v2331
        %v2333 = vand.u32 2147483647, %v360
        %vm2334 = vcmp.le.f32.partialorder %v2333, 0.7853982
        %vm2335 = vcmp.lt.s32.totalorder %v360, 0
        %v2336 = vand.u32 %v360, 2139095040
        %v2337 = vshrl.u32 %v2336, 23
        %v2338 = vsub.s32 %v2337, 127
        %v2339 = vand.u32 2147483647, %v360
        %v2340 = vand.u32 %v2339, 8388607
        %v2341 = vor.u32 %v2340, 8388608
        %v2342 = vsub.s32 0, %v2341
        %v2343 = vadd.s32 %v2338, 1
        %vm2344 = vcmp.gt.s32.totalorder %v2343, 0
        %v2345 = vsel %vm2344, %v2343, 0
        %v2346 = vshrl.u32 %v2345, 5
        %v2347 = vand.u32 %v2345, 31
        %v2348 = vsub.s32 32, %v2347
        %v2349 = vshrl.u32 683565275, %v2348
        %v2350 = vshll.u32 683565275, %v2347
        %v2351 = vshrl.u32 2475754826, %v2348
        %v2352 = vor.u32 %v2350, %v2351
        %v2353 = vshll.u32 2475754826, %v2347
        %v2354 = vshrl.u32 2131351028, %v2348
        %v2355 = vor.u32 %v2353, %v2354
        %v2356 = vshll.u32 2131351028, %v2347
        %v2357 = vshrl.u32 2102212464, %v2348
        %v2358 = vor.u32 %v2356, %v2357
        %v2359 = vshll.u32 2102212464, %v2347
        %v2360 = vshrl.u32 920167782, %v2348
        %v2361 = vor.u32 %v2359, %v2360
        %v2362 = vshll.u32 920167782, %v2347
        %v2363 = vshrl.u32 1326507024, %v2348
        %v2364 = vor.u32 %v2362, %v2363
        %vm2365 = vcmp.lt.s32.totalorder %v2346, 1
        %vm2366 = vcmp.lt.s32.totalorder %v2346, 2
        %vm2367 = vcmp.lt.s32.totalorder %v2346, 3
        %vm2368 = vcmp.lt.s32.totalorder %v2346, 4
        %v2369 = vsel %vm2365, %v2349, %v2352
        %v2370 = vsel %vm2368, %v2358, 2102212464
        %v2371 = vsel %vm2367, %v2355, %v2370
        %v2372 = vsel %vm2366, %v2369, %v2371
        %v2373 = vsel %vm2365, %v2352, %v2355
        %v2374 = vsel %vm2368, %v2361, 920167782
        %v2375 = vsel %vm2367, %v2358, %v2374
        %v2376 = vsel %vm2366, %v2373, %v2375
        %v2377 = vsel %vm2365, %v2355, %v2358
        %v2378 = vsel %vm2368, %v2364, 1326507024
        %v2379 = vsel %vm2367, %v2361, %v2378
        %v2380 = vsel %vm2366, %v2377, %v2379
        %v2381 = vshll.u32 %v2341, 8
        %v2382 = vmul.u32.u64.compose %v2381, %v2380
        %v2383 = vextract.low.u32 %v2382
        %v2384 = vextract.high.u32 %v2382
        %v2385 = vmul.u32.u64.compose %v2381, %v2376
        %v2386 = vextract.low.u32 %v2385
        %v2387 = vextract.high.u32 %v2385
        %v2388 = vmul.u32 %v2381, %v2372
        %v2389 = vadd.s32 %v2384, %v2386
        %vm2390 = vc.u32 %v2384, %v2386
        %v2391 = vadd.s32 %v2387, 1
        %v2392 = vsel %vm2390, %v2391, %v2387
        %v2393 = vadd.s32 %v2388, %v2392
        %v2394 = vadd.s32 %v2393, 536870912
        %v2395 = vshrl.u32 %v2394, 30
        %v2396 = vshll.u32 %v2395, 30
        %v2397 = vsub.s32 %v2393, %v2396
        %vm2398 = vcmp.lt.s32.totalorder %v2397, 0
        %v2399 = vsub.s32 0, %v2397
        %v2400 = vsel %vm2398, %v2399, %v2397
        %v2401 = vclz %v2400
        %v2402 = vsub.s32 %v2401, 2
        %vm2403 = vcmp.gt.s32.totalorder 0, %v2402
        %v2404 = vsel %vm2403, 0, %v2402
        %v2405 = vsub.s32 32, %v2404
        %v2406 = vshll.u32 %v2397, %v2404
        %v2407 = vshrl.u32 %v2389, %v2405
        %v2408 = vor.u32 %v2406, %v2407
        %v2409 = vsub.s32 4294967266, %v2404
        %v2410 = vadd.s32 %v2409, 127
        %v2411 = vshll.u32 %v2410, 23
        %v2412 = vor.u32 4788187, %v2411
        %v2413 = vand.u32 2147483647, %v2412
        %v2415 = vcvt.s32.f32 %v2408
        %v2416 = vmul.f32 %v2415, %v2413
        %v2417 = vxor.u32 %v2416, 2147483648
        %v2418 = vsel %vm2335, %v2417, %v2416
        %v2419 = vsub.s32 4, %v2395
        %v2420 = vsel %vm2335, %v2419, %v2395
        %v2421 = vsel %vm2334, %v360, %v2418
        %v2422 = vsel %vm2334, 0, %v2420
        %v2423 = vcosq.f32.pop %v2421
        %v2424 = vsinq.f32.pop %v2421
        %vm2425 = vweird.f32 %v360
        %v2426 = vadd.s32 %v2422, 3
        %v2427 = vand.u32 %v2426, 3
        %vm2428 = vcmp.lt.s32.totalorder %v2427, 2
        %vm2429 = vcmp.eq.s32.totalorder %v2427, 0
        %v2430 = vxor.u32 %v2424, 2147483648
        %v2431 = vsel %vm2429, %v2423, %v2430
        %vm2432 = vcmp.eq.s32.totalorder %v2427, 2
        %v2433 = vxor.u32 %v2423, 2147483648
        %v2434 = vsel %vm2432, %v2433, %v2424
        %v2435 = vsel %vm2428, %v2431, %v2434
        %v2436 = vsel %vm2425, nan, %v2435
        %v2437 = vand.u32 2147483647, %v361
        %vm2438 = vcmp.le.f32.partialorder %v2437, 0.7853982
        %vm2439 = vcmp.lt.s32.totalorder %v361, 0
        %v2440 = vand.u32 %v361, 2139095040
        %v2441 = vshrl.u32 %v2440, 23
        %v2442 = vsub.s32 %v2441, 127
        %v2443 = vand.u32 2147483647, %v361
        %v2444 = vand.u32 %v2443, 8388607
        %v2445 = vor.u32 %v2444, 8388608
        %v2446 = vsub.s32 0, %v2445
        %v2447 = vadd.s32 %v2442, 1
        %vm2448 = vcmp.gt.s32.totalorder %v2447, 0
        %v2449 = vsel %vm2448, %v2447, 0
        %v2450 = vshrl.u32 %v2449, 5
        %v2451 = vand.u32 %v2449, 31
        %v2452 = vsub.s32 32, %v2451
        %v2453 = vshrl.u32 683565275, %v2452
        %v2454 = vshll.u32 683565275, %v2451
        %v2455 = vshrl.u32 2475754826, %v2452
        %v2456 = vor.u32 %v2454, %v2455
        %v2457 = vshll.u32 2475754826, %v2451
        %v2458 = vshrl.u32 2131351028, %v2452
        %v2459 = vor.u32 %v2457, %v2458
        %v2460 = vshll.u32 2131351028, %v2451
        %v2461 = vshrl.u32 2102212464, %v2452
        %v2462 = vor.u32 %v2460, %v2461
        %v2463 = vshll.u32 2102212464, %v2451
        %v2464 = vshrl.u32 920167782, %v2452
        %v2465 = vor.u32 %v2463, %v2464
        %v2466 = vshll.u32 920167782, %v2451
        %v2467 = vshrl.u32 1326507024, %v2452
        %v2468 = vor.u32 %v2466, %v2467
        %vm2469 = vcmp.lt.s32.totalorder %v2450, 1
        %vm2470 = vcmp.lt.s32.totalorder %v2450, 2
        %vm2471 = vcmp.lt.s32.totalorder %v2450, 3
        %vm2472 = vcmp.lt.s32.totalorder %v2450, 4
        %v2473 = vsel %vm2469, %v2453, %v2456
        %v2474 = vsel %vm2472, %v2462, 2102212464
        %v2475 = vsel %vm2471, %v2459, %v2474
        %v2476 = vsel %vm2470, %v2473, %v2475
        %v2477 = vsel %vm2469, %v2456, %v2459
        %v2478 = vsel %vm2472, %v2465, 920167782
        %v2479 = vsel %vm2471, %v2462, %v2478
        %v2480 = vsel %vm2470, %v2477, %v2479
        %v2481 = vsel %vm2469, %v2459, %v2462
        %v2482 = vsel %vm2472, %v2468, 1326507024
        %v2483 = vsel %vm2471, %v2465, %v2482
        %v2484 = vsel %vm2470, %v2481, %v2483
        %v2485 = vshll.u32 %v2445, 8
        %v2486 = vmul.u32.u64.compose %v2485, %v2484
        %v2487 = vextract.low.u32 %v2486
        %v2488 = vextract.high.u32 %v2486
        %v2489 = vmul.u32.u64.compose %v2485, %v2480
        %v2490 = vextract.low.u32 %v2489
        %v2491 = vextract.high.u32 %v2489
        %v2492 = vmul.u32 %v2485, %v2476
        %v2493 = vadd.s32 %v2488, %v2490
        %vm2494 = vc.u32 %v2488, %v2490
        %v2495 = vadd.s32 %v2491, 1
        %v2496 = vsel %vm2494, %v2495, %v2491
        %v2497 = vadd.s32 %v2492, %v2496
        %v2498 = vadd.s32 %v2497, 536870912
        %v2499 = vshrl.u32 %v2498, 30
        %v2500 = vshll.u32 %v2499, 30
        %v2501 = vsub.s32 %v2497, %v2500
        %vm2502 = vcmp.lt.s32.totalorder %v2501, 0
        %v2503 = vsub.s32 0, %v2501
        %v2504 = vsel %vm2502, %v2503, %v2501
        %v2505 = vclz %v2504
        %v2506 = vsub.s32 %v2505, 2
        %vm2507 = vcmp.gt.s32.totalorder 0, %v2506
        %v2508 = vsel %vm2507, 0, %v2506
        %v2509 = vsub.s32 32, %v2508
        %v2510 = vshll.u32 %v2501, %v2508
        %v2511 = vshrl.u32 %v2493, %v2509
        %v2512 = vor.u32 %v2510, %v2511
        %v2513 = vsub.s32 4294967266, %v2508
        %v2514 = vadd.s32 %v2513, 127
        %v2515 = vshll.u32 %v2514, 23
        %v2516 = vor.u32 4788187, %v2515
        %v2517 = vand.u32 2147483647, %v2516
        %v2519 = vcvt.s32.f32 %v2512
        %v2520 = vmul.f32 %v2519, %v2517
        %v2521 = vxor.u32 %v2520, 2147483648
        %v2522 = vsel %vm2439, %v2521, %v2520
        %v2523 = vsub.s32 4, %v2499
        %v2524 = vsel %vm2439, %v2523, %v2499
        %v2525 = vsel %vm2438, %v361, %v2522
        %v2526 = vsel %vm2438, 0, %v2524
        %v2527 = vcosq.f32.pop %v2525
        %v2528 = vsinq.f32.pop %v2525
        %vm2529 = vweird.f32 %v361
        %v2530 = vadd.s32 %v2526, 3
        %v2531 = vand.u32 %v2530, 3
        %vm2532 = vcmp.lt.s32.totalorder %v2531, 2
        %vm2533 = vcmp.eq.s32.totalorder %v2531, 0
        %v2534 = vxor.u32 %v2528, 2147483648
        %v2535 = vsel %vm2533, %v2527, %v2534
        %vm2536 = vcmp.eq.s32.totalorder %v2531, 2
        %v2537 = vxor.u32 %v2527, 2147483648
        %v2538 = vsel %vm2536, %v2537, %v2528
        %v2539 = vsel %vm2532, %v2535, %v2538
        %v2540 = vsel %vm2529, nan, %v2539
        %v2541 = vand.u32 2147483647, %v362
        %vm2542 = vcmp.le.f32.partialorder %v2541, 0.7853982
        %vm2543 = vcmp.lt.s32.totalorder %v362, 0
        %v2544 = vand.u32 %v362, 2139095040
        %v2545 = vshrl.u32 %v2544, 23
        %v2546 = vsub.s32 %v2545, 127
        %v2547 = vand.u32 2147483647, %v362
        %v2548 = vand.u32 %v2547, 8388607
        %v2549 = vor.u32 %v2548, 8388608
        %v2550 = vsub.s32 0, %v2549
        %v2551 = vadd.s32 %v2546, 1
        %vm2552 = vcmp.gt.s32.totalorder %v2551, 0
        %v2553 = vsel %vm2552, %v2551, 0
        %v2554 = vshrl.u32 %v2553, 5
        %v2555 = vand.u32 %v2553, 31
        %v2556 = vsub.s32 32, %v2555
        %v2557 = vshrl.u32 683565275, %v2556
        %v2558 = vshll.u32 683565275, %v2555
        %v2559 = vshrl.u32 2475754826, %v2556
        %v2560 = vor.u32 %v2558, %v2559
        %v2561 = vshll.u32 2475754826, %v2555
        %v2562 = vshrl.u32 2131351028, %v2556
        %v2563 = vor.u32 %v2561, %v2562
        %v2564 = vshll.u32 2131351028, %v2555
        %v2565 = vshrl.u32 2102212464, %v2556
        %v2566 = vor.u32 %v2564, %v2565
        %v2567 = vshll.u32 2102212464, %v2555
        %v2568 = vshrl.u32 920167782, %v2556
        %v2569 = vor.u32 %v2567, %v2568
        %v2570 = vshll.u32 920167782, %v2555
        %v2571 = vshrl.u32 1326507024, %v2556
        %v2572 = vor.u32 %v2570, %v2571
        %vm2573 = vcmp.lt.s32.totalorder %v2554, 1
        %vm2574 = vcmp.lt.s32.totalorder %v2554, 2
        %vm2575 = vcmp.lt.s32.totalorder %v2554, 3
        %vm2576 = vcmp.lt.s32.totalorder %v2554, 4
        %v2577 = vsel %vm2573, %v2557, %v2560
        %v2578 = vsel %vm2576, %v2566, 2102212464
        %v2579 = vsel %vm2575, %v2563, %v2578
        %v2580 = vsel %vm2574, %v2577, %v2579
        %v2581 = vsel %vm2573, %v2560, %v2563
        %v2582 = vsel %vm2576, %v2569, 920167782
        %v2583 = vsel %vm2575, %v2566, %v2582
        %v2584 = vsel %vm2574, %v2581, %v2583
        %v2585 = vsel %vm2573, %v2563, %v2566
        %v2586 = vsel %vm2576, %v2572, 1326507024
        %v2587 = vsel %vm2575, %v2569, %v2586
        %v2588 = vsel %vm2574, %v2585, %v2587
        %v2589 = vshll.u32 %v2549, 8
        %v2590 = vmul.u32.u64.compose %v2589, %v2588
        %v2591 = vextract.low.u32 %v2590
        %v2592 = vextract.high.u32 %v2590
        %v2593 = vmul.u32.u64.compose %v2589, %v2584
        %v2594 = vextract.low.u32 %v2593
        %v2595 = vextract.high.u32 %v2593
        %v2596 = vmul.u32 %v2589, %v2580
        %v2597 = vadd.s32 %v2592, %v2594
        %vm2598 = vc.u32 %v2592, %v2594
        %v2599 = vadd.s32 %v2595, 1
        %v2600 = vsel %vm2598, %v2599, %v2595
        %v2601 = vadd.s32 %v2596, %v2600
        %v2602 = vadd.s32 %v2601, 536870912
        %v2603 = vshrl.u32 %v2602, 30
        %v2604 = vshll.u32 %v2603, 30
        %v2605 = vsub.s32 %v2601, %v2604
        %vm2606 = vcmp.lt.s32.totalorder %v2605, 0
        %v2607 = vsub.s32 0, %v2605
        %v2608 = vsel %vm2606, %v2607, %v2605
        %v2609 = vclz %v2608
        %v2610 = vsub.s32 %v2609, 2
        %vm2611 = vcmp.gt.s32.totalorder 0, %v2610
        %v2612 = vsel %vm2611, 0, %v2610
        %v2613 = vsub.s32 32, %v2612
        %v2614 = vshll.u32 %v2605, %v2612
        %v2615 = vshrl.u32 %v2597, %v2613
        %v2616 = vor.u32 %v2614, %v2615
        %v2617 = vsub.s32 4294967266, %v2612
        %v2618 = vadd.s32 %v2617, 127
        %v2619 = vshll.u32 %v2618, 23
        %v2620 = vor.u32 4788187, %v2619
        %v2621 = vand.u32 2147483647, %v2620
        %v2623 = vcvt.s32.f32 %v2616
        %v2624 = vmul.f32 %v2623, %v2621
        %v2625 = vxor.u32 %v2624, 2147483648
        %v2626 = vsel %vm2543, %v2625, %v2624
        %v2627 = vsub.s32 4, %v2603
        %v2628 = vsel %vm2543, %v2627, %v2603
        %v2629 = vsel %vm2542, %v362, %v2626
        %v2630 = vsel %vm2542, 0, %v2628
        %v2631 = vcosq.f32.pop %v2629
        %v2632 = vsinq.f32.pop %v2629
        %vm2633 = vweird.f32 %v362
        %v2634 = vadd.s32 %v2630, 3
        %v2635 = vand.u32 %v2634, 3
        %vm2636 = vcmp.lt.s32.totalorder %v2635, 2
        %vm2637 = vcmp.eq.s32.totalorder %v2635, 0
        %v2638 = vxor.u32 %v2632, 2147483648
        %v2639 = vsel %vm2637, %v2631, %v2638
        %vm2640 = vcmp.eq.s32.totalorder %v2635, 2
        %v2641 = vxor.u32 %v2631, 2147483648
        %v2642 = vsel %vm2640, %v2641, %v2632
        %v2643 = vsel %vm2636, %v2639, %v2642
        %v2644 = vsel %vm2633, nan, %v2643
        %v2645 = vand.u32 2147483647, %v363
        %vm2646 = vcmp.le.f32.partialorder %v2645, 0.7853982
        %vm2647 = vcmp.lt.s32.totalorder %v363, 0
        %v2648 = vand.u32 %v363, 2139095040
        %v2649 = vshrl.u32 %v2648, 23
        %v2650 = vsub.s32 %v2649, 127
        %v2651 = vand.u32 2147483647, %v363
        %v2652 = vand.u32 %v2651, 8388607
        %v2653 = vor.u32 %v2652, 8388608
        %v2654 = vsub.s32 0, %v2653
        %v2655 = vadd.s32 %v2650, 1
        %vm2656 = vcmp.gt.s32.totalorder %v2655, 0
        %v2657 = vsel %vm2656, %v2655, 0
        %v2658 = vshrl.u32 %v2657, 5
        %v2659 = vand.u32 %v2657, 31
        %v2660 = vsub.s32 32, %v2659
        %v2661 = vshrl.u32 683565275, %v2660
        %v2662 = vshll.u32 683565275, %v2659
        %v2663 = vshrl.u32 2475754826, %v2660
        %v2664 = vor.u32 %v2662, %v2663
        %v2665 = vshll.u32 2475754826, %v2659
        %v2666 = vshrl.u32 2131351028, %v2660
        %v2667 = vor.u32 %v2665, %v2666
        %v2668 = vshll.u32 2131351028, %v2659
        %v2669 = vshrl.u32 2102212464, %v2660
        %v2670 = vor.u32 %v2668, %v2669
        %v2671 = vshll.u32 2102212464, %v2659
        %v2672 = vshrl.u32 920167782, %v2660
        %v2673 = vor.u32 %v2671, %v2672
        %v2674 = vshll.u32 920167782, %v2659
        %v2675 = vshrl.u32 1326507024, %v2660
        %v2676 = vor.u32 %v2674, %v2675
        %vm2677 = vcmp.lt.s32.totalorder %v2658, 1
        %vm2678 = vcmp.lt.s32.totalorder %v2658, 2
        %vm2679 = vcmp.lt.s32.totalorder %v2658, 3
        %vm2680 = vcmp.lt.s32.totalorder %v2658, 4
        %v2681 = vsel %vm2677, %v2661, %v2664
        %v2682 = vsel %vm2680, %v2670, 2102212464
        %v2683 = vsel %vm2679, %v2667, %v2682
        %v2684 = vsel %vm2678, %v2681, %v2683
        %v2685 = vsel %vm2677, %v2664, %v2667
        %v2686 = vsel %vm2680, %v2673, 920167782
        %v2687 = vsel %vm2679, %v2670, %v2686
        %v2688 = vsel %vm2678, %v2685, %v2687
        %v2689 = vsel %vm2677, %v2667, %v2670
        %v2690 = vsel %vm2680, %v2676, 1326507024
        %v2691 = vsel %vm2679, %v2673, %v2690
        %v2692 = vsel %vm2678, %v2689, %v2691
        %v2693 = vshll.u32 %v2653, 8
        %v2694 = vmul.u32.u64.compose %v2693, %v2692
        %v2695 = vextract.low.u32 %v2694
        %v2696 = vextract.high.u32 %v2694
        %v2697 = vmul.u32.u64.compose %v2693, %v2688
        %v2698 = vextract.low.u32 %v2697
        %v2699 = vextract.high.u32 %v2697
        %v2700 = vmul.u32 %v2693, %v2684
        %v2701 = vadd.s32 %v2696, %v2698
        %vm2702 = vc.u32 %v2696, %v2698
        %v2703 = vadd.s32 %v2699, 1
        %v2704 = vsel %vm2702, %v2703, %v2699
        %v2705 = vadd.s32 %v2700, %v2704
        %v2706 = vadd.s32 %v2705, 536870912
        %v2707 = vshrl.u32 %v2706, 30
        %v2708 = vshll.u32 %v2707, 30
        %v2709 = vsub.s32 %v2705, %v2708
        %vm2710 = vcmp.lt.s32.totalorder %v2709, 0
        %v2711 = vsub.s32 0, %v2709
        %v2712 = vsel %vm2710, %v2711, %v2709
        %v2713 = vclz %v2712
        %v2714 = vsub.s32 %v2713, 2
        %vm2715 = vcmp.gt.s32.totalorder 0, %v2714
        %v2716 = vsel %vm2715, 0, %v2714
        %v2717 = vsub.s32 32, %v2716
        %v2718 = vshll.u32 %v2709, %v2716
        %v2719 = vshrl.u32 %v2701, %v2717
        %v2720 = vor.u32 %v2718, %v2719
        %v2721 = vsub.s32 4294967266, %v2716
        %v2722 = vadd.s32 %v2721, 127
        %v2723 = vshll.u32 %v2722, 23
        %v2724 = vor.u32 4788187, %v2723
        %v2725 = vand.u32 2147483647, %v2724
        %v2727 = vcvt.s32.f32 %v2720
        %v2728 = vmul.f32 %v2727, %v2725
        %v2729 = vxor.u32 %v2728, 2147483648
        %v2730 = vsel %vm2647, %v2729, %v2728
        %v2731 = vsub.s32 4, %v2707
        %v2732 = vsel %vm2647, %v2731, %v2707
        %v2733 = vsel %vm2646, %v363, %v2730
        %v2734 = vsel %vm2646, 0, %v2732
        %v2735 = vcosq.f32.pop %v2733
        %v2736 = vsinq.f32.pop %v2733
        %vm2737 = vweird.f32 %v363
        %v2738 = vadd.s32 %v2734, 3
        %v2739 = vand.u32 %v2738, 3
        %vm2740 = vcmp.lt.s32.totalorder %v2739, 2
        %vm2741 = vcmp.eq.s32.totalorder %v2739, 0
        %v2742 = vxor.u32 %v2736, 2147483648
        %v2743 = vsel %vm2741, %v2735, %v2742
        %vm2744 = vcmp.eq.s32.totalorder %v2739, 2
        %v2745 = vxor.u32 %v2735, 2147483648
        %v2746 = vsel %vm2744, %v2745, %v2736
        %v2747 = vsel %vm2740, %v2743, %v2746
        %v2748 = vsel %vm2737, nan, %v2747
        %v2749 = vand.u32 2147483647, %v364
        %vm2750 = vcmp.le.f32.partialorder %v2749, 0.7853982
        %vm2751 = vcmp.lt.s32.totalorder %v364, 0
        %v2752 = vand.u32 %v364, 2139095040
        %v2753 = vshrl.u32 %v2752, 23
        %v2754 = vsub.s32 %v2753, 127
        %v2755 = vand.u32 2147483647, %v364
        %v2756 = vand.u32 %v2755, 8388607
        %v2757 = vor.u32 %v2756, 8388608
        %v2758 = vsub.s32 0, %v2757
        %v2759 = vadd.s32 %v2754, 1
        %vm2760 = vcmp.gt.s32.totalorder %v2759, 0
        %v2761 = vsel %vm2760, %v2759, 0
        %v2762 = vshrl.u32 %v2761, 5
        %v2763 = vand.u32 %v2761, 31
        %v2764 = vsub.s32 32, %v2763
        %v2765 = vshrl.u32 683565275, %v2764
        %v2766 = vshll.u32 683565275, %v2763
        %v2767 = vshrl.u32 2475754826, %v2764
        %v2768 = vor.u32 %v2766, %v2767
        %v2769 = vshll.u32 2475754826, %v2763
        %v2770 = vshrl.u32 2131351028, %v2764
        %v2771 = vor.u32 %v2769, %v2770
        %v2772 = vshll.u32 2131351028, %v2763
        %v2773 = vshrl.u32 2102212464, %v2764
        %v2774 = vor.u32 %v2772, %v2773
        %v2775 = vshll.u32 2102212464, %v2763
        %v2776 = vshrl.u32 920167782, %v2764
        %v2777 = vor.u32 %v2775, %v2776
        %v2778 = vshll.u32 920167782, %v2763
        %v2779 = vshrl.u32 1326507024, %v2764
        %v2780 = vor.u32 %v2778, %v2779
        %vm2781 = vcmp.lt.s32.totalorder %v2762, 1
        %vm2782 = vcmp.lt.s32.totalorder %v2762, 2
        %vm2783 = vcmp.lt.s32.totalorder %v2762, 3
        %vm2784 = vcmp.lt.s32.totalorder %v2762, 4
        %v2785 = vsel %vm2781, %v2765, %v2768
        %v2786 = vsel %vm2784, %v2774, 2102212464
        %v2787 = vsel %vm2783, %v2771, %v2786
        %v2788 = vsel %vm2782, %v2785, %v2787
        %v2789 = vsel %vm2781, %v2768, %v2771
        %v2790 = vsel %vm2784, %v2777, 920167782
        %v2791 = vsel %vm2783, %v2774, %v2790
        %v2792 = vsel %vm2782, %v2789, %v2791
        %v2793 = vsel %vm2781, %v2771, %v2774
        %v2794 = vsel %vm2784, %v2780, 1326507024
        %v2795 = vsel %vm2783, %v2777, %v2794
        %v2796 = vsel %vm2782, %v2793, %v2795
        %v2797 = vshll.u32 %v2757, 8
        %v2798 = vmul.u32.u64.compose %v2797, %v2796
        %v2799 = vextract.low.u32 %v2798
        %v2800 = vextract.high.u32 %v2798
        %v2801 = vmul.u32.u64.compose %v2797, %v2792
        %v2802 = vextract.low.u32 %v2801
        %v2803 = vextract.high.u32 %v2801
        %v2804 = vmul.u32 %v2797, %v2788
        %v2805 = vadd.s32 %v2800, %v2802
        %vm2806 = vc.u32 %v2800, %v2802
        %v2807 = vadd.s32 %v2803, 1
        %v2808 = vsel %vm2806, %v2807, %v2803
        %v2809 = vadd.s32 %v2804, %v2808
        %v2810 = vadd.s32 %v2809, 536870912
        %v2811 = vshrl.u32 %v2810, 30
        %v2812 = vshll.u32 %v2811, 30
        %v2813 = vsub.s32 %v2809, %v2812
        %vm2814 = vcmp.lt.s32.totalorder %v2813, 0
        %v2815 = vsub.s32 0, %v2813
        %v2816 = vsel %vm2814, %v2815, %v2813
        %v2817 = vclz %v2816
        %v2818 = vsub.s32 %v2817, 2
        %vm2819 = vcmp.gt.s32.totalorder 0, %v2818
        %v2820 = vsel %vm2819, 0, %v2818
        %v2821 = vsub.s32 32, %v2820
        %v2822 = vshll.u32 %v2813, %v2820
        %v2823 = vshrl.u32 %v2805, %v2821
        %v2824 = vor.u32 %v2822, %v2823
        %v2825 = vsub.s32 4294967266, %v2820
        %v2826 = vadd.s32 %v2825, 127
        %v2827 = vshll.u32 %v2826, 23
        %v2828 = vor.u32 4788187, %v2827
        %v2829 = vand.u32 2147483647, %v2828
        %v2831 = vcvt.s32.f32 %v2824
        %v2832 = vmul.f32 %v2831, %v2829
        %v2833 = vxor.u32 %v2832, 2147483648
        %v2834 = vsel %vm2751, %v2833, %v2832
        %v2835 = vsub.s32 4, %v2811
        %v2836 = vsel %vm2751, %v2835, %v2811
        %v2837 = vsel %vm2750, %v364, %v2834
        %v2838 = vsel %vm2750, 0, %v2836
        %v2839 = vcosq.f32.pop %v2837
        %v2840 = vsinq.f32.pop %v2837
        %vm2841 = vweird.f32 %v364
        %v2842 = vadd.s32 %v2838, 3
        %v2843 = vand.u32 %v2842, 3
        %vm2844 = vcmp.lt.s32.totalorder %v2843, 2
        %vm2845 = vcmp.eq.s32.totalorder %v2843, 0
        %v2846 = vxor.u32 %v2840, 2147483648
        %v2847 = vsel %vm2845, %v2839, %v2846
        %vm2848 = vcmp.eq.s32.totalorder %v2843, 2
        %v2849 = vxor.u32 %v2839, 2147483648
        %v2850 = vsel %vm2848, %v2849, %v2840
        %v2851 = vsel %vm2844, %v2847, %v2850
        %v2852 = vsel %vm2841, nan, %v2851
        %v2853 = vand.u32 2147483647, %v365
        %vm2854 = vcmp.le.f32.partialorder %v2853, 0.7853982
        %vm2855 = vcmp.lt.s32.totalorder %v365, 0
        %v2856 = vand.u32 %v365, 2139095040
        %v2857 = vshrl.u32 %v2856, 23
        %v2858 = vsub.s32 %v2857, 127
        %v2859 = vand.u32 2147483647, %v365
        %v2860 = vand.u32 %v2859, 8388607
        %v2861 = vor.u32 %v2860, 8388608
        %v2862 = vsub.s32 0, %v2861
        %v2863 = vadd.s32 %v2858, 1
        %vm2864 = vcmp.gt.s32.totalorder %v2863, 0
        %v2865 = vsel %vm2864, %v2863, 0
        %v2866 = vshrl.u32 %v2865, 5
        %v2867 = vand.u32 %v2865, 31
        %v2868 = vsub.s32 32, %v2867
        %v2869 = vshrl.u32 683565275, %v2868
        %v2870 = vshll.u32 683565275, %v2867
        %v2871 = vshrl.u32 2475754826, %v2868
        %v2872 = vor.u32 %v2870, %v2871
        %v2873 = vshll.u32 2475754826, %v2867
        %v2874 = vshrl.u32 2131351028, %v2868
        %v2875 = vor.u32 %v2873, %v2874
        %v2876 = vshll.u32 2131351028, %v2867
        %v2877 = vshrl.u32 2102212464, %v2868
        %v2878 = vor.u32 %v2876, %v2877
        %v2879 = vshll.u32 2102212464, %v2867
        %v2880 = vshrl.u32 920167782, %v2868
        %v2881 = vor.u32 %v2879, %v2880
        %v2882 = vshll.u32 920167782, %v2867
        %v2883 = vshrl.u32 1326507024, %v2868
        %v2884 = vor.u32 %v2882, %v2883
        %vm2885 = vcmp.lt.s32.totalorder %v2866, 1
        %vm2886 = vcmp.lt.s32.totalorder %v2866, 2
        %vm2887 = vcmp.lt.s32.totalorder %v2866, 3
        %vm2888 = vcmp.lt.s32.totalorder %v2866, 4
        %v2889 = vsel %vm2885, %v2869, %v2872
        %v2890 = vsel %vm2888, %v2878, 2102212464
        %v2891 = vsel %vm2887, %v2875, %v2890
        %v2892 = vsel %vm2886, %v2889, %v2891
        %v2893 = vsel %vm2885, %v2872, %v2875
        %v2894 = vsel %vm2888, %v2881, 920167782
        %v2895 = vsel %vm2887, %v2878, %v2894
        %v2896 = vsel %vm2886, %v2893, %v2895
        %v2897 = vsel %vm2885, %v2875, %v2878
        %v2898 = vsel %vm2888, %v2884, 1326507024
        %v2899 = vsel %vm2887, %v2881, %v2898
        %v2900 = vsel %vm2886, %v2897, %v2899
        %v2901 = vshll.u32 %v2861, 8
        %v2902 = vmul.u32.u64.compose %v2901, %v2900
        %v2903 = vextract.low.u32 %v2902
        %v2904 = vextract.high.u32 %v2902
        %v2905 = vmul.u32.u64.compose %v2901, %v2896
        %v2906 = vextract.low.u32 %v2905
        %v2907 = vextract.high.u32 %v2905
        %v2908 = vmul.u32 %v2901, %v2892
        %v2909 = vadd.s32 %v2904, %v2906
        %vm2910 = vc.u32 %v2904, %v2906
        %v2911 = vadd.s32 %v2907, 1
        %v2912 = vsel %vm2910, %v2911, %v2907
        %v2913 = vadd.s32 %v2908, %v2912
        %v2914 = vadd.s32 %v2913, 536870912
        %v2915 = vshrl.u32 %v2914, 30
        %v2916 = vshll.u32 %v2915, 30
        %v2917 = vsub.s32 %v2913, %v2916
        %vm2918 = vcmp.lt.s32.totalorder %v2917, 0
        %v2919 = vsub.s32 0, %v2917
        %v2920 = vsel %vm2918, %v2919, %v2917
        %v2921 = vclz %v2920
        %v2922 = vsub.s32 %v2921, 2
        %vm2923 = vcmp.gt.s32.totalorder 0, %v2922
        %v2924 = vsel %vm2923, 0, %v2922
        %v2925 = vsub.s32 32, %v2924
        %v2926 = vshll.u32 %v2917, %v2924
        %v2927 = vshrl.u32 %v2909, %v2925
        %v2928 = vor.u32 %v2926, %v2927
        %v2929 = vsub.s32 4294967266, %v2924
        %v2930 = vadd.s32 %v2929, 127
        %v2931 = vshll.u32 %v2930, 23
        %v2932 = vor.u32 4788187, %v2931
        %v2933 = vand.u32 2147483647, %v2932
        %v2935 = vcvt.s32.f32 %v2928
        %v2936 = vmul.f32 %v2935, %v2933
        %v2937 = vxor.u32 %v2936, 2147483648
        %v2938 = vsel %vm2855, %v2937, %v2936
        %v2939 = vsub.s32 4, %v2915
        %v2940 = vsel %vm2855, %v2939, %v2915
        %v2941 = vsel %vm2854, %v365, %v2938
        %v2942 = vsel %vm2854, 0, %v2940
        %v2943 = vcosq.f32.pop %v2941
        %v2944 = vsinq.f32.pop %v2941
        %vm2945 = vweird.f32 %v365
        %v2946 = vadd.s32 %v2942, 3
        %v2947 = vand.u32 %v2946, 3
        %vm2948 = vcmp.lt.s32.totalorder %v2947, 2
        %vm2949 = vcmp.eq.s32.totalorder %v2947, 0
        %v2950 = vxor.u32 %v2944, 2147483648
        %v2951 = vsel %vm2949, %v2943, %v2950
        %vm2952 = vcmp.eq.s32.totalorder %v2947, 2
        %v2953 = vxor.u32 %v2943, 2147483648
        %v2954 = vsel %vm2952, %v2953, %v2944
        %v2955 = vsel %vm2948, %v2951, %v2954
        %v2956 = vsel %vm2945, nan, %v2955
        %v2957 = vand.u32 2147483647, %v366
        %vm2958 = vcmp.le.f32.partialorder %v2957, 0.7853982
        %vm2959 = vcmp.lt.s32.totalorder %v366, 0
        %v2960 = vand.u32 %v366, 2139095040
        %v2961 = vshrl.u32 %v2960, 23
        %v2962 = vsub.s32 %v2961, 127
        %v2963 = vand.u32 2147483647, %v366
        %v2964 = vand.u32 %v2963, 8388607
        %v2965 = vor.u32 %v2964, 8388608
        %v2966 = vsub.s32 0, %v2965
        %v2967 = vadd.s32 %v2962, 1
        %vm2968 = vcmp.gt.s32.totalorder %v2967, 0
        %v2969 = vsel %vm2968, %v2967, 0
        %v2970 = vshrl.u32 %v2969, 5
        %v2971 = vand.u32 %v2969, 31
        %v2972 = vsub.s32 32, %v2971
        %v2973 = vshrl.u32 683565275, %v2972
        %v2974 = vshll.u32 683565275, %v2971
        %v2975 = vshrl.u32 2475754826, %v2972
        %v2976 = vor.u32 %v2974, %v2975
        %v2977 = vshll.u32 2475754826, %v2971
        %v2978 = vshrl.u32 2131351028, %v2972
        %v2979 = vor.u32 %v2977, %v2978
        %v2980 = vshll.u32 2131351028, %v2971
        %v2981 = vshrl.u32 2102212464, %v2972
        %v2982 = vor.u32 %v2980, %v2981
        %v2983 = vshll.u32 2102212464, %v2971
        %v2984 = vshrl.u32 920167782, %v2972
        %v2985 = vor.u32 %v2983, %v2984
        %v2986 = vshll.u32 920167782, %v2971
        %v2987 = vshrl.u32 1326507024, %v2972
        %v2988 = vor.u32 %v2986, %v2987
        %vm2989 = vcmp.lt.s32.totalorder %v2970, 1
        %vm2990 = vcmp.lt.s32.totalorder %v2970, 2
        %vm2991 = vcmp.lt.s32.totalorder %v2970, 3
        %vm2992 = vcmp.lt.s32.totalorder %v2970, 4
        %v2993 = vsel %vm2989, %v2973, %v2976
        %v2994 = vsel %vm2992, %v2982, 2102212464
        %v2995 = vsel %vm2991, %v2979, %v2994
        %v2996 = vsel %vm2990, %v2993, %v2995
        %v2997 = vsel %vm2989, %v2976, %v2979
        %v2998 = vsel %vm2992, %v2985, 920167782
        %v2999 = vsel %vm2991, %v2982, %v2998
        %v3000 = vsel %vm2990, %v2997, %v2999
        %v3001 = vsel %vm2989, %v2979, %v2982
        %v3002 = vsel %vm2992, %v2988, 1326507024
        %v3003 = vsel %vm2991, %v2985, %v3002
        %v3004 = vsel %vm2990, %v3001, %v3003
        %v3005 = vshll.u32 %v2965, 8
        %v3006 = vmul.u32.u64.compose %v3005, %v3004
        %v3007 = vextract.low.u32 %v3006
        %v3008 = vextract.high.u32 %v3006
        %v3009 = vmul.u32.u64.compose %v3005, %v3000
        %v3010 = vextract.low.u32 %v3009
        %v3011 = vextract.high.u32 %v3009
        %v3012 = vmul.u32 %v3005, %v2996
        %v3013 = vadd.s32 %v3008, %v3010
        %vm3014 = vc.u32 %v3008, %v3010
        %v3015 = vadd.s32 %v3011, 1
        %v3016 = vsel %vm3014, %v3015, %v3011
        %v3017 = vadd.s32 %v3012, %v3016
        %v3018 = vadd.s32 %v3017, 536870912
        %v3019 = vshrl.u32 %v3018, 30
        %v3020 = vshll.u32 %v3019, 30
        %v3021 = vsub.s32 %v3017, %v3020
        %vm3022 = vcmp.lt.s32.totalorder %v3021, 0
        %v3023 = vsub.s32 0, %v3021
        %v3024 = vsel %vm3022, %v3023, %v3021
        %v3025 = vclz %v3024
        %v3026 = vsub.s32 %v3025, 2
        %vm3027 = vcmp.gt.s32.totalorder 0, %v3026
        %v3028 = vsel %vm3027, 0, %v3026
        %v3029 = vsub.s32 32, %v3028
        %v3030 = vshll.u32 %v3021, %v3028
        %v3031 = vshrl.u32 %v3013, %v3029
        %v3032 = vor.u32 %v3030, %v3031
        %v3033 = vsub.s32 4294967266, %v3028
        %v3034 = vadd.s32 %v3033, 127
        %v3035 = vshll.u32 %v3034, 23
        %v3036 = vor.u32 4788187, %v3035
        %v3037 = vand.u32 2147483647, %v3036
        %v3039 = vcvt.s32.f32 %v3032
        %v3040 = vmul.f32 %v3039, %v3037
        %v3041 = vxor.u32 %v3040, 2147483648
        %v3042 = vsel %vm2959, %v3041, %v3040
        %v3043 = vsub.s32 4, %v3019
        %v3044 = vsel %vm2959, %v3043, %v3019
        %v3045 = vsel %vm2958, %v366, %v3042
        %v3046 = vsel %vm2958, 0, %v3044
        %v3047 = vcosq.f32.pop %v3045
        %v3048 = vsinq.f32.pop %v3045
        %vm3049 = vweird.f32 %v366
        %v3050 = vadd.s32 %v3046, 3
        %v3051 = vand.u32 %v3050, 3
        %vm3052 = vcmp.lt.s32.totalorder %v3051, 2
        %vm3053 = vcmp.eq.s32.totalorder %v3051, 0
        %v3054 = vxor.u32 %v3048, 2147483648
        %v3055 = vsel %vm3053, %v3047, %v3054
        %vm3056 = vcmp.eq.s32.totalorder %v3051, 2
        %v3057 = vxor.u32 %v3047, 2147483648
        %v3058 = vsel %vm3056, %v3057, %v3048
        %v3059 = vsel %vm3052, %v3055, %v3058
        %v3060 = vsel %vm3049, nan, %v3059
        %v3061 = vand.u32 2147483647, %v367
        %vm3062 = vcmp.le.f32.partialorder %v3061, 0.7853982
        %vm3063 = vcmp.lt.s32.totalorder %v367, 0
        %v3064 = vand.u32 %v367, 2139095040
        %v3065 = vshrl.u32 %v3064, 23
        %v3066 = vsub.s32 %v3065, 127
        %v3067 = vand.u32 2147483647, %v367
        %v3068 = vand.u32 %v3067, 8388607
        %v3069 = vor.u32 %v3068, 8388608
        %v3070 = vsub.s32 0, %v3069
        %v3071 = vadd.s32 %v3066, 1
        %vm3072 = vcmp.gt.s32.totalorder %v3071, 0
        %v3073 = vsel %vm3072, %v3071, 0
        %v3074 = vshrl.u32 %v3073, 5
        %v3075 = vand.u32 %v3073, 31
        %v3076 = vsub.s32 32, %v3075
        %v3077 = vshrl.u32 683565275, %v3076
        %v3078 = vshll.u32 683565275, %v3075
        %v3079 = vshrl.u32 2475754826, %v3076
        %v3080 = vor.u32 %v3078, %v3079
        %v3081 = vshll.u32 2475754826, %v3075
        %v3082 = vshrl.u32 2131351028, %v3076
        %v3083 = vor.u32 %v3081, %v3082
        %v3084 = vshll.u32 2131351028, %v3075
        %v3085 = vshrl.u32 2102212464, %v3076
        %v3086 = vor.u32 %v3084, %v3085
        %v3087 = vshll.u32 2102212464, %v3075
        %v3088 = vshrl.u32 920167782, %v3076
        %v3089 = vor.u32 %v3087, %v3088
        %v3090 = vshll.u32 920167782, %v3075
        %v3091 = vshrl.u32 1326507024, %v3076
        %v3092 = vor.u32 %v3090, %v3091
        %vm3093 = vcmp.lt.s32.totalorder %v3074, 1
        %vm3094 = vcmp.lt.s32.totalorder %v3074, 2
        %vm3095 = vcmp.lt.s32.totalorder %v3074, 3
        %vm3096 = vcmp.lt.s32.totalorder %v3074, 4
        %v3097 = vsel %vm3093, %v3077, %v3080
        %v3098 = vsel %vm3096, %v3086, 2102212464
        %v3099 = vsel %vm3095, %v3083, %v3098
        %v3100 = vsel %vm3094, %v3097, %v3099
        %v3101 = vsel %vm3093, %v3080, %v3083
        %v3102 = vsel %vm3096, %v3089, 920167782
        %v3103 = vsel %vm3095, %v3086, %v3102
        %v3104 = vsel %vm3094, %v3101, %v3103
        %v3105 = vsel %vm3093, %v3083, %v3086
        %v3106 = vsel %vm3096, %v3092, 1326507024
        %v3107 = vsel %vm3095, %v3089, %v3106
        %v3108 = vsel %vm3094, %v3105, %v3107
        %v3109 = vshll.u32 %v3069, 8
        %v3110 = vmul.u32.u64.compose %v3109, %v3108
        %v3111 = vextract.low.u32 %v3110
        %v3112 = vextract.high.u32 %v3110
        %v3113 = vmul.u32.u64.compose %v3109, %v3104
        %v3114 = vextract.low.u32 %v3113
        %v3115 = vextract.high.u32 %v3113
        %v3116 = vmul.u32 %v3109, %v3100
        %v3117 = vadd.s32 %v3112, %v3114
        %vm3118 = vc.u32 %v3112, %v3114
        %v3119 = vadd.s32 %v3115, 1
        %v3120 = vsel %vm3118, %v3119, %v3115
        %v3121 = vadd.s32 %v3116, %v3120
        %v3122 = vadd.s32 %v3121, 536870912
        %v3123 = vshrl.u32 %v3122, 30
        %v3124 = vshll.u32 %v3123, 30
        %v3125 = vsub.s32 %v3121, %v3124
        %vm3126 = vcmp.lt.s32.totalorder %v3125, 0
        %v3127 = vsub.s32 0, %v3125
        %v3128 = vsel %vm3126, %v3127, %v3125
        %v3129 = vclz %v3128
        %v3130 = vsub.s32 %v3129, 2
        %vm3131 = vcmp.gt.s32.totalorder 0, %v3130
        %v3132 = vsel %vm3131, 0, %v3130
        %v3133 = vsub.s32 32, %v3132
        %v3134 = vshll.u32 %v3125, %v3132
        %v3135 = vshrl.u32 %v3117, %v3133
        %v3136 = vor.u32 %v3134, %v3135
        %v3137 = vsub.s32 4294967266, %v3132
        %v3138 = vadd.s32 %v3137, 127
        %v3139 = vshll.u32 %v3138, 23
        %v3140 = vor.u32 4788187, %v3139
        %v3141 = vand.u32 2147483647, %v3140
        %v3143 = vcvt.s32.f32 %v3136
        %v3144 = vmul.f32 %v3143, %v3141
        %v3145 = vxor.u32 %v3144, 2147483648
        %v3146 = vsel %vm3063, %v3145, %v3144
        %v3147 = vsub.s32 4, %v3123
        %v3148 = vsel %vm3063, %v3147, %v3123
        %v3149 = vsel %vm3062, %v367, %v3146
        %v3150 = vsel %vm3062, 0, %v3148
        %v3151 = vcosq.f32.pop %v3149
        %v3152 = vsinq.f32.pop %v3149
        %vm3153 = vweird.f32 %v367
        %v3154 = vadd.s32 %v3150, 3
        %v3155 = vand.u32 %v3154, 3
        %vm3156 = vcmp.lt.s32.totalorder %v3155, 2
        %vm3157 = vcmp.eq.s32.totalorder %v3155, 0
        %v3158 = vxor.u32 %v3152, 2147483648
        %v3159 = vsel %vm3157, %v3151, %v3158
        %vm3160 = vcmp.eq.s32.totalorder %v3155, 2
        %v3161 = vxor.u32 %v3151, 2147483648
        %v3162 = vsel %vm3160, %v3161, %v3152
        %v3163 = vsel %vm3156, %v3159, %v3162
        %v3164 = vsel %vm3153, nan, %v3163
        %v3165 = vand.u32 2147483647, %v368
        %vm3166 = vcmp.le.f32.partialorder %v3165, 0.7853982
        %vm3167 = vcmp.lt.s32.totalorder %v368, 0
        %v3168 = vand.u32 %v368, 2139095040
        %v3169 = vshrl.u32 %v3168, 23
        %v3170 = vsub.s32 %v3169, 127
        %v3171 = vand.u32 2147483647, %v368
        %v3172 = vand.u32 %v3171, 8388607
        %v3173 = vor.u32 %v3172, 8388608
        %v3174 = vsub.s32 0, %v3173
        %v3175 = vadd.s32 %v3170, 1
        %vm3176 = vcmp.gt.s32.totalorder %v3175, 0
        %v3177 = vsel %vm3176, %v3175, 0
        %v3178 = vshrl.u32 %v3177, 5
        %v3179 = vand.u32 %v3177, 31
        %v3180 = vsub.s32 32, %v3179
        %v3181 = vshrl.u32 683565275, %v3180
        %v3182 = vshll.u32 683565275, %v3179
        %v3183 = vshrl.u32 2475754826, %v3180
        %v3184 = vor.u32 %v3182, %v3183
        %v3185 = vshll.u32 2475754826, %v3179
        %v3186 = vshrl.u32 2131351028, %v3180
        %v3187 = vor.u32 %v3185, %v3186
        %v3188 = vshll.u32 2131351028, %v3179
        %v3189 = vshrl.u32 2102212464, %v3180
        %v3190 = vor.u32 %v3188, %v3189
        %v3191 = vshll.u32 2102212464, %v3179
        %v3192 = vshrl.u32 920167782, %v3180
        %v3193 = vor.u32 %v3191, %v3192
        %v3194 = vshll.u32 920167782, %v3179
        %v3195 = vshrl.u32 1326507024, %v3180
        %v3196 = vor.u32 %v3194, %v3195
        %vm3197 = vcmp.lt.s32.totalorder %v3178, 1
        %vm3198 = vcmp.lt.s32.totalorder %v3178, 2
        %vm3199 = vcmp.lt.s32.totalorder %v3178, 3
        %vm3200 = vcmp.lt.s32.totalorder %v3178, 4
        %v3201 = vsel %vm3197, %v3181, %v3184
        %v3202 = vsel %vm3200, %v3190, 2102212464
        %v3203 = vsel %vm3199, %v3187, %v3202
        %v3204 = vsel %vm3198, %v3201, %v3203
        %v3205 = vsel %vm3197, %v3184, %v3187
        %v3206 = vsel %vm3200, %v3193, 920167782
        %v3207 = vsel %vm3199, %v3190, %v3206
        %v3208 = vsel %vm3198, %v3205, %v3207
        %v3209 = vsel %vm3197, %v3187, %v3190
        %v3210 = vsel %vm3200, %v3196, 1326507024
        %v3211 = vsel %vm3199, %v3193, %v3210
        %v3212 = vsel %vm3198, %v3209, %v3211
        %v3213 = vshll.u32 %v3173, 8
        %v3214 = vmul.u32.u64.compose %v3213, %v3212
        %v3215 = vextract.low.u32 %v3214
        %v3216 = vextract.high.u32 %v3214
        %v3217 = vmul.u32.u64.compose %v3213, %v3208
        %v3218 = vextract.low.u32 %v3217
        %v3219 = vextract.high.u32 %v3217
        %v3220 = vmul.u32 %v3213, %v3204
        %v3221 = vadd.s32 %v3216, %v3218
        %vm3222 = vc.u32 %v3216, %v3218
        %v3223 = vadd.s32 %v3219, 1
        %v3224 = vsel %vm3222, %v3223, %v3219
        %v3225 = vadd.s32 %v3220, %v3224
        %v3226 = vadd.s32 %v3225, 536870912
        %v3227 = vshrl.u32 %v3226, 30
        %v3228 = vshll.u32 %v3227, 30
        %v3229 = vsub.s32 %v3225, %v3228
        %vm3230 = vcmp.lt.s32.totalorder %v3229, 0
        %v3231 = vsub.s32 0, %v3229
        %v3232 = vsel %vm3230, %v3231, %v3229
        %v3233 = vclz %v3232
        %v3234 = vsub.s32 %v3233, 2
        %vm3235 = vcmp.gt.s32.totalorder 0, %v3234
        %v3236 = vsel %vm3235, 0, %v3234
        %v3237 = vsub.s32 32, %v3236
        %v3238 = vshll.u32 %v3229, %v3236
        %v3239 = vshrl.u32 %v3221, %v3237
        %v3240 = vor.u32 %v3238, %v3239
        %v3241 = vsub.s32 4294967266, %v3236
        %v3242 = vadd.s32 %v3241, 127
        %v3243 = vshll.u32 %v3242, 23
        %v3244 = vor.u32 4788187, %v3243
        %v3245 = vand.u32 2147483647, %v3244
        %v3247 = vcvt.s32.f32 %v3240
        %v3248 = vmul.f32 %v3247, %v3245
        %v3249 = vxor.u32 %v3248, 2147483648
        %v3250 = vsel %vm3167, %v3249, %v3248
        %v3251 = vsub.s32 4, %v3227
        %v3252 = vsel %vm3167, %v3251, %v3227
        %v3253 = vsel %vm3166, %v368, %v3250
        %v3254 = vsel %vm3166, 0, %v3252
        %v3255 = vcosq.f32.pop %v3253
        %v3256 = vsinq.f32.pop %v3253
        %vm3257 = vweird.f32 %v368
        %v3258 = vadd.s32 %v3254, 3
        %v3259 = vand.u32 %v3258, 3
        %vm3260 = vcmp.lt.s32.totalorder %v3259, 2
        %vm3261 = vcmp.eq.s32.totalorder %v3259, 0
        %v3262 = vxor.u32 %v3256, 2147483648
        %v3263 = vsel %vm3261, %v3255, %v3262
        %vm3264 = vcmp.eq.s32.totalorder %v3259, 2
        %v3265 = vxor.u32 %v3255, 2147483648
        %v3266 = vsel %vm3264, %v3265, %v3256
        %v3267 = vsel %vm3260, %v3263, %v3266
        %v3268 = vsel %vm3257, nan, %v3267
        %v3269 = vand.u32 2147483647, %v369
        %vm3270 = vcmp.le.f32.partialorder %v3269, 0.7853982
        %vm3271 = vcmp.lt.s32.totalorder %v369, 0
        %v3272 = vand.u32 %v369, 2139095040
        %v3273 = vshrl.u32 %v3272, 23
        %v3274 = vsub.s32 %v3273, 127
        %v3275 = vand.u32 2147483647, %v369
        %v3276 = vand.u32 %v3275, 8388607
        %v3277 = vor.u32 %v3276, 8388608
        %v3278 = vsub.s32 0, %v3277
        %v3279 = vadd.s32 %v3274, 1
        %vm3280 = vcmp.gt.s32.totalorder %v3279, 0
        %v3281 = vsel %vm3280, %v3279, 0
        %v3282 = vshrl.u32 %v3281, 5
        %v3283 = vand.u32 %v3281, 31
        %v3284 = vsub.s32 32, %v3283
        %v3285 = vshrl.u32 683565275, %v3284
        %v3286 = vshll.u32 683565275, %v3283
        %v3287 = vshrl.u32 2475754826, %v3284
        %v3288 = vor.u32 %v3286, %v3287
        %v3289 = vshll.u32 2475754826, %v3283
        %v3290 = vshrl.u32 2131351028, %v3284
        %v3291 = vor.u32 %v3289, %v3290
        %v3292 = vshll.u32 2131351028, %v3283
        %v3293 = vshrl.u32 2102212464, %v3284
        %v3294 = vor.u32 %v3292, %v3293
        %v3295 = vshll.u32 2102212464, %v3283
        %v3296 = vshrl.u32 920167782, %v3284
        %v3297 = vor.u32 %v3295, %v3296
        %v3298 = vshll.u32 920167782, %v3283
        %v3299 = vshrl.u32 1326507024, %v3284
        %v3300 = vor.u32 %v3298, %v3299
        %vm3301 = vcmp.lt.s32.totalorder %v3282, 1
        %vm3302 = vcmp.lt.s32.totalorder %v3282, 2
        %vm3303 = vcmp.lt.s32.totalorder %v3282, 3
        %vm3304 = vcmp.lt.s32.totalorder %v3282, 4
        %v3305 = vsel %vm3301, %v3285, %v3288
        %v3306 = vsel %vm3304, %v3294, 2102212464
        %v3307 = vsel %vm3303, %v3291, %v3306
        %v3308 = vsel %vm3302, %v3305, %v3307
        %v3309 = vsel %vm3301, %v3288, %v3291
        %v3310 = vsel %vm3304, %v3297, 920167782
        %v3311 = vsel %vm3303, %v3294, %v3310
        %v3312 = vsel %vm3302, %v3309, %v3311
        %v3313 = vsel %vm3301, %v3291, %v3294
        %v3314 = vsel %vm3304, %v3300, 1326507024
        %v3315 = vsel %vm3303, %v3297, %v3314
        %v3316 = vsel %vm3302, %v3313, %v3315
        %v3317 = vshll.u32 %v3277, 8
        %v3318 = vmul.u32.u64.compose %v3317, %v3316
        %v3319 = vextract.low.u32 %v3318
        %v3320 = vextract.high.u32 %v3318
        %v3321 = vmul.u32.u64.compose %v3317, %v3312
        %v3322 = vextract.low.u32 %v3321
        %v3323 = vextract.high.u32 %v3321
        %v3324 = vmul.u32 %v3317, %v3308
        %v3325 = vadd.s32 %v3320, %v3322
        %vm3326 = vc.u32 %v3320, %v3322
        %v3327 = vadd.s32 %v3323, 1
        %v3328 = vsel %vm3326, %v3327, %v3323
        %v3329 = vadd.s32 %v3324, %v3328
        %v3330 = vadd.s32 %v3329, 536870912
        %v3331 = vshrl.u32 %v3330, 30
        %v3332 = vshll.u32 %v3331, 30
        %v3333 = vsub.s32 %v3329, %v3332
        %vm3334 = vcmp.lt.s32.totalorder %v3333, 0
        %v3335 = vsub.s32 0, %v3333
        %v3336 = vsel %vm3334, %v3335, %v3333
        %v3337 = vclz %v3336
        %v3338 = vsub.s32 %v3337, 2
        %vm3339 = vcmp.gt.s32.totalorder 0, %v3338
        %v3340 = vsel %vm3339, 0, %v3338
        %v3341 = vsub.s32 32, %v3340
        %v3342 = vshll.u32 %v3333, %v3340
        %v3343 = vshrl.u32 %v3325, %v3341
        %v3344 = vor.u32 %v3342, %v3343
        %v3345 = vsub.s32 4294967266, %v3340
        %v3346 = vadd.s32 %v3345, 127
        %v3347 = vshll.u32 %v3346, 23
        %v3348 = vor.u32 4788187, %v3347
        %v3349 = vand.u32 2147483647, %v3348
        %v3351 = vcvt.s32.f32 %v3344
        %v3352 = vmul.f32 %v3351, %v3349
        %v3353 = vxor.u32 %v3352, 2147483648
        %v3354 = vsel %vm3271, %v3353, %v3352
        %v3355 = vsub.s32 4, %v3331
        %v3356 = vsel %vm3271, %v3355, %v3331
        %v3357 = vsel %vm3270, %v369, %v3354
        %v3358 = vsel %vm3270, 0, %v3356
        %v3359 = vcosq.f32.pop %v3357
        %v3360 = vsinq.f32.pop %v3357
        %vm3361 = vweird.f32 %v369
        %v3362 = vadd.s32 %v3358, 3
        %v3363 = vand.u32 %v3362, 3
        %vm3364 = vcmp.lt.s32.totalorder %v3363, 2
        %vm3365 = vcmp.eq.s32.totalorder %v3363, 0
        %v3366 = vxor.u32 %v3360, 2147483648
        %v3367 = vsel %vm3365, %v3359, %v3366
        %vm3368 = vcmp.eq.s32.totalorder %v3363, 2
        %v3369 = vxor.u32 %v3359, 2147483648
        %v3370 = vsel %vm3368, %v3369, %v3360
        %v3371 = vsel %vm3364, %v3367, %v3370
        %v3372 = vsel %vm3361, nan, %v3371
        %v3373 = vand.u32 2147483647, %v370
        %vm3374 = vcmp.le.f32.partialorder %v3373, 0.7853982
        %vm3375 = vcmp.lt.s32.totalorder %v370, 0
        %v3376 = vand.u32 %v370, 2139095040
        %v3377 = vshrl.u32 %v3376, 23
        %v3378 = vsub.s32 %v3377, 127
        %v3379 = vand.u32 2147483647, %v370
        %v3380 = vand.u32 %v3379, 8388607
        %v3381 = vor.u32 %v3380, 8388608
        %v3382 = vsub.s32 0, %v3381
        %v3383 = vadd.s32 %v3378, 1
        %vm3384 = vcmp.gt.s32.totalorder %v3383, 0
        %v3385 = vsel %vm3384, %v3383, 0
        %v3386 = vshrl.u32 %v3385, 5
        %v3387 = vand.u32 %v3385, 31
        %v3388 = vsub.s32 32, %v3387
        %v3389 = vshrl.u32 683565275, %v3388
        %v3390 = vshll.u32 683565275, %v3387
        %v3391 = vshrl.u32 2475754826, %v3388
        %v3392 = vor.u32 %v3390, %v3391
        %v3393 = vshll.u32 2475754826, %v3387
        %v3394 = vshrl.u32 2131351028, %v3388
        %v3395 = vor.u32 %v3393, %v3394
        %v3396 = vshll.u32 2131351028, %v3387
        %v3397 = vshrl.u32 2102212464, %v3388
        %v3398 = vor.u32 %v3396, %v3397
        %v3399 = vshll.u32 2102212464, %v3387
        %v3400 = vshrl.u32 920167782, %v3388
        %v3401 = vor.u32 %v3399, %v3400
        %v3402 = vshll.u32 920167782, %v3387
        %v3403 = vshrl.u32 1326507024, %v3388
        %v3404 = vor.u32 %v3402, %v3403
        %vm3405 = vcmp.lt.s32.totalorder %v3386, 1
        %vm3406 = vcmp.lt.s32.totalorder %v3386, 2
        %vm3407 = vcmp.lt.s32.totalorder %v3386, 3
        %vm3408 = vcmp.lt.s32.totalorder %v3386, 4
        %v3409 = vsel %vm3405, %v3389, %v3392
        %v3410 = vsel %vm3408, %v3398, 2102212464
        %v3411 = vsel %vm3407, %v3395, %v3410
        %v3412 = vsel %vm3406, %v3409, %v3411
        %v3413 = vsel %vm3405, %v3392, %v3395
        %v3414 = vsel %vm3408, %v3401, 920167782
        %v3415 = vsel %vm3407, %v3398, %v3414
        %v3416 = vsel %vm3406, %v3413, %v3415
        %v3417 = vsel %vm3405, %v3395, %v3398
        %v3418 = vsel %vm3408, %v3404, 1326507024
        %v3419 = vsel %vm3407, %v3401, %v3418
        %v3420 = vsel %vm3406, %v3417, %v3419
        %v3421 = vshll.u32 %v3381, 8
        %v3422 = vmul.u32.u64.compose %v3421, %v3420
        %v3423 = vextract.low.u32 %v3422
        %v3424 = vextract.high.u32 %v3422
        %v3425 = vmul.u32.u64.compose %v3421, %v3416
        %v3426 = vextract.low.u32 %v3425
        %v3427 = vextract.high.u32 %v3425
        %v3428 = vmul.u32 %v3421, %v3412
        %v3429 = vadd.s32 %v3424, %v3426
        %vm3430 = vc.u32 %v3424, %v3426
        %v3431 = vadd.s32 %v3427, 1
        %v3432 = vsel %vm3430, %v3431, %v3427
        %v3433 = vadd.s32 %v3428, %v3432
        %v3434 = vadd.s32 %v3433, 536870912
        %v3435 = vshrl.u32 %v3434, 30
        %v3436 = vshll.u32 %v3435, 30
        %v3437 = vsub.s32 %v3433, %v3436
        %vm3438 = vcmp.lt.s32.totalorder %v3437, 0
        %v3439 = vsub.s32 0, %v3437
        %v3440 = vsel %vm3438, %v3439, %v3437
        %v3441 = vclz %v3440
        %v3442 = vsub.s32 %v3441, 2
        %vm3443 = vcmp.gt.s32.totalorder 0, %v3442
        %v3444 = vsel %vm3443, 0, %v3442
        %v3445 = vsub.s32 32, %v3444
        %v3446 = vshll.u32 %v3437, %v3444
        %v3447 = vshrl.u32 %v3429, %v3445
        %v3448 = vor.u32 %v3446, %v3447
        %v3449 = vsub.s32 4294967266, %v3444
        %v3450 = vadd.s32 %v3449, 127
        %v3451 = vshll.u32 %v3450, 23
        %v3452 = vor.u32 4788187, %v3451
        %v3453 = vand.u32 2147483647, %v3452
        %v3455 = vcvt.s32.f32 %v3448
        %v3456 = vmul.f32 %v3455, %v3453
        %v3457 = vxor.u32 %v3456, 2147483648
        %v3458 = vsel %vm3375, %v3457, %v3456
        %v3459 = vsub.s32 4, %v3435
        %v3460 = vsel %vm3375, %v3459, %v3435
        %v3461 = vsel %vm3374, %v370, %v3458
        %v3462 = vsel %vm3374, 0, %v3460
        %v3463 = vcosq.f32.pop %v3461
        %v3464 = vsinq.f32.pop %v3461
        %vm3465 = vweird.f32 %v370
        %v3466 = vadd.s32 %v3462, 3
        %v3467 = vand.u32 %v3466, 3
        %vm3468 = vcmp.lt.s32.totalorder %v3467, 2
        %vm3469 = vcmp.eq.s32.totalorder %v3467, 0
        %v3470 = vxor.u32 %v3464, 2147483648
        %v3471 = vsel %vm3469, %v3463, %v3470
        %vm3472 = vcmp.eq.s32.totalorder %v3467, 2
        %v3473 = vxor.u32 %v3463, 2147483648
        %v3474 = vsel %vm3472, %v3473, %v3464
        %v3475 = vsel %vm3468, %v3471, %v3474
        %v3476 = vsel %vm3465, nan, %v3475
        %v3477 = vand.u32 2147483647, %v371
        %vm3478 = vcmp.le.f32.partialorder %v3477, 0.7853982
        %vm3479 = vcmp.lt.s32.totalorder %v371, 0
        %v3480 = vand.u32 %v371, 2139095040
        %v3481 = vshrl.u32 %v3480, 23
        %v3482 = vsub.s32 %v3481, 127
        %v3483 = vand.u32 2147483647, %v371
        %v3484 = vand.u32 %v3483, 8388607
        %v3485 = vor.u32 %v3484, 8388608
        %v3486 = vsub.s32 0, %v3485
        %v3487 = vadd.s32 %v3482, 1
        %vm3488 = vcmp.gt.s32.totalorder %v3487, 0
        %v3489 = vsel %vm3488, %v3487, 0
        %v3490 = vshrl.u32 %v3489, 5
        %v3491 = vand.u32 %v3489, 31
        %v3492 = vsub.s32 32, %v3491
        %v3493 = vshrl.u32 683565275, %v3492
        %v3494 = vshll.u32 683565275, %v3491
        %v3495 = vshrl.u32 2475754826, %v3492
        %v3496 = vor.u32 %v3494, %v3495
        %v3497 = vshll.u32 2475754826, %v3491
        %v3498 = vshrl.u32 2131351028, %v3492
        %v3499 = vor.u32 %v3497, %v3498
        %v3500 = vshll.u32 2131351028, %v3491
        %v3501 = vshrl.u32 2102212464, %v3492
        %v3502 = vor.u32 %v3500, %v3501
        %v3503 = vshll.u32 2102212464, %v3491
        %v3504 = vshrl.u32 920167782, %v3492
        %v3505 = vor.u32 %v3503, %v3504
        %v3506 = vshll.u32 920167782, %v3491
        %v3507 = vshrl.u32 1326507024, %v3492
        %v3508 = vor.u32 %v3506, %v3507
        %vm3509 = vcmp.lt.s32.totalorder %v3490, 1
        %vm3510 = vcmp.lt.s32.totalorder %v3490, 2
        %vm3511 = vcmp.lt.s32.totalorder %v3490, 3
        %vm3512 = vcmp.lt.s32.totalorder %v3490, 4
        %v3513 = vsel %vm3509, %v3493, %v3496
        %v3514 = vsel %vm3512, %v3502, 2102212464
        %v3515 = vsel %vm3511, %v3499, %v3514
        %v3516 = vsel %vm3510, %v3513, %v3515
        %v3517 = vsel %vm3509, %v3496, %v3499
        %v3518 = vsel %vm3512, %v3505, 920167782
        %v3519 = vsel %vm3511, %v3502, %v3518
        %v3520 = vsel %vm3510, %v3517, %v3519
        %v3521 = vsel %vm3509, %v3499, %v3502
        %v3522 = vsel %vm3512, %v3508, 1326507024
        %v3523 = vsel %vm3511, %v3505, %v3522
        %v3524 = vsel %vm3510, %v3521, %v3523
        %v3525 = vshll.u32 %v3485, 8
        %v3526 = vmul.u32.u64.compose %v3525, %v3524
        %v3527 = vextract.low.u32 %v3526
        %v3528 = vextract.high.u32 %v3526
        %v3529 = vmul.u32.u64.compose %v3525, %v3520
        %v3530 = vextract.low.u32 %v3529
        %v3531 = vextract.high.u32 %v3529
        %v3532 = vmul.u32 %v3525, %v3516
        %v3533 = vadd.s32 %v3528, %v3530
        %vm3534 = vc.u32 %v3528, %v3530
        %v3535 = vadd.s32 %v3531, 1
        %v3536 = vsel %vm3534, %v3535, %v3531
        %v3537 = vadd.s32 %v3532, %v3536
        %v3538 = vadd.s32 %v3537, 536870912
        %v3539 = vshrl.u32 %v3538, 30
        %v3540 = vshll.u32 %v3539, 30
        %v3541 = vsub.s32 %v3537, %v3540
        %vm3542 = vcmp.lt.s32.totalorder %v3541, 0
        %v3543 = vsub.s32 0, %v3541
        %v3544 = vsel %vm3542, %v3543, %v3541
        %v3545 = vclz %v3544
        %v3546 = vsub.s32 %v3545, 2
        %vm3547 = vcmp.gt.s32.totalorder 0, %v3546
        %v3548 = vsel %vm3547, 0, %v3546
        %v3549 = vsub.s32 32, %v3548
        %v3550 = vshll.u32 %v3541, %v3548
        %v3551 = vshrl.u32 %v3533, %v3549
        %v3552 = vor.u32 %v3550, %v3551
        %v3553 = vsub.s32 4294967266, %v3548
        %v3554 = vadd.s32 %v3553, 127
        %v3555 = vshll.u32 %v3554, 23
        %v3556 = vor.u32 4788187, %v3555
        %v3557 = vand.u32 2147483647, %v3556
        %v3559 = vcvt.s32.f32 %v3552
        %v3560 = vmul.f32 %v3559, %v3557
        %v3561 = vxor.u32 %v3560, 2147483648
        %v3562 = vsel %vm3479, %v3561, %v3560
        %v3563 = vsub.s32 4, %v3539
        %v3564 = vsel %vm3479, %v3563, %v3539
        %v3565 = vsel %vm3478, %v371, %v3562
        %v3566 = vsel %vm3478, 0, %v3564
        %v3567 = vcosq.f32.pop %v3565
        %v3568 = vsinq.f32.pop %v3565
        %vm3569 = vweird.f32 %v371
        %v3570 = vadd.s32 %v3566, 3
        %v3571 = vand.u32 %v3570, 3
        %vm3572 = vcmp.lt.s32.totalorder %v3571, 2
        %vm3573 = vcmp.eq.s32.totalorder %v3571, 0
        %v3574 = vxor.u32 %v3568, 2147483648
        %v3575 = vsel %vm3573, %v3567, %v3574
        %vm3576 = vcmp.eq.s32.totalorder %v3571, 2
        %v3577 = vxor.u32 %v3567, 2147483648
        %v3578 = vsel %vm3576, %v3577, %v3568
        %v3579 = vsel %vm3572, %v3575, %v3578
        %v3580 = vsel %vm3569, nan, %v3579
        %v3581 = vand.u32 2147483647, %v372
        %vm3582 = vcmp.le.f32.partialorder %v3581, 0.7853982
        %vm3583 = vcmp.lt.s32.totalorder %v372, 0
        %v3584 = vand.u32 %v372, 2139095040
        %v3585 = vshrl.u32 %v3584, 23
        %v3586 = vsub.s32 %v3585, 127
        %v3587 = vand.u32 2147483647, %v372
        %v3588 = vand.u32 %v3587, 8388607
        %v3589 = vor.u32 %v3588, 8388608
        %v3590 = vsub.s32 0, %v3589
        %v3591 = vadd.s32 %v3586, 1
        %vm3592 = vcmp.gt.s32.totalorder %v3591, 0
        %v3593 = vsel %vm3592, %v3591, 0
        %v3594 = vshrl.u32 %v3593, 5
        %v3595 = vand.u32 %v3593, 31
        %v3596 = vsub.s32 32, %v3595
        %v3597 = vshrl.u32 683565275, %v3596
        %v3598 = vshll.u32 683565275, %v3595
        %v3599 = vshrl.u32 2475754826, %v3596
        %v3600 = vor.u32 %v3598, %v3599
        %v3601 = vshll.u32 2475754826, %v3595
        %v3602 = vshrl.u32 2131351028, %v3596
        %v3603 = vor.u32 %v3601, %v3602
        %v3604 = vshll.u32 2131351028, %v3595
        %v3605 = vshrl.u32 2102212464, %v3596
        %v3606 = vor.u32 %v3604, %v3605
        %v3607 = vshll.u32 2102212464, %v3595
        %v3608 = vshrl.u32 920167782, %v3596
        %v3609 = vor.u32 %v3607, %v3608
        %v3610 = vshll.u32 920167782, %v3595
        %v3611 = vshrl.u32 1326507024, %v3596
        %v3612 = vor.u32 %v3610, %v3611
        %vm3613 = vcmp.lt.s32.totalorder %v3594, 1
        %vm3614 = vcmp.lt.s32.totalorder %v3594, 2
        %vm3615 = vcmp.lt.s32.totalorder %v3594, 3
        %vm3616 = vcmp.lt.s32.totalorder %v3594, 4
        %v3617 = vsel %vm3613, %v3597, %v3600
        %v3618 = vsel %vm3616, %v3606, 2102212464
        %v3619 = vsel %vm3615, %v3603, %v3618
        %v3620 = vsel %vm3614, %v3617, %v3619
        %v3621 = vsel %vm3613, %v3600, %v3603
        %v3622 = vsel %vm3616, %v3609, 920167782
        %v3623 = vsel %vm3615, %v3606, %v3622
        %v3624 = vsel %vm3614, %v3621, %v3623
        %v3625 = vsel %vm3613, %v3603, %v3606
        %v3626 = vsel %vm3616, %v3612, 1326507024
        %v3627 = vsel %vm3615, %v3609, %v3626
        %v3628 = vsel %vm3614, %v3625, %v3627
        %v3629 = vshll.u32 %v3589, 8
        %v3630 = vmul.u32.u64.compose %v3629, %v3628
        %v3631 = vextract.low.u32 %v3630
        %v3632 = vextract.high.u32 %v3630
        %v3633 = vmul.u32.u64.compose %v3629, %v3624
        %v3634 = vextract.low.u32 %v3633
        %v3635 = vextract.high.u32 %v3633
        %v3636 = vmul.u32 %v3629, %v3620
        %v3637 = vadd.s32 %v3632, %v3634
        %vm3638 = vc.u32 %v3632, %v3634
        %v3639 = vadd.s32 %v3635, 1
        %v3640 = vsel %vm3638, %v3639, %v3635
        %v3641 = vadd.s32 %v3636, %v3640
        %v3642 = vadd.s32 %v3641, 536870912
        %v3643 = vshrl.u32 %v3642, 30
        %v3644 = vshll.u32 %v3643, 30
        %v3645 = vsub.s32 %v3641, %v3644
        %vm3646 = vcmp.lt.s32.totalorder %v3645, 0
        %v3647 = vsub.s32 0, %v3645
        %v3648 = vsel %vm3646, %v3647, %v3645
        %v3649 = vclz %v3648
        %v3650 = vsub.s32 %v3649, 2
        %vm3651 = vcmp.gt.s32.totalorder 0, %v3650
        %v3652 = vsel %vm3651, 0, %v3650
        %v3653 = vsub.s32 32, %v3652
        %v3654 = vshll.u32 %v3645, %v3652
        %v3655 = vshrl.u32 %v3637, %v3653
        %v3656 = vor.u32 %v3654, %v3655
        %v3657 = vsub.s32 4294967266, %v3652
        %v3658 = vadd.s32 %v3657, 127
        %v3659 = vshll.u32 %v3658, 23
        %v3660 = vor.u32 4788187, %v3659
        %v3661 = vand.u32 2147483647, %v3660
        %v3663 = vcvt.s32.f32 %v3656
        %v3664 = vmul.f32 %v3663, %v3661
        %v3665 = vxor.u32 %v3664, 2147483648
        %v3666 = vsel %vm3583, %v3665, %v3664
        %v3667 = vsub.s32 4, %v3643
        %v3668 = vsel %vm3583, %v3667, %v3643
        %v3669 = vsel %vm3582, %v372, %v3666
        %v3670 = vsel %vm3582, 0, %v3668
        %v3671 = vcosq.f32.pop %v3669
        %v3672 = vsinq.f32.pop %v3669
        %vm3673 = vweird.f32 %v372
        %v3674 = vadd.s32 %v3670, 3
        %v3675 = vand.u32 %v3674, 3
        %vm3676 = vcmp.lt.s32.totalorder %v3675, 2
        %vm3677 = vcmp.eq.s32.totalorder %v3675, 0
        %v3678 = vxor.u32 %v3672, 2147483648
        %v3679 = vsel %vm3677, %v3671, %v3678
        %vm3680 = vcmp.eq.s32.totalorder %v3675, 2
        %v3681 = vxor.u32 %v3671, 2147483648
        %v3682 = vsel %vm3680, %v3681, %v3672
        %v3683 = vsel %vm3676, %v3679, %v3682
        %v3684 = vsel %vm3673, nan, %v3683
        %3701 = vrot.lane.b32.xlu0 %v2124, 64
        %v3702 = vpop.permute.xlu0 %3701
        %3703 = vrot.lane.b32.xlu0 %v2228, 64
        %v3704 = vpop.permute.xlu0 %3703
        %3705 = vrot.lane.b32.xlu0 %v2332, 64
        %v3706 = vpop.permute.xlu0 %3705
        %3707 = vrot.lane.b32.xlu0 %v2436, 64
        %v3708 = vpop.permute.xlu0 %3707
        %3709 = vrot.lane.b32.xlu0 %v2540, 64
        %v3710 = vpop.permute.xlu0 %3709
        %3711 = vrot.lane.b32.xlu0 %v2644, 64
        %v3712 = vpop.permute.xlu0 %3711
        %3713 = vrot.lane.b32.xlu0 %v2748, 64
        %v3714 = vpop.permute.xlu0 %3713
        %3715 = vrot.lane.b32.xlu0 %v2852, 64
        %v3716 = vpop.permute.xlu0 %3715
        %3717 = vrot.lane.b32.xlu0 %v2956, 64
        %v3718 = vpop.permute.xlu0 %3717
        %3719 = vrot.lane.b32.xlu0 %v3060, 64
        %v3720 = vpop.permute.xlu0 %3719
        %3721 = vrot.lane.b32.xlu0 %v3164, 64
        %v3722 = vpop.permute.xlu0 %3721
        %3723 = vrot.lane.b32.xlu0 %v3268, 64
        %v3724 = vpop.permute.xlu0 %3723
        %3725 = vrot.lane.b32.xlu0 %v3372, 64
        %v3726 = vpop.permute.xlu0 %3725
        %3727 = vrot.lane.b32.xlu0 %v3476, 64
        %v3728 = vpop.permute.xlu0 %3727
        %3729 = vrot.lane.b32.xlu0 %v3580, 64
        %v3730 = vpop.permute.xlu0 %3729
        %3731 = vrot.lane.b32.xlu0 %v3684, 64
        %v3732 = vpop.permute.xlu0 %3731
        %vm3749 = vcmask 523264
        %v3750 = vsel %vm3749, %v475, %v3702
        %v3751 = vsel %vm3749, %v578, %v3704
        %v3752 = vsel %vm3749, %v681, %v3706
        %v3753 = vsel %vm3749, %v784, %v3708
        %v3754 = vsel %vm3749, %v887, %v3710
        %v3755 = vsel %vm3749, %v990, %v3712
        %v3756 = vsel %vm3749, %v1093, %v3714
        %v3757 = vsel %vm3749, %v1196, %v3716
        %v3758 = vsel %vm3749, %v1299, %v3718
        %v3759 = vsel %vm3749, %v1402, %v3720
        %v3760 = vsel %vm3749, %v1505, %v3722
        %v3761 = vsel %vm3749, %v1608, %v3724
        %v3762 = vsel %vm3749, %v1711, %v3726
        %v3763 = vsel %vm3749, %v1814, %v3728
        %v3764 = vsel %vm3749, %v1917, %v3730
        %v3765 = vsel %vm3749, %v2020, %v3732
        %v3766 = vpack.c.bf16 %v3751, %v3750
        %v3767 = vpack.c.bf16 %v3753, %v3752
        %v3768 = vpack.c.bf16 %v3755, %v3754
        %v3769 = vpack.c.bf16 %v3757, %v3756
        %v3770 = vpack.c.bf16 %v3759, %v3758
        %v3771 = vpack.c.bf16 %v3761, %v3760
        %v3772 = vpack.c.bf16 %v3763, %v3762
        %v3773 = vpack.c.bf16 %v3765, %v3764
        %v3774 = vld [vmem:[%s2] sm:$0xf]
        %v3775 = vld [vmem:[%s2 + $0x4] sm:$0xf]
        %v3776 = vld [vmem:[%s2 + $0x8] sm:$0xf]
        %v3777 = vld [vmem:[%s2 + $0xc] sm:$0xf]
        %v3778 = vld [vmem:[%s2 + $0x10] sm:$0xf]
        %v3779 = vld [vmem:[%s2 + $0x14] sm:$0xf]
        %v3780 = vld [vmem:[%s2 + $0x18] sm:$0xf]
        %v3781 = vld [vmem:[%s2 + $0x1c] sm:$0xf]
        %v3782 = vld [vmem:[%s2 + $0x20] sm:$0xf]
        %v3783 = vld [vmem:[%s2 + $0x24] sm:$0xf]
        %v3784 = vld [vmem:[%s2 + $0x28] sm:$0xf]
        %v3785 = vld [vmem:[%s2 + $0x2c] sm:$0xf]
        %v3786 = vld [vmem:[%s2 + $0x30] sm:$0xf]
        %v3787 = vld [vmem:[%s2 + $0x34] sm:$0xf]
        %v3788 = vld [vmem:[%s2 + $0x38] sm:$0xf]
        %v3789 = vld [vmem:[%s2 + $0x3c] sm:$0xf]
        %v3790 = vld [vmem:[%s3] sm:$0x1]
        %v3792 = vlaneseq
        %v3793 = vshrl.u32 %v3792, 7
        %v3794 = vsub.s32 0, %v3793
        %v3795 = vrot.slane %v3790, %v3794
        %v3813 = vunpack.c.l.b16 %v3774
        %v3814 = vunpack.c.l.b16 %v3775
        %v3815 = vunpack.c.l.b16 %v3776
        %v3816 = vunpack.c.l.b16 %v3777
        %v3817 = vunpack.c.l.b16 %v3778
        %v3818 = vunpack.c.l.b16 %v3779
        %v3819 = vunpack.c.l.b16 %v3780
        %v3820 = vunpack.c.l.b16 %v3781
        %v3821 = vunpack.c.l.b16 %v3782
        %v3822 = vunpack.c.l.b16 %v3783
        %v3823 = vunpack.c.l.b16 %v3784
        %v3824 = vunpack.c.l.b16 %v3785
        %v3825 = vunpack.c.l.b16 %v3786
        %v3826 = vunpack.c.l.b16 %v3787
        %v3827 = vunpack.c.l.b16 %v3788
        %v3828 = vunpack.c.l.b16 %v3789
        %v3829 = vpack.c.b16 %v3814, %v3813
        %v3830 = vpack.c.b16 %v3816, %v3815
        %v3831 = vpack.c.b16 %v3818, %v3817
        %v3832 = vpack.c.b16 %v3820, %v3819
        %v3833 = vpack.c.b16 %v3822, %v3821
        %v3834 = vpack.c.b16 %v3824, %v3823
        %v3835 = vpack.c.b16 %v3826, %v3825
        %v3836 = vpack.c.b16 %v3828, %v3827
        %3845 = vmatprep.subr.bf16.mxu0 0
        %3846 = vmatpush1.bf16.msra.mxu0 %v3829
        %3847 = vmatprep.subr.bf16.mxu0 0
        %3848 = vmatpush1.bf16.msra.mxu0 %v3830
        %3849 = vmatprep.subr.bf16.mxu0 0
        %3850 = vmatpush1.bf16.msra.mxu0 %v3831
        %3851 = vmatprep.subr.bf16.mxu0 0
        %3852 = vmatpush1.bf16.msra.mxu0 %v3832
        %3853 = vmatprep.subr.bf16.mxu0 0
        %3854 = vmatpush1.bf16.msra.mxu0 %v3833
        %3855 = vmatprep.subr.bf16.mxu0 0
        %3856 = vmatpush1.bf16.msra.mxu0 %v3834
        %3857 = vmatprep.subr.bf16.mxu0 0
        %3858 = vmatpush1.bf16.msra.mxu0 %v3835
        %3859 = vmatprep.subr.bf16.mxu0 0
        %3860 = vmatpush1.bf16.msra.mxu0 %v3836
        %3861 = vmatprep.subr.bf16.mxu0 0
        %3862 = vmatpush1.bf16.msra.mxu0 0
        %3863 = vmatprep.subr.bf16.mxu0 0
        %3864 = vmatpush1.bf16.msra.mxu0 0
        %3865 = vmatprep.subr.bf16.mxu0 0
        %3866 = vmatpush1.bf16.msra.mxu0 0
        %3867 = vmatprep.subr.bf16.mxu0 0
        %3868 = vmatpush1.bf16.msra.mxu0 0
        %3869 = vmatprep.subr.bf16.mxu0 0
        %3870 = vmatpush1.bf16.msra.mxu0 0
        %3871 = vmatprep.subr.bf16.mxu0 0
        %3872 = vmatpush1.bf16.msra.mxu0 0
        %3873 = vmatprep.subr.bf16.mxu0 0
        %3874 = vmatpush1.bf16.msra.mxu0 0
        %3875 = vmatprep.subr.bf16.mxu0 0
        %3876 = vmatpush1.bf16.msra.mxu0 0
        %3877 = vmatprep.mubr.bf16.mxu0 0
        %3878 = vmatmul.mubr.bf16.gmra.mrb[0].mxu0 %v3766
        %v3879 = vpop.f32.mrb[0].mxu0
        %v3880 = vadd.f32 %v3795, %v3879
        %v3881 = vpop.f32.mrb[0].mxu0
        %v3882 = vpop.f32.mrb[0].mxu0
        %v3883 = vadd.f32 %v3795, %v3882
        %v3884 = vpop.f32.mrb[0].mxu0
        %3885 = vmatprep.mubr.bf16.mxu0 0
        %3886 = vmatmul.mubr.bf16.gmra.mrb[0].mxu0 %v3767
        %v3887 = vpop.f32.mrb[0].mxu0
        %v3888 = vadd.f32 %v3795, %v3887
        %v3889 = vpop.f32.mrb[0].mxu0
        %v3890 = vpop.f32.mrb[0].mxu0
        %v3891 = vadd.f32 %v3795, %v3890
        %v3892 = vpop.f32.mrb[0].mxu0
        %3893 = vmatprep.mubr.bf16.mxu0 0
        %3894 = vmatmul.mubr.bf16.gmra.mrb[0].mxu0 %v3768
        %v3895 = vpop.f32.mrb[0].mxu0
        %v3896 = vadd.f32 %v3795, %v3895
        %v3897 = vpop.f32.mrb[0].mxu0
        %v3898 = vpop.f32.mrb[0].mxu0
        %v3899 = vadd.f32 %v3795, %v3898
        %v3900 = vpop.f32.mrb[0].mxu0
        %3901 = vmatprep.mubr.bf16.mxu0 0
        %3902 = vmatmul.mubr.bf16.gmra.mrb[0].mxu0 %v3769
        %v3903 = vpop.f32.mrb[0].mxu0
        %v3904 = vadd.f32 %v3795, %v3903
        %v3905 = vpop.f32.mrb[0].mxu0
        %v3906 = vpop.f32.mrb[0].mxu0
        %v3907 = vadd.f32 %v3795, %v3906
        %v3908 = vpop.f32.mrb[0].mxu0
        %3909 = vmatprep.mubr.bf16.mxu0 0
        %3910 = vmatmul.mubr.bf16.gmra.mrb[0].mxu0 %v3770
        %v3911 = vpop.f32.mrb[0].mxu0
        %v3912 = vadd.f32 %v3795, %v3911
        %v3913 = vpop.f32.mrb[0].mxu0
        %v3914 = vpop.f32.mrb[0].mxu0
        %v3915 = vadd.f32 %v3795, %v3914
        %v3916 = vpop.f32.mrb[0].mxu0
        %3917 = vmatprep.mubr.bf16.mxu0 0
        %3918 = vmatmul.mubr.bf16.gmra.mrb[0].mxu0 %v3771
        %v3919 = vpop.f32.mrb[0].mxu0
        %v3920 = vadd.f32 %v3795, %v3919
        %v3921 = vpop.f32.mrb[0].mxu0
        %v3922 = vpop.f32.mrb[0].mxu0
        %v3923 = vadd.f32 %v3795, %v3922
        %v3924 = vpop.f32.mrb[0].mxu0
        %3925 = vmatprep.mubr.bf16.mxu0 0
        %3926 = vmatmul.mubr.bf16.gmra.mrb[0].mxu0 %v3772
        %v3927 = vpop.f32.mrb[0].mxu0
        %v3928 = vadd.f32 %v3795, %v3927
        %v3929 = vpop.f32.mrb[0].mxu0
        %v3930 = vpop.f32.mrb[0].mxu0
        %v3931 = vadd.f32 %v3795, %v3930
        %v3932 = vpop.f32.mrb[0].mxu0
        %3933 = vmatprep.mubr.bf16.mxu0 0
        %3934 = vmatmul.mubr.bf16.gmra.mrb[0].mxu0 %v3773
        %v3935 = vpop.f32.mrb[0].mxu0
        %v3936 = vadd.f32 %v3795, %v3935
        %v3937 = vpop.f32.mrb[0].mxu0
        %v3938 = vpop.f32.mrb[0].mxu0
        %v3939 = vadd.f32 %v3795, %v3938
        %v3940 = vpop.f32.mrb[0].mxu0
        %3941 = vdwg.mxu0
        %v3942 = vxor.u32 %v3880, 2147483648
        %v3943 = vxor.u32 %v3883, 2147483648
        %v3944 = vxor.u32 %v3888, 2147483648
        %v3945 = vxor.u32 %v3891, 2147483648
        %v3946 = vxor.u32 %v3896, 2147483648
        %v3947 = vxor.u32 %v3899, 2147483648
        %v3948 = vxor.u32 %v3904, 2147483648
        %v3949 = vxor.u32 %v3907, 2147483648
        %v3950 = vxor.u32 %v3912, 2147483648
        %v3951 = vxor.u32 %v3915, 2147483648
        %v3952 = vxor.u32 %v3920, 2147483648
        %v3953 = vxor.u32 %v3923, 2147483648
        %v3954 = vxor.u32 %v3928, 2147483648
        %v3955 = vxor.u32 %v3931, 2147483648
        %v3956 = vxor.u32 %v3936, 2147483648
        %v3957 = vxor.u32 %v3939, 2147483648
        %v3958 = vmul.f32 %v3942, 1.442695
        %v3959 = vpow.pop %v3958
        %v3960 = vmul.f32 %v3943, 1.442695
        %v3961 = vpow.pop %v3960
        %v3962 = vmul.f32 %v3944, 1.442695
        %v3963 = vpow.pop %v3962
        %v3964 = vmul.f32 %v3945, 1.442695
        %v3965 = vpow.pop %v3964
        %v3966 = vmul.f32 %v3946, 1.442695
        %v3967 = vpow.pop %v3966
        %v3968 = vmul.f32 %v3947, 1.442695
        %v3969 = vpow.pop %v3968
        %v3970 = vmul.f32 %v3948, 1.442695
        %v3971 = vpow.pop %v3970
        %v3972 = vmul.f32 %v3949, 1.442695
        %v3973 = vpow.pop %v3972
        %v3974 = vmul.f32 %v3950, 1.442695
        %v3975 = vpow.pop %v3974
        %v3976 = vmul.f32 %v3951, 1.442695
        %v3977 = vpow.pop %v3976
        %v3978 = vmul.f32 %v3952, 1.442695
        %v3979 = vpow.pop %v3978
        %v3980 = vmul.f32 %v3953, 1.442695
        %v3981 = vpow.pop %v3980
        %v3982 = vmul.f32 %v3954, 1.442695
        %v3983 = vpow.pop %v3982
        %v3984 = vmul.f32 %v3955, 1.442695
        %v3985 = vpow.pop %v3984
        %v3986 = vmul.f32 %v3956, 1.442695
        %v3987 = vpow.pop %v3986
        %v3988 = vmul.f32 %v3957, 1.442695
        %v3989 = vpow.pop %v3988
        %v3990 = vadd.f32 %v3959, 1.0
        %v3991 = vadd.f32 %v3961, 1.0
        %v3992 = vadd.f32 %v3963, 1.0
        %v3993 = vadd.f32 %v3965, 1.0
        %v3994 = vadd.f32 %v3967, 1.0
        %v3995 = vadd.f32 %v3969, 1.0
        %v3996 = vadd.f32 %v3971, 1.0
        %v3997 = vadd.f32 %v3973, 1.0
        %v3998 = vadd.f32 %v3975, 1.0
        %v3999 = vadd.f32 %v3977, 1.0
        %v4000 = vadd.f32 %v3979, 1.0
        %v4001 = vadd.f32 %v3981, 1.0
        %v4002 = vadd.f32 %v3983, 1.0
        %v4003 = vadd.f32 %v3985, 1.0
        %v4004 = vadd.f32 %v3987, 1.0
        %v4005 = vadd.f32 %v3989, 1.0
        %v4006 = vrcp.pop %v3990
        %v4007 = vmul.f32 1.0, %v4006
        %v4008 = vrcp.pop %v3991
        %v4009 = vmul.f32 1.0, %v4008
        %v4010 = vrcp.pop %v3992
        %v4011 = vmul.f32 1.0, %v4010
        %v4012 = vrcp.pop %v3993
        %v4013 = vmul.f32 1.0, %v4012
        %v4014 = vrcp.pop %v3994
        %v4015 = vmul.f32 1.0, %v4014
        %v4016 = vrcp.pop %v3995
        %v4017 = vmul.f32 1.0, %v4016
        %v4018 = vrcp.pop %v3996
        %v4019 = vmul.f32 1.0, %v4018
        %v4020 = vrcp.pop %v3997
        %v4021 = vmul.f32 1.0, %v4020
        %v4022 = vrcp.pop %v3998
        %v4023 = vmul.f32 1.0, %v4022
        %v4024 = vrcp.pop %v3999
        %v4025 = vmul.f32 1.0, %v4024
        %v4026 = vrcp.pop %v4000
        %v4027 = vmul.f32 1.0, %v4026
        %v4028 = vrcp.pop %v4001
        %v4029 = vmul.f32 1.0, %v4028
        %v4030 = vrcp.pop %v4002
        %v4031 = vmul.f32 1.0, %v4030
        %v4032 = vrcp.pop %v4003
        %v4033 = vmul.f32 1.0, %v4032
        %v4034 = vrcp.pop %v4004
        %v4035 = vmul.f32 1.0, %v4034
        %v4036 = vrcp.pop %v4005
        %v4037 = vmul.f32 1.0, %v4036
        %v4038 = vmul.f32 %v3880, %v4007
        %v4039 = vmul.f32 %v3883, %v4009
        %v4040 = vmul.f32 %v3888, %v4011
        %v4041 = vmul.f32 %v3891, %v4013
        %v4042 = vmul.f32 %v3896, %v4015
        %v4043 = vmul.f32 %v3899, %v4017
        %v4044 = vmul.f32 %v3904, %v4019
        %v4045 = vmul.f32 %v3907, %v4021
        %v4046 = vmul.f32 %v3912, %v4023
        %v4047 = vmul.f32 %v3915, %v4025
        %v4048 = vmul.f32 %v3920, %v4027
        %v4049 = vmul.f32 %v3923, %v4029
        %v4050 = vmul.f32 %v3928, %v4031
        %v4051 = vmul.f32 %v3931, %v4033
        %v4052 = vmul.f32 %v3936, %v4035
        %v4053 = vmul.f32 %v3939, %v4037
        %v4054 = vpack.c.bf16 %v4039, %v4038
        %v4055 = vpack.c.bf16 %v4041, %v4040
        %v4056 = vpack.c.bf16 %v4043, %v4042
        %v4057 = vpack.c.bf16 %v4045, %v4044
        %v4058 = vpack.c.bf16 %v4047, %v4046
        %v4059 = vpack.c.bf16 %v4049, %v4048
        %v4060 = vpack.c.bf16 %v4051, %v4050
        %v4061 = vpack.c.bf16 %v4053, %v4052
        %v4062 = vld [vmem:[%s4] sm:$0xf]
        %v4063 = vld [vmem:[%s4 + $0x4] sm:$0xf]
        %v4064 = vld [vmem:[%s4 + $0x8] sm:$0xf]
        %v4065 = vld [vmem:[%s4 + $0xc] sm:$0xf]
        %v4066 = vld [vmem:[%s4 + $0x10] sm:$0xf]
        %v4067 = vld [vmem:[%s4 + $0x14] sm:$0xf]
        %v4068 = vld [vmem:[%s4 + $0x18] sm:$0xf]
        %v4069 = vld [vmem:[%s4 + $0x1c] sm:$0xf]
        %v4070 = vld [vmem:[%s4 + $0x20] sm:$0xf]
        %v4071 = vld [vmem:[%s4 + $0x24] sm:$0xf]
        %v4072 = vld [vmem:[%s4 + $0x28] sm:$0xf]
        %v4073 = vld [vmem:[%s4 + $0x2c] sm:$0xf]
        %v4074 = vld [vmem:[%s4 + $0x30] sm:$0xf]
        %v4075 = vld [vmem:[%s4 + $0x34] sm:$0xf]
        %v4076 = vld [vmem:[%s4 + $0x38] sm:$0xf]
        %v4077 = vld [vmem:[%s4 + $0x3c] sm:$0xf]
        %v4078 = vld [vmem:[%s5] sm:$0x1]
        %v4080 = vlaneseq
        %v4081 = vshrl.u32 %v4080, 7
        %v4082 = vsub.s32 0, %v4081
        %v4083 = vrot.slane %v4078, %v4082
        %v4101 = vunpack.c.l.b16 %v4062
        %v4102 = vunpack.c.l.b16 %v4063
        %v4103 = vunpack.c.l.b16 %v4064
        %v4104 = vunpack.c.l.b16 %v4065
        %v4105 = vunpack.c.l.b16 %v4066
        %v4106 = vunpack.c.l.b16 %v4067
        %v4107 = vunpack.c.l.b16 %v4068
        %v4108 = vunpack.c.l.b16 %v4069
        %v4109 = vunpack.c.l.b16 %v4070
        %v4110 = vunpack.c.l.b16 %v4071
        %v4111 = vunpack.c.l.b16 %v4072
        %v4112 = vunpack.c.l.b16 %v4073
        %v4113 = vunpack.c.l.b16 %v4074
        %v4114 = vunpack.c.l.b16 %v4075
        %v4115 = vunpack.c.l.b16 %v4076
        %v4116 = vunpack.c.l.b16 %v4077
        %v4117 = vpack.c.b16 %v4102, %v4101
        %v4118 = vpack.c.b16 %v4104, %v4103
        %v4119 = vpack.c.b16 %v4106, %v4105
        %v4120 = vpack.c.b16 %v4108, %v4107
        %v4121 = vpack.c.b16 %v4110, %v4109
        %v4122 = vpack.c.b16 %v4112, %v4111
        %v4123 = vpack.c.b16 %v4114, %v4113
        %v4124 = vpack.c.b16 %v4116, %v4115
        %4133 = vmatprep.subr.bf16.mxu0 0
        %4134 = vmatpush1.bf16.msra.mxu0 %v4117
        %4135 = vmatprep.subr.bf16.mxu0 0
        %4136 = vmatpush1.bf16.msra.mxu0 %v4118
        %4137 = vmatprep.subr.bf16.mxu0 0
        %4138 = vmatpush1.bf16.msra.mxu0 %v4119
        %4139 = vmatprep.subr.bf16.mxu0 0
        %4140 = vmatpush1.bf16.msra.mxu0 %v4120
        %4141 = vmatprep.subr.bf16.mxu0 0
        %4142 = vmatpush1.bf16.msra.mxu0 %v4121
        %4143 = vmatprep.subr.bf16.mxu0 0
        %4144 = vmatpush1.bf16.msra.mxu0 %v4122
        %4145 = vmatprep.subr.bf16.mxu0 0
        %4146 = vmatpush1.bf16.msra.mxu0 %v4123
        %4147 = vmatprep.subr.bf16.mxu0 0
        %4148 = vmatpush1.bf16.msra.mxu0 %v4124
        %4149 = vmatprep.subr.bf16.mxu0 0
        %4150 = vmatpush1.bf16.msra.mxu0 0
        %4151 = vmatprep.subr.bf16.mxu0 0
        %4152 = vmatpush1.bf16.msra.mxu0 0
        %4153 = vmatprep.subr.bf16.mxu0 0
        %4154 = vmatpush1.bf16.msra.mxu0 0
        %4155 = vmatprep.subr.bf16.mxu0 0
        %4156 = vmatpush1.bf16.msra.mxu0 0
        %4157 = vmatprep.subr.bf16.mxu0 0
        %4158 = vmatpush1.bf16.msra.mxu0 0
        %4159 = vmatprep.subr.bf16.mxu0 0
        %4160 = vmatpush1.bf16.msra.mxu0 0
        %4161 = vmatprep.subr.bf16.mxu0 0
        %4162 = vmatpush1.bf16.msra.mxu0 0
        %4163 = vmatprep.subr.bf16.mxu0 0
        %4164 = vmatpush1.bf16.msra.mxu0 0
        %4165 = vmatprep.mubr.bf16.mxu0 0
        %4166 = vmatmul.mubr.bf16.gmra.mrb[0].mxu0 %v4054
        %v4167 = vpop.f32.mrb[0].mxu0
        %v4168 = vadd.f32 %v4083, %v4167
        %v4169 = vpop.f32.mrb[0].mxu0
        %v4170 = vpop.f32.mrb[0].mxu0
        %v4171 = vadd.f32 %v4083, %v4170
        %v4172 = vpop.f32.mrb[0].mxu0
        %4173 = vmatprep.mubr.bf16.mxu0 0
        %4174 = vmatmul.mubr.bf16.gmra.mrb[0].mxu0 %v4055
        %v4175 = vpop.f32.mrb[0].mxu0
        %v4176 = vadd.f32 %v4083, %v4175
        %v4177 = vpop.f32.mrb[0].mxu0
        %v4178 = vpop.f32.mrb[0].mxu0
        %v4179 = vadd.f32 %v4083, %v4178
        %v4180 = vpop.f32.mrb[0].mxu0
        %4181 = vmatprep.mubr.bf16.mxu0 0
        %4182 = vmatmul.mubr.bf16.gmra.mrb[0].mxu0 %v4056
        %v4183 = vpop.f32.mrb[0].mxu0
        %v4184 = vadd.f32 %v4083, %v4183
        %v4185 = vpop.f32.mrb[0].mxu0
        %v4186 = vpop.f32.mrb[0].mxu0
        %v4187 = vadd.f32 %v4083, %v4186
        %v4188 = vpop.f32.mrb[0].mxu0
        %4189 = vmatprep.mubr.bf16.mxu0 0
        %4190 = vmatmul.mubr.bf16.gmra.mrb[0].mxu0 %v4057
        %v4191 = vpop.f32.mrb[0].mxu0
        %v4192 = vadd.f32 %v4083, %v4191
        %v4193 = vpop.f32.mrb[0].mxu0
        %v4194 = vpop.f32.mrb[0].mxu0
        %v4195 = vadd.f32 %v4083, %v4194
        %v4196 = vpop.f32.mrb[0].mxu0
        %4197 = vmatprep.mubr.bf16.mxu0 0
        %4198 = vmatmul.mubr.bf16.gmra.mrb[0].mxu0 %v4058
        %v4199 = vpop.f32.mrb[0].mxu0
        %v4200 = vadd.f32 %v4083, %v4199
        %v4201 = vpop.f32.mrb[0].mxu0
        %v4202 = vpop.f32.mrb[0].mxu0
        %v4203 = vadd.f32 %v4083, %v4202
        %v4204 = vpop.f32.mrb[0].mxu0
        %4205 = vmatprep.mubr.bf16.mxu0 0
        %4206 = vmatmul.mubr.bf16.gmra.mrb[0].mxu0 %v4059
        %v4207 = vpop.f32.mrb[0].mxu0
        %v4208 = vadd.f32 %v4083, %v4207
        %v4209 = vpop.f32.mrb[0].mxu0
        %v4210 = vpop.f32.mrb[0].mxu0
        %v4211 = vadd.f32 %v4083, %v4210
        %v4212 = vpop.f32.mrb[0].mxu0
        %4213 = vmatprep.mubr.bf16.mxu0 0
        %4214 = vmatmul.mubr.bf16.gmra.mrb[0].mxu0 %v4060
        %v4215 = vpop.f32.mrb[0].mxu0
        %v4216 = vadd.f32 %v4083, %v4215
        %v4217 = vpop.f32.mrb[0].mxu0
        %v4218 = vpop.f32.mrb[0].mxu0
        %v4219 = vadd.f32 %v4083, %v4218
        %v4220 = vpop.f32.mrb[0].mxu0
        %4221 = vmatprep.mubr.bf16.mxu0 0
        %4222 = vmatmul.mubr.bf16.gmra.mrb[0].mxu0 %v4061
        %v4223 = vpop.f32.mrb[0].mxu0
        %v4224 = vadd.f32 %v4083, %v4223
        %v4225 = vpop.f32.mrb[0].mxu0
        %v4226 = vpop.f32.mrb[0].mxu0
        %v4227 = vadd.f32 %v4083, %v4226
        %v4228 = vpop.f32.mrb[0].mxu0
        %4229 = vdwg.mxu0
        %4230 = vst [vmem:[%s245] sm:$0xff] %v4168
        %4231 = vst [vmem:[%s245 + $0x8] sm:$0xff] %v4171
        %4232 = vst [vmem:[%s245 + $0x10] sm:$0xff] %v4176
        %4233 = vst [vmem:[%s245 + $0x18] sm:$0xff] %v4179
        %4234 = vst [vmem:[%s245 + $0x20] sm:$0xff] %v4184
        %4235 = vst [vmem:[%s245 + $0x28] sm:$0xff] %v4187
        %4236 = vst [vmem:[%s245 + $0x30] sm:$0xff] %v4192
        %4237 = vst [vmem:[%s245 + $0x38] sm:$0xff] %v4195
        %4238 = vst [vmem:[%s245 + $0x40] sm:$0xff] %v4200
        %4239 = vst [vmem:[%s245 + $0x48] sm:$0xff] %v4203
        %4240 = vst [vmem:[%s245 + $0x50] sm:$0xff] %v4208
        %4241 = vst [vmem:[%s245 + $0x58] sm:$0xff] %v4211
        %4242 = vst [vmem:[%s245 + $0x60] sm:$0xff] %v4216
        %4243 = vst [vmem:[%s245 + $0x68] sm:$0xff] %v4219
        %4244 = vst [vmem:[%s245 + $0x70] sm:$0xff] %v4224
        %4245 = vst [vmem:[%s245 + $0x78] sm:$0xff] %v4227
        %s4246 = sand.u32 %s159, 1
        %s4247 = scalar_lea.sflag [#allocation3], %s4246
        %s4248 = sand.u32 %s159, 1
        %s4249 = smul.addr %s4248, 128
        %s4250 = scalar_lea.vmem [#allocation2], %s4249
        // Predicated region
        $region45: #{tpu_custom_call.1} parent=43 // pred_check
          %p4251 = pneg %p169
        $region46: #{tpu_custom_call.1} parent=43 // pred_check_branch
          %4253 = sbr.rel (%p4251) target = $region48
        $region47: #{tpu_custom_call.1} parent=43 // pred_region
          %s4254 = smul.u32 16, %s20
          %s4256 = ssub.s32 2048, 2048
          %4257 = vsyncadd %s4247, %s4256
          %s4258 = smul.addr %s4254, 128
          %s4259 = scalar_lea.hbm %s6, %s4258
          %s4260 = sshll.u32 %s4250, 4
          %s4261 = int_to_ptr.vmem [resolvable:$true] %s4260
          %4266 = dma.vmem_to_hbm [thread:$0]  %s4261, 2048, %s4259, %s4247, 128, 128, 8
        $region48: #{tpu_custom_call.1} parent=43 // pred_fallthru
          _
      $region44: #{tpu_custom_call.1} parent=5 // pred_fallthru
        _
      %p4267 = scmp.le.s32.totalorder 2, %s15
      // Predicated region
      $region49: #{tpu_custom_call.1} parent=5 // pred_check
        %p4268 = pneg %p4267
      $region50: #{tpu_custom_call.1} parent=5 // pred_check_branch
        %4270 = sbr.rel (%p4268) target = $region52
      $region51: #{tpu_custom_call.1} parent=5 // pred_region
        %s4271 = ssub.s32 %s15, 2
        // Predicated region
        $region53: #{tpu_custom_call.1} parent=51 // pred_check
          %p4272 = pneg %p175
        $region54: #{tpu_custom_call.1} parent=51 // pred_check_branch
          %4274 = sbr.rel (%p4272) target = $region56
        $region55: #{tpu_custom_call.1} parent=51 // pred_region
          %s4275 = sand.u32 %s160, 1
          %s4276 = scalar_lea.sflag [#allocation3], %s4275
          %s4277 = sand.u32 %s160, 1
          %s4278 = smul.addr %s4277, 128
          %s4279 = scalar_lea.vmem [#allocation2], %s4278
          %4280 = dma.done %s4276, 2048
        $region56: #{tpu_custom_call.1} parent=51 // pred_fallthru
          _
      $region52: #{tpu_custom_call.1} parent=5 // pred_fallthru
        _
    $region6: #{tpu_custom_call.1} parent=1 // loop_footer
      %s19 = sadd.s32 1, %s15
    $region7: #{tpu_custom_call.1} parent=1 // loop_footer_branch
      %14 = sbr.rel target = $region3
    $region8: #{tpu_custom_call.1} parent=1 // loop_exit
      _
    %4281 = vsyncpa [#allocation3], 1
    %s4282 = scalar_lea.sflag [#allocation3], 1
    %4283 = vsyncpa %s4282, 1

</llo_original>
